<compile_context>
chip_gen: v7x
topology: tpu7x:2x2x1
jax: 0.10.0
libtpu: 0.0.40
codegen_flags: <defaults>
</compile_context>

<pallas_src>
import math
import jax
import jax.numpy as jnp
from jax.experimental import pallas as pl
from jax.experimental.pallas import tpu as pltpu

# bf16 MXU operands (f32 accumulation) -- fine on v5e/v6e/v7x; all VPU/EUP math stays f32.
USE_BF16_MXU = True


def _round_up(v, m):
    return ((v + m - 1) // m) * m


def _largest_divisor_tile(n, max_tile, mult):
    # n is a multiple of `mult`; return the largest multiple of `mult` <= max_tile dividing n.
    t = min(n, (max_tile // mult) * mult)
    while n % t:
        t -= mult
    return t


# ----------------------------------------------------------------------------
# Tiled matmul kernel with folded-BN bias (+ optional ReLU) on the output.
# ----------------------------------------------------------------------------
def _make_matmul_kernel(relu_out):
    def kernel(a_ref, b_ref, bias_ref, o_ref, acc_ref):
        @pl.when(pl.program_id(2) == 0)
        def _():
            acc_ref[...] = jnp.zeros_like(acc_ref)

        acc_ref[...] += jnp.dot(a_ref[...], b_ref[...],
                                preferred_element_type=jnp.float32)

        @pl.when(pl.program_id(2) == pl.num_programs(2) - 1)
        def _():
            r = acc_ref[...] + bias_ref[...]
            if relu_out:
                r = jnp.maximum(r, 0.0)
            o_ref[...] = r.astype(o_ref.dtype)

    return kernel


def pallas_matmul(a, b, bias=None, relu_out=False):
    """out = relu?(a @ b + bias[:, None]); a: (M, K), b: (K, N), bias: (M,)."""
    M, K = a.shape
    K2, N = b.shape
    assert K == K2
    if bias is None:
        bias = jnp.zeros((M,), jnp.float32)

    tm = 128 if M >= 128 else _round_up(M, 8)
    tn = 256 if N >= 256 else _round_up(N, 128)
    tk = 256 if K >= 256 else _round_up(K, 128)
    Mp, Kp, Np = _round_up(M, tm), _round_up(K, tk), _round_up(N, tn)

    a_p = a if (Mp == M and Kp == K) else jnp.pad(a, ((0, Mp - M), (0, Kp - K)))
    b_p = b if (Kp == K and Np == N) else jnp.pad(b, ((0, Kp - K), (0, Np - N)))
    bias_p = bias.reshape(M, 1).astype(jnp.float32)
    if Mp != M:
        bias_p = jnp.pad(bias_p, ((0, Mp - M), (0, 0)))
    if USE_BF16_MXU:
        a_p = a_p.astype(jnp.bfloat16)
        b_p = b_p.astype(jnp.bfloat16)

    out = pl.pallas_call(
        _make_matmul_kernel(relu_out),
        out_shape=jax.ShapeDtypeStruct((Mp, Np), jnp.float32),
        grid=(Mp // tm, Np // tn, Kp // tk),
        in_specs=[pl.BlockSpec((tm, tk), lambda i, j, k: (i, k)),
                  pl.BlockSpec((tk, tn), lambda i, j, k: (k, j)),
                  pl.BlockSpec((tm, 1), lambda i, j, k: (i, 0))],
        out_specs=pl.BlockSpec((tm, tn), lambda i, j, k: (i, j)),
        scratch_shapes=[pltpu.VMEM((tm, tn), jnp.float32)],
        compiler_params=pltpu.CompilerParams(
            dimension_semantics=("parallel", "parallel", "arbitrary"),
            vmem_limit_bytes=48 * 1024 * 1024),
    )(a_p, b_p, bias_p)
    if Mp != M or Np != N:
        out = out[:M, :N]
    return out


# ----------------------------------------------------------------------------
# Fused attention kernel: one (batch, group) tile per grid step.
#   sim = s_qk*q^Tk + s_qr*qr + s_kr*kr + shift     (bn_similarity folded)
#   p   = softmax(sim, keys)
#   binary = c_sv*(p@v^T)^T + c_sve*sum_j p*ve + c_shift   (bn_output folded, sv+sve summed)
# Outputs are written lane-dense: (Cv, HW) with HW in the lane dimension.
# ----------------------------------------------------------------------------
def _attn_kernel(simc_ref, oc_ref, qT_ref, kT_ref, v_ref, qe_ref, ke_ref, ve_ref, bin_ref):
    g = pl.program_id(1)
    qT = qT_ref[...]            # (HW, Cqk)
    kT = kT_ref[...]            # (HW, Cqk)
    v = v_ref[...]              # (Cv, HW)   channel-major, lane-dense
    Cqk = qT.shape[1]

    s_qk = simc_ref[g, 0]
    s_qr = simc_ref[g, 1]
    s_kr = simc_ref[g, 2]
    shift = simc_ref[g, 3]

    # content logits: qk[i,j] = sum_c q[c,i] k[c,j]   (MXU)
    qk = jax.lax.dot_general(qT, kT, (((1,), (1,)), ((), ())),
                             preferred_element_type=jnp.float32)        # (HW, HW)

    # relative-position logits (Cqk is tiny; (HW,1)x(HW,HW) lane broadcasts on the VPU)
    qr = jnp.zeros_like(qk)
    krp = jnp.zeros_like(qk)
    for c in range(Cqk):
        qr = qr + qT[:, c:c + 1] * qe_ref[c]       # sum_c q[c,i]*qe[c,i,j]
        krp = krp + kT[:, c:c + 1] * ke_ref[c]     # sum_c k[c,i]*ke[c,i,j]
    sim = s_qk * qk + s_qr * qr + s_kr * krp.T + shift

    # softmax along keys (EUP exp + approximate reciprocal)
    sim = sim - jnp.max(sim, axis=-1, keepdims=True)
    e = jnp.exp(sim)
    p = e * pl.reciprocal(jnp.sum(e, axis=-1, keepdims=True), approx=True)

    # content value term on the MXU: sv[c,i] = sum_j v[c,j] p[i,j]
    sv = jax.lax.dot_general(v, p, (((1,), (1,)), ((), ())),
                             preferred_element_type=jnp.float32)        # (Cv, HW)
    # positional value term: sve[c,i] = sum_j p[i,j] ve[c,i,j]  (one fused mul + lane reduce)
    sve = jnp.sum(p[None, :, :] * ve_ref[...], axis=-1)                 # (Cv, HW)

    oc = oc_ref[...]                                                    # (Cv, 3)
    bin_ref[...] = oc[:, 0:1] * sv + oc[:, 1:2] * sve + oc[:, 2:3]


def lesa_attention(qT, kT, v, qe, ke, ve, sim_coef, out_coef):
    N, G, HW, Cqk = qT.shape
    Cv = v.shape[2]
    return pl.pallas_call(
        _attn_kernel,
        out_shape=jax.ShapeDtypeStruct((N, G, Cv, HW), jnp.float32),
        grid=(N, G),
        in_specs=[
            pl.BlockSpec(memory_space=pltpu.MemorySpace.SMEM),                # sim coef (G,4)
            pl.BlockSpec((None, Cv, 3), lambda n, g: (g, 0, 0)),              # out coef
            pl.BlockSpec((None, None, HW, Cqk), lambda n, g: (n, g, 0, 0)),   # qT
            pl.BlockSpec((None, None, HW, Cqk), lambda n, g: (n, g, 0, 0)),   # kT
            pl.BlockSpec((None, None, Cv, HW), lambda n, g: (n, g, 0, 0)),    # v
            pl.BlockSpec((Cqk, HW, HW), lambda n, g: (0, 0, 0)),              # q_emb
            pl.BlockSpec((Cqk, HW, HW), lambda n, g: (0, 0, 0)),              # k_emb
            pl.BlockSpec((Cv, HW, HW), lambda n, g: (0, 0, 0)),               # v_emb
        ],
        out_specs=pl.BlockSpec((None, None, Cv, HW), lambda n, g: (n, g, 0, 0)),
        compiler_params=pltpu.CompilerParams(
            dimension_semantics=("parallel", "parallel"),
            vmem_limit_bytes=48 * 1024 * 1024),
    )(sim_coef, out_coef, qT, kT, v, qe, ke, ve)


# ----------------------------------------------------------------------------
# Grouped 3x3 conv (padding=1): one pallas_call over a group grid, 9 taps
# accumulated in-kernel from a padded, spatially-flattened slab (no im2col stack).
# ----------------------------------------------------------------------------
def grouped_conv3x3(xg, w9, b, H, W):
    # xg: (G, cin_g, N, Hp*Wp + 2)   w9: (G, 9, cout_g, cin_g)   b: (G, cout_g, 1)
    G, cin_g, N, S_in = xg.shape
    cout_g = w9.shape[2]
    Wp = W + 2
    S_out = H * Wp   # padded-width rows; the 2 garbage columns/row are cropped host-side

    def kernel(x_ref, w_ref, b_ref, o_ref):
        for n in range(N):
            acc = jnp.zeros((cout_g, S_out), jnp.float32)
            for t in range(9):
                ky, kx = t // 3, t % 3
                sh = ky * Wp + kx
                patch = x_ref[:, n, sh:sh + S_out]                  # (cin_g, S_out)
                acc = acc + jnp.dot(w_ref[t], patch,
                                    preferred_element_type=jnp.float32)
            o_ref[:, n, :] = acc + b_ref[...]

    return pl.pallas_call(
        kernel,
        out_shape=jax.ShapeDtypeStruct((G, cout_g, N, S_out), jnp.float32),
        grid=(G,),
        in_specs=[pl.BlockSpec((None, cin_g, N, S_in), lambda g: (g, 0, 0, 0)),
                  pl.BlockSpec((None, 9, cout_g, cin_g), lambda g: (g, 0, 0, 0)),
                  pl.BlockSpec((None, cout_g, 1), lambda g: (g, 0, 0))],
        out_specs=pl.BlockSpec((None, cout_g, N, S_out), lambda g: (g, 0, 0, 0)),
        compiler_params=pltpu.CompilerParams(dimension_semantics=("parallel",)),
    )(xg, w9, b)


# ----------------------------------------------------------------------------
# Fused gating kernel (tiled, lane-dense): out = sigmoid(gate)*binary + unary
# ----------------------------------------------------------------------------
def _gate_kernel(g_ref, b_ref, u_ref, o_ref):
    gv = g_ref[...]
    s = pl.reciprocal(1.0 + jnp.exp(-gv), approx=True)
    o_ref[...] = s * b_ref[...] + u_ref[...]


def pallas_gate(gate, binary, unary):
    C, L = gate.shape
    Cp, Lp = _round_up(C, 8), _round_up(L, 128)

    def padp(a):
        if Cp == C and Lp == L:
            return a
        return jnp.pad(a, ((0, Cp - C), (0, Lp - L)))

    tr = _largest_divisor_tile(Cp, 256, 8)
    tl = _largest_divisor_tile(Lp, 2048, 128)
    out = pl.pallas_call(
        _gate_kernel,
        out_shape=jax.ShapeDtypeStruct((Cp, Lp), jnp.float32),
        grid=(Cp // tr, Lp // tl),
        in_specs=[pl.BlockSpec((tr, tl), lambda i, j: (i, j))] * 3,
        out_specs=pl.BlockSpec((tr, tl), lambda i, j: (i, j)),
        compiler_params=pltpu.CompilerParams(
            dimension_semantics=("parallel", "parallel")),
    )(padp(gate), padp(binary), padp(unary))
    if Cp != C or Lp != L:
        out = out[:C, :L]
    return out


# ----------------------------------------------------------------------------
# Host-side parameter preparation: fold every inference BN, pre-gather the
# relative positional embeddings, build per-group similarity/output coefficients.
# Run ONCE, outside the jitted forward.
# ----------------------------------------------------------------------------
def bn_affine(p, eps=1e-5):
    scale = p['gamma'] / jnp.sqrt(p['var'] + eps)
    shift = p['beta'] - p['mean'] * scale
    return scale, shift


def prepare_params(params, cfg):
    G, Cqk, Cv, BR = cfg['groups'], cfg['qk_planes'], cfg['v_planes'], cfg['branch_planes']
    HW = cfg['fmap_size'] ** 2
    cin_g, cout_g = cfg['in_planes'] // G, BR // G
    prep = {}

    # qkv conv + bn_qkv
    s, b = bn_affine(params['bn_qkv'])
    prep['w_qkv_f'] = params['w_qkv'] * s[:, None]
    prep['b_qkv'] = b

    # bn_similarity (eval mode) -> per-group (scale_qk, scale_qr, scale_kr, summed shift)
    ss, sb = bn_affine(params['bn_sim'])
    prep['sim_coef'] = jnp.stack(
        [ss[:G], ss[G:2 * G], ss[2 * G:3 * G],
         sb[:G] + sb[G:2 * G] + sb[2 * G:3 * G]], axis=1).astype(jnp.float32)

    # bn_output (eval mode) over interleaved [sv, sve] channels -> per-(g,c) coefficients
    os_, ob = bn_affine(params['bn_out'])
    prep['out_coef'] = jnp.stack(
        [os_[0::2].reshape(G, Cv), os_[1::2].reshape(G, Cv),
         (ob[0::2] + ob[1::2]).reshape(G, Cv)], axis=-1).astype(jnp.float32)

    # relative positional embedding table (index_select done once, outside jit)
    all_emb = jnp.take(params['relative'], params['flatten_index'], axis=1)
    all_emb = all_emb.reshape(2 * Cqk + Cv, HW, HW)
    prep['qe'] = all_emb[:Cqk]
    prep['ke'] = all_emb[Cqk:2 * Cqk]
    prep['ve'] = all_emb[2 * Cqk:]

    # unary branch: grouped 3x3 (+ optional 1x1); bn_x folded into the last conv
    xs, xb = bn_affine(params['bn_x'])
    w3 = params['w_x3']
    if G == 1:
        w3 = w3 * xs[:, None, None, None]
        prep['b3'] = xb.reshape(G, cout_g, 1).astype(jnp.float32)
        prep['w_x1_f'] = None
    else:
        prep['b3'] = jnp.zeros((G, cout_g, 1), jnp.float32)
        prep['w_x1_f'] = params['w_x1'] * xs[:, None]
        prep['b_x1'] = xb
    # (BR, cin_g, 3, 3) -> (G, 9, cout_g, cin_g) with tap index t = 3*ky + kx
    prep['w3_f'] = jnp.transpose(
        w3.reshape(G, cout_g, cin_g, 3, 3), (0, 3, 4, 1, 2)).reshape(G, 9, cout_g, cin_g)

    # reasoning / projection 1x1 convs + their BNs
    rs, rb = bn_affine(params['bn_r'])
    prep['w_r_f'] = params['w_r'] * rs[:, None]
    prep['b_r'] = rb
    ps, pb = bn_affine(params['bn_p'])
    prep['w_p_f'] = params['w_p'] * ps[:, None]
    prep['b_p'] = pb
    return prep


# ----------------------------------------------------------------------------
# LESA forward (pe_type='classification', stride=1)
# ----------------------------------------------------------------------------
def unary_forward(x, prep, cfg):
    N, C, H, W = x.shape
    G, BR = cfg['groups'], cfg['branch_planes']
    cin_g, cout_g = C // G, BR // G
    Hp, Wp = H + 2, W + 2

    xpad = jnp.pad(x, ((0, 0), (0, 0), (1, 1), (1, 1)))
    # per-group channel-major slabs, spatially flattened, +2 tail zeros so the in-kernel
    # tap slices never read past the end.
    xg = jnp.transpose(xpad, (1, 0, 2, 3)).reshape(G, cin_g, N, Hp * Wp)
    xg = jnp.pad(xg, ((0, 0), (0, 0), (0, 0), (0, 2)))

    conv3 = grouped_conv3x3(xg, prep['w3_f'], prep['b3'], H, W)     # (G, cout_g, N, H*Wp)
    conv3 = conv3.reshape(G, cout_g, N, H, Wp)[..., :W].reshape(BR, N * H * W)
    if G != 1:
        return pallas_matmul(prep['w_x1_f'], conv3, prep['b_x1'])   # bn_x folded here
    return conv3                                                    # bn_x folded into 3x3


def binary_forward(xf, N, HW, prep, cfg):
    G, Cqk, Cv, BR = cfg['groups'], cfg['qk_planes'], cfg['v_planes'], cfg['branch_planes']

    qkvf = pallas_matmul(prep['w_qkv_f'], xf, prep['b_qkv'])        # (OUT+BR, N*HW)
    qkv = qkvf.reshape(-1, N, HW).transpose(1, 0, 2).reshape(N, G, 2 * Cqk + Cv, HW)
    q = qkv[:, :, :Cqk]
    k = qkv[:, :, Cqk:2 * Cqk]
    v = qkv[:, :, 2 * Cqk:]                                          # (N, G, Cv, HW)
    qT = jnp.transpose(q, (0, 1, 3, 2))                              # (N, G, HW, Cqk)
    kT = jnp.transpose(k, (0, 1, 3, 2))

    binary = lesa_attention(qT, kT, v, prep['qe'], prep['ke'], prep['ve'],
                            prep['sim_coef'], prep['out_coef'])      # (N, G, Cv, HW)
    return jnp.transpose(binary, (1, 2, 0, 3)).reshape(BR, N * HW)   # channel-major


def lesa_forward(x, prep, cfg):
    N, C, H, W = x.shape
    HW = H * W
    BR = cfg['branch_planes']

    xf = jnp.transpose(x, (1, 0, 2, 3)).reshape(C, N * HW)           # (C, N*HW)

    unary_f = unary_forward(x, prep, cfg)                            # (BR, N*HW)
    binary_f = binary_forward(xf, N, HW, prep, cfg)                  # (BR, N*HW)

    # gating: ReLU -> 1x1(+BN,ReLU folded) -> 1x1(+BN folded) -> sigmoid*binary + unary
    gate_in = jnp.concatenate([unary_f, binary_f], axis=0)           # (2*BR, N*HW)
    r = jnp.maximum(gate_in, 0.0)
    r = pallas_matmul(prep['w_r_f'], r, prep['b_r'], relu_out=True)
    gate = pallas_matmul(prep['w_p_f'], r, prep['b_p'])
    out_f = pallas_gate(gate, binary_f, unary_f)                     # (BR, N*HW)

    return out_f.reshape(BR, N, H, W).transpose(1, 0, 2, 3)          # (N, BR, H, W)


# ----------------------------------------------------------------------------
# Deterministic parameter construction (mirrors the torch module's shapes)
# ----------------------------------------------------------------------------
def init_params(key, cfg):
    C, OUT, BR, G = cfg['in_planes'], cfg['out_planes'], cfg['branch_planes'], cfg['groups']
    HW = cfg['fmap_size'] ** 2
    pe_dim = cfg['qk_planes'] * 2 + cfg['v_planes']
    shrink = cfg['df_shrink']
    keys = jax.random.split(key, 12)

    def bn(k, n):
        k1, k2, k3, k4 = jax.random.split(k, 4)
        return dict(gamma=jax.random.uniform(k1, (n,), minval=0.5, maxval=1.5),
                    beta=0.1 * jax.random.normal(k2, (n,)),
                    mean=0.1 * jax.random.normal(k3, (n,)),
                    var=jax.random.uniform(k4, (n,), minval=0.5, maxval=1.5))

    params = {
        'w_qkv': jax.random.normal(keys[0], (OUT + BR, C)) * math.sqrt(1.0 / C),
        'bn_qkv': bn(keys[1], OUT + BR),
        'bn_sim': bn(keys[2], 3 * G),
        'bn_out': bn(keys[3], BR * 2),
        'w_x3': jax.random.normal(keys[4], (BR, C // G, 3, 3)) * 0.1,
        'w_x1': jax.random.normal(keys[5], (BR, BR)) * 0.1,
        'bn_x': bn(keys[6], BR),
        'w_r': jax.random.normal(keys[7], (BR * 2 // shrink, BR * 2)) * 0.1,
        'bn_r': bn(keys[8], BR * 2 // shrink),
        'w_p': jax.random.normal(keys[9], (BR, BR * 2 // shrink)) * 0.1,
        'bn_p': bn(keys[10], BR),
        'relative': jax.random.normal(keys[11], (pe_dim, 2 * HW - 1))
                    * math.sqrt(1.0 / cfg['v_planes']),
    }
    qidx = jnp.arange(HW)[None, :]
    kidx = jnp.arange(HW)[:, None]
    params['flatten_index'] = (kidx - qidx + HW - 1).reshape(-1).astype(jnp.int32)
    return params


if __name__ == "__main__":
    # small config: in=out=8 channels, 2 groups, 8x8 feature map (HW=64)
    cfg = dict(in_planes=8, out_planes=8, branch_planes=8, groups=2,
               fmap_size=8, qk_planes=8 // 2 // 2, v_planes=8 // 2, df_shrink=2)
    key = jax.random.PRNGKey(0)
    kx_, kp_ = jax.random.split(key)
    x = jax.random.normal(kx_, (2, cfg['in_planes'], cfg['fmap_size'], cfg['fmap_size']),
                          dtype=jnp.float32)
    params = init_params(kp_, cfg)
    prep = prepare_params(params, cfg)   # BN folding / embedding gather: once, outside jit

    fwd = jax.jit(lambda inp: lesa_forward(inp, prep, cfg))
    out = fwd(x)
    jax.block_until_ready(out)
    assert out.shape == (2, cfg['branch_planes'], cfg['fmap_size'], cfg['fmap_size'])
    assert bool(jnp.all(jnp.isfinite(out)))
    print("KERNEL_OK")
</pallas_src>

<mosaic_0001>
module attributes {stable_mosaic.version = 11 : i64} {
  func.func @kernel(%arg0: i32, %arg1: i32, %arg2: i32, %arg3: memref<16x128xbf16, #tpu.memory_space<vmem>>, %arg4: memref<128x128xbf16, #tpu.memory_space<vmem>>, %arg5: memref<16x1xf32, #tpu.memory_space<vmem>>, %arg6: memref<16x128xf32, #tpu.memory_space<vmem>>, %arg7: memref<16x128xf32, #tpu.memory_space<vmem>>) attributes {dimension_semantics = [#tpu.dimension_semantics<parallel>, #tpu.dimension_semantics<parallel>, #tpu.dimension_semantics<arbitrary>], iteration_bounds = array<i64: 1, 1, 1>, scalar_prefetch = 0 : i64, scratch_operands = 1 : i64, tpu.core_type = #tpu.core_type<tc>, window_params = [{transform_indices = @transform_0, window_bounds = array<i64: 16, 128>}, {transform_indices = @transform_1, window_bounds = array<i64: 128, 128>}, {transform_indices = @transform_2, window_bounds = array<i64: 16, 1>}, {transform_indices = @transform_3, window_bounds = array<i64: 16, 128>}]} {
    %c0_i32 = arith.constant 0 : i32
    %0 = arith.cmpi eq, %arg2, %c0_i32 : i32
    %1 = arith.extui %0 : i1 to i32
    %c0_i32_0 = arith.constant 0 : i32
    %2 = arith.cmpi ne, %1, %c0_i32_0 : i32
    scf.if %2 {
      %cst_10 = arith.constant 0.000000e+00 : f32
      %12 = vector.broadcast %cst_10 : f32 to vector<16x128xf32>
      %c0_11 = arith.constant 0 : index
      %c0_12 = arith.constant 0 : index
      %13 = vector.load %arg7[%c0_11, %c0_12] : memref<16x128xf32, #tpu.memory_space<vmem>>, vector<16x128xf32>
      tpu.vector_store %arg7[%c0_11, %c0_12], %12 {strides = array<i32>} : memref<16x128xf32, #tpu.memory_space<vmem>>, vector<16x128xf32>,
    } else {
    }
    %c0 = arith.constant 0 : index
    %c0_1 = arith.constant 0 : index
    %3 = vector.load %arg7[%c0, %c0_1] : memref<16x128xf32, #tpu.memory_space<vmem>>, vector<16x128xf32>
    %c0_2 = arith.constant 0 : index
    %c0_3 = arith.constant 0 : index
    %4 = vector.load %arg3[%c0_2, %c0_3] : memref<16x128xbf16, #tpu.memory_space<vmem>>, vector<16x128xbf16>
    %c0_4 = arith.constant 0 : index
    %c0_5 = arith.constant 0 : index
    %5 = vector.load %arg4[%c0_4, %c0_5] : memref<128x128xbf16, #tpu.memory_space<vmem>>, vector<128x128xbf16>
    %cst = arith.constant dense<0.000000e+00> : vector<16x128xf32>
    %6 = tpu.matmul %4, %5, %cst {dimension_numbers = #tpu.dot_dimension_numbers<[1], [0], [0], [1], [0, 0, 1, 1], [], []>} : vector<16x128xbf16>, vector<128x128xbf16>, vector<16x128xf32> -> vector<16x128xf32>
    %7 = arith.addf %3, %6 : vector<16x128xf32>
    %c0_6 = arith.constant 0 : index
    %c0_7 = arith.constant 0 : index
    %8 = vector.load %arg7[%c0_6, %c0_7] : memref<16x128xf32, #tpu.memory_space<vmem>>, vector<16x128xf32>
    tpu.vector_store %arg7[%c0_6, %c0_7], %7 {strides = array<i32>} : memref<16x128xf32, #tpu.memory_space<vmem>>, vector<16x128xf32>,
    %c0_i32_8 = arith.constant 0 : i32
    %9 = arith.cmpi eq, %arg2, %c0_i32_8 : i32
    %10 = arith.extui %9 : i1 to i32
    %c0_i32_9 = arith.constant 0 : i32
    %11 = arith.cmpi ne, %10, %c0_i32_9 : i32
    scf.if %11 {
      %c0_10 = arith.constant 0 : index
      %c0_11 = arith.constant 0 : index
      %12 = vector.load %arg7[%c0_10, %c0_11] : memref<16x128xf32, #tpu.memory_space<vmem>>, vector<16x128xf32>
      %c0_12 = arith.constant 0 : index
      %c0_13 = arith.constant 0 : index
      %13 = vector.load %arg5[%c0_12, %c0_13] : memref<16x1xf32, #tpu.memory_space<vmem>>, vector<16x1xf32>
      %14 = vector.broadcast %13 : vector<16x1xf32> to vector<16x128xf32>
      %15 = arith.addf %12, %14 : vector<16x128xf32>
      %c0_14 = arith.constant 0 : index
      %c0_15 = arith.constant 0 : index
      %16 = vector.load %arg6[%c0_14, %c0_15] : memref<16x128xf32, #tpu.memory_space<vmem>>, vector<16x128xf32>
      tpu.vector_store %arg6[%c0_14, %c0_15], %15 {strides = array<i32>} : memref<16x128xf32, #tpu.memory_space<vmem>>, vector<16x128xf32>,
    } else {
    }
    return
  }
  func.func @transform_0(%arg0: i32, %arg1: i32, %arg2: i32) -> (i32, i32) {
    %c0_i32 = arith.constant 0 : i32
    return %arg0, %arg2 : i32, i32
  }
  func.func @transform_1(%arg0: i32, %arg1: i32, %arg2: i32) -> (i32, i32) {
    %c0_i32 = arith.constant 0 : i32
    return %arg2, %arg1 : i32, i32
  }
  func.func @transform_2(%arg0: i32, %arg1: i32, %arg2: i32) -> (i32, i32) {
    %c0_i32 = arith.constant 0 : i32
    %c0_i32_0 = arith.constant 0 : i32
    return %arg0, %c0_i32 : i32, i32
  }
  func.func @transform_3(%arg0: i32, %arg1: i32, %arg2: i32) -> (i32, i32) {
    %c0_i32 = arith.constant 0 : i32
    return %arg0, %arg1 : i32, i32
  }
}

module attributes {stable_mosaic.version = 11 : i64} {
  func.func @_attn_kernel(%arg0: i32, %arg1: i32, %arg2: memref<2x4xf32, #tpu.memory_space<smem>>, %arg3: memref<1x4x3xf32, #tpu.memory_space<vmem>>, %arg4: memref<1x1x64x2xf32, #tpu.memory_space<vmem>>, %arg5: memref<1x1x64x2xf32, #tpu.memory_space<vmem>>, %arg6: memref<1x1x4x64xf32, #tpu.memory_space<vmem>>, %arg7: memref<2x64x64xf32, #tpu.memory_space<vmem>>, %arg8: memref<2x64x64xf32, #tpu.memory_space<vmem>>, %arg9: memref<4x64x64xf32, #tpu.memory_space<vmem>>, %arg10: memref<1x1x4x64xf32, #tpu.memory_space<vmem>>) attributes {dimension_semantics = [#tpu.dimension_semantics<parallel>, #tpu.dimension_semantics<parallel>], iteration_bounds = array<i64: 2, 2>, scalar_prefetch = 0 : i64, scratch_operands = 0 : i64, tpu.core_type = #tpu.core_type<tc>, window_params = [{transform_indices = @transform_0, window_bounds = array<i64: 2, 4>}, {transform_indices = @transform_1, window_bounds = array<i64: 1, 4, 3>}, {transform_indices = @transform_2, window_bounds = array<i64: 1, 1, 64, 2>}, {transform_indices = @transform_3, window_bounds = array<i64: 1, 1, 64, 2>}, {transform_indices = @transform_4, window_bounds = array<i64: 1, 1, 4, 64>}, {pipeline_mode = #tpu.pipeline_mode<synchronous>, transform_indices = @transform_5, window_bounds = array<i64: 2, 64, 64>}, {pipeline_mode = #tpu.pipeline_mode<synchronous>, transform_indices = @transform_6, window_bounds = array<i64: 2, 64, 64>}, {pipeline_mode = #tpu.pipeline_mode<synchronous>, transform_indices = @transform_7, window_bounds = array<i64: 4, 64, 64>}, {transform_indices = @transform_8, window_bounds = array<i64: 1, 1, 4, 64>}]} {
    %c0 = arith.constant 0 : index
    %c0_0 = arith.constant 0 : index
    %c0_1 = arith.constant 0 : index
    %c0_2 = arith.constant 0 : index
    %0 = vector.load %arg4[%c0, %c0_0, %c0_1, %c0_2] : memref<1x1x64x2xf32, #tpu.memory_space<vmem>>, vector<1x1x64x2xf32>
    %1 = vector.shape_cast %0 : vector<1x1x64x2xf32> to vector<64x2xf32>
    %c0_3 = arith.constant 0 : index
    %c0_4 = arith.constant 0 : index
    %c0_5 = arith.constant 0 : index
    %c0_6 = arith.constant 0 : index
    %2 = vector.load %arg5[%c0_3, %c0_4, %c0_5, %c0_6] : memref<1x1x64x2xf32, #tpu.memory_space<vmem>>, vector<1x1x64x2xf32>
    %3 = vector.shape_cast %2 : vector<1x1x64x2xf32> to vector<64x2xf32>
    %c0_7 = arith.constant 0 : index
    %c0_8 = arith.constant 0 : index
    %c0_9 = arith.constant 0 : index
    %c0_10 = arith.constant 0 : index
    %4 = vector.load %arg6[%c0_7, %c0_8, %c0_9, %c0_10] : memref<1x1x4x64xf32, #tpu.memory_space<vmem>>, vector<1x1x4x64xf32>
    %5 = vector.shape_cast %4 : vector<1x1x4x64xf32> to vector<4x64xf32>
    %6 = arith.index_cast %arg1 : i32 to index
    %c0_11 = arith.constant 0 : index
    %7 = memref.load %arg2[%6, %c0_11] : memref<2x4xf32, #tpu.memory_space<smem>>
    %8 = arith.index_cast %arg1 : i32 to index
    %c1 = arith.constant 1 : index
    %9 = memref.load %arg2[%8, %c1] : memref<2x4xf32, #tpu.memory_space<smem>>
    %10 = arith.index_cast %arg1 : i32 to index
    %c2 = arith.constant 2 : index
    %11 = memref.load %arg2[%10, %c2] : memref<2x4xf32, #tpu.memory_space<smem>>
    %12 = arith.index_cast %arg1 : i32 to index
    %c3 = arith.constant 3 : index
    %13 = memref.load %arg2[%12, %c3] : memref<2x4xf32, #tpu.memory_space<smem>>
    %cst = arith.constant dense<0.000000e+00> : vector<64x64xf32>
    %14 = tpu.matmul %1, %3, %cst {dimension_numbers = #tpu.dot_dimension_numbers<[1], [1], [0], [0], [0, 0, 1, 0], [], []>} : vector<64x2xf32>, vector<64x2xf32>, vector<64x64xf32> -> vector<64x64xf32>
    %cst_12 = arith.constant 0.000000e+00 : f32
    %15 = vector.broadcast %cst_12 : f32 to vector<64x64xf32>
    %cst_13 = arith.constant 0.000000e+00 : f32
    %16 = vector.broadcast %cst_13 : f32 to vector<64x64xf32>
    %17 = vector.extract_strided_slice %1 {offsets = [0, 0], sizes = [64, 1], strides = [1, 1]} : vector<64x2xf32> to vector<64x1xf32>
    %c0_14 = arith.constant 0 : index
    %c0_15 = arith.constant 0 : index
    %c0_16 = arith.constant 0 : index
    %18 = vector.load %arg7[%c0_14, %c0_15, %c0_16] : memref<2x64x64xf32, #tpu.memory_space<vmem>>, vector<1x64x64xf32>
    %19 = vector.shape_cast %18 : vector<1x64x64xf32> to vector<64x64xf32>
    %20 = vector.broadcast %17 : vector<64x1xf32> to vector<64x64xf32>
    %21 = arith.mulf %20, %19 : vector<64x64xf32>
    %22 = arith.addf %15, %21 : vector<64x64xf32>
    %23 = vector.extract_strided_slice %3 {offsets = [0, 0], sizes = [64, 1], strides = [1, 1]} : vector<64x2xf32> to vector<64x1xf32>
    %c0_17 = arith.constant 0 : index
    %c0_18 = arith.constant 0 : index
    %c0_19 = arith.constant 0 : index
    %24 = vector.load %arg8[%c0_17, %c0_18, %c0_19] : memref<2x64x64xf32, #tpu.memory_space<vmem>>, vector<1x64x64xf32>
    %25 = vector.shape_cast %24 : vector<1x64x64xf32> to vector<64x64xf32>
    %26 = vector.broadcast %23 : vector<64x1xf32> to vector<64x64xf32>
    %27 = arith.mulf %26, %25 : vector<64x64xf32>
    %28 = arith.addf %16, %27 : vector<64x64xf32>
    %29 = vector.extract_strided_slice %1 {offsets = [0, 1], sizes = [64, 1], strides = [1, 1]} : vector<64x2xf32> to vector<64x1xf32>
    %c1_20 = arith.constant 1 : index
    %c0_21 = arith.constant 0 : index
    %c0_22 = arith.constant 0 : index
    %30 = vector.load %arg7[%c1_20, %c0_21, %c0_22] : memref<2x64x64xf32, #tpu.memory_space<vmem>>, vector<1x64x64xf32>
    %31 = vector.shape_cast %30 : vector<1x64x64xf32> to vector<64x64xf32>
    %32 = vector.broadcast %29 : vector<64x1xf32> to vector<64x64xf32>
    %33 = arith.mulf %32, %31 : vector<64x64xf32>
    %34 = arith.addf %22, %33 : vector<64x64xf32>
    %35 = vector.extract_strided_slice %3 {offsets = [0, 1], sizes = [64, 1], strides = [1, 1]} : vector<64x2xf32> to vector<64x1xf32>
    %c1_23 = arith.constant 1 : index
    %c0_24 = arith.constant 0 : index
    %c0_25 = arith.constant 0 : index
    %36 = vector.load %arg8[%c1_23, %c0_24, %c0_25] : memref<2x64x64xf32, #tpu.memory_space<vmem>>, vector<1x64x64xf32>
    %37 = vector.shape_cast %36 : vector<1x64x64xf32> to vector<64x64xf32>
    %38 = vector.broadcast %35 : vector<64x1xf32> to vector<64x64xf32>
    %39 = arith.mulf %38, %37 : vector<64x64xf32>
    %40 = arith.addf %28, %39 : vector<64x64xf32>
    %41 = vector.broadcast %7 : f32 to vector<64x64xf32>
    %42 = arith.mulf %41, %14 : vector<64x64xf32>
    %43 = vector.broadcast %9 : f32 to vector<64x64xf32>
    %44 = arith.mulf %43, %34 : vector<64x64xf32>
    %45 = arith.addf %42, %44 : vector<64x64xf32>
    %46 = tpu.transpose %40, [1, 0] : vector<64x64xf32> -> vector<64x64xf32>
    %47 = vector.broadcast %11 : f32 to vector<64x64xf32>
    %48 = arith.mulf %47, %46 : vector<64x64xf32>
    %49 = arith.addf %45, %48 : vector<64x64xf32>
    %50 = vector.broadcast %13 : f32 to vector<64x64xf32>
    %51 = arith.addf %49, %50 : vector<64x64xf32>
    %cst_26 = arith.constant dense<0xFF800000> : vector<64xf32>
    %52 = vector.multi_reduction <maximumf>, %51, %cst_26 [1] : vector<64x64xf32> to vector<64xf32>
    %53 = vector.shape_cast %52 : vector<64xf32> to vector<64x1xf32>
    %54 = vector.broadcast %53 : vector<64x1xf32> to vector<64x64xf32>
    %55 = arith.subf %51, %54 : vector<64x64xf32>
    %56 = math.exp %55 : vector<64x64xf32>
    %cst_27 = arith.constant dense<0.000000e+00> : vector<64xf32>
    %57 = vector.multi_reduction <add>, %56, %cst_27 [1] : vector<64x64xf32> to vector<64xf32>
    %58 = vector.shape_cast %57 : vector<64xf32> to vector<64x1xf32>
    %59 = tpu.reciprocal %58 {approx = true} : vector<64x1xf32> -> vector<64x1xf32>
    %60 = vector.broadcast %59 : vector<64x1xf32> to vector<64x64xf32>
    %61 = arith.mulf %56, %60 : vector<64x64xf32>
    %cst_28 = arith.constant dense<0.000000e+00> : vector<4x64xf32>
    %62 = tpu.matmul %5, %61, %cst_28 {dimension_numbers = #tpu.dot_dimension_numbers<[1], [1], [0], [0], [0, 0, 1, 0], [], []>} : vector<4x64xf32>, vector<64x64xf32>, vector<4x64xf32> -> vector<4x64xf32>
    %63 = vector.shape_cast %61 : vector<64x64xf32> to vector<1x64x64xf32>
    %c0_29 = arith.constant 0 : index
    %c0_30 = arith.constant 0 : index
    %c0_31 = arith.constant 0 : index
    %64 = vector.load %arg9[%c0_29, %c0_30, %c0_31] : memref<4x64x64xf32, #tpu.memory_space<vmem>>, vector<4x64x64xf32>
    %65 = vector.broadcast %63 : vector<1x64x64xf32> to vector<4x64x64xf32>
    %66 = arith.mulf %65, %64 : vector<4x64x64xf32>
    %cst_32 = arith.constant dense<0.000000e+00> : vector<4x64xf32>
    %67 = vector.multi_reduction <add>, %66, %cst_32 [2] : vector<4x64x64xf32> to vector<4x64xf32>
    %c0_33 = arith.constant 0 : index
    %c0_34 = arith.constant 0 : index
    %c0_35 = arith.constant 0 : index
    %68 = vector.load %arg3[%c0_33, %c0_34, %c0_35] : memref<1x4x3xf32, #tpu.memory_space<vmem>>, vector<1x4x3xf32>
    %69 = vector.shape_cast %68 : vector<1x4x3xf32> to vector<4x3xf32>
    %70 = vector.extract_strided_slice %69 {offsets = [0, 0], sizes = [4, 1], strides = [1, 1]} : vector<4x3xf32> to vector<4x1xf32>
    %71 = vector.broadcast %70 : vector<4x1xf32> to vector<4x64xf32>
    %72 = arith.mulf %71, %62 : vector<4x64xf32>
    %73 = vector.extract_strided_slice %69 {offsets = [0, 1], sizes = [4, 1], strides = [1, 1]} : vector<4x3xf32> to vector<4x1xf32>
    %74 = vector.broadcast %73 : vector<4x1xf32> to vector<4x64xf32>
    %75 = arith.mulf %74, %67 : vector<4x64xf32>
    %76 = arith.addf %72, %75 : vector<4x64xf32>
    %77 = vector.extract_strided_slice %69 {offsets = [0, 2], sizes = [4, 1], strides = [1, 1]} : vector<4x3xf32> to vector<4x1xf32>
    %78 = vector.broadcast %77 : vector<4x1xf32> to vector<4x64xf32>
    %79 = arith.addf %76, %78 : vector<4x64xf32>
    %c0_36 = arith.constant 0 : index
    %c0_37 = arith.constant 0 : index
    %c0_38 = arith.constant 0 : index
    %c0_39 = arith.constant 0 : index
    %80 = vector.load %arg10[%c0_36, %c0_37, %c0_38, %c0_39] : memref<1x1x4x64xf32, #tpu.memory_space<vmem>>, vector<1x1x4x64xf32>
    %81 = vector.shape_cast %80 : vector<1x1x4x64xf32> to vector<4x64xf32>
    %82 = vector.shape_cast %79 : vector<4x64xf32> to vector<1x1x4x64xf32>
    tpu.vector_store %arg10[%c0_36, %c0_37, %c0_38, %c0_39], %82 {strides = array<i32>} : memref<1x1x4x64xf32, #tpu.memory_space<vmem>>, vector<1x1x4x64xf32>,
    return
  }
  func.func @transform_0(%arg0: i32, %arg1: i32) -> (i32, i32) {
    %c0_i32 = arith.constant 0 : i32
    %c0_i32_0 = arith.constant 0 : i32
    %c0_i32_1 = arith.constant 0 : i32
    return %c0_i32, %c0_i32_0 : i32, i32
  }
  func.func @transform_1(%arg0: i32, %arg1: i32) -> (i32, i32, i32) {
    %c0_i32 = arith.constant 0 : i32
    %c0_i32_0 = arith.constant 0 : i32
    %c0_i32_1 = arith.constant 0 : i32
    return %arg1, %c0_i32, %c0_i32_0 : i32, i32, i32
  }
  func.func @transform_2(%arg0: i32, %arg1: i32) -> (i32, i32, i32, i32) {
    %c0_i32 = arith.constant 0 : i32
    %c0_i32_0 = arith.constant 0 : i32
    %c0_i32_1 = arith.constant 0 : i32
    return %arg0, %arg1, %c0_i32, %c0_i32_0 : i32, i32, i32, i32
  }
  func.func @transform_3(%arg0: i32, %arg1: i32) -> (i32, i32, i32, i32) {
    %c0_i32 = arith.constant 0 : i32
    %c0_i32_0 = arith.constant 0 : i32
    %c0_i32_1 = arith.constant 0 : i32
    return %arg0, %arg1, %c0_i32, %c0_i32_0 : i32, i32, i32, i32
  }
  func.func @transform_4(%arg0: i32, %arg1: i32) -> (i32, i32, i32, i32) {
    %c0_i32 = arith.constant 0 : i32
    %c0_i32_0 = arith.constant 0 : i32
    %c0_i32_1 = arith.constant 0 : i32
    return %arg0, %arg1, %c0_i32, %c0_i32_0 : i32, i32, i32, i32
  }
  func.func @transform_5(%arg0: i32, %arg1: i32) -> (i32, i32, i32) {
    %c0_i32 = arith.constant 0 : i32
    %c0_i32_0 = arith.constant 0 : i32
    %c0_i32_1 = arith.constant 0 : i32
    %c0_i32_2 = arith.constant 0 : i32
    return %c0_i32, %c0_i32_0, %c0_i32_1 : i32, i32, i32
  }
  func.func @transform_6(%arg0: i32, %arg1: i32) -> (i32, i32, i32) {
    %c0_i32 = arith.constant 0 : i32
    %c0_i32_0 = arith.constant 0 : i32
    %c0_i32_1 = arith.constant 0 : i32
    %c0_i32_2 = arith.constant 0 : i32
    return %c0_i32, %c0_i32_0, %c0_i32_1 : i32, i32, i32
  }
  func.func @transform_7(%arg0: i32, %arg1: i32) -> (i32, i32, i32) {
    %c0_i32 = arith.constant 0 : i32
    %c0_i32_0 = arith.constant 0 : i32
    %c0_i32_1 = arith.constant 0 : i32
    %c0_i32_2 = arith.constant 0 : i32
    return %c0_i32, %c0_i32_0, %c0_i32_1 : i32, i32, i32
  }
  func.func @transform_8(%arg0: i32, %arg1: i32) -> (i32, i32, i32, i32) {
    %c0_i32 = arith.constant 0 : i32
    %c0_i32_0 = arith.constant 0 : i32
    %c0_i32_1 = arith.constant 0 : i32
    return %arg0, %arg1, %c0_i32, %c0_i32_0 : i32, i32, i32, i32
  }
}

module attributes {stable_mosaic.version = 11 : i64} {
  func.func @kernel(%arg0: i32, %arg1: memref<1x4x2x102xf32, #tpu.memory_space<vmem>>, %arg2: memref<1x9x4x4xf32, #tpu.memory_space<vmem>>, %arg3: memref<1x4x1xf32, #tpu.memory_space<vmem>>, %arg4: memref<1x4x2x80xf32, #tpu.memory_space<vmem>>) attributes {dimension_semantics = [#tpu.dimension_semantics<parallel>], iteration_bounds = array<i64: 2>, scalar_prefetch = 0 : i64, scratch_operands = 0 : i64, tpu.core_type = #tpu.core_type<tc>, window_params = [{transform_indices = @transform_0, window_bounds = array<i64: 1, 4, 2, 102>}, {transform_indices = @transform_1, window_bounds = array<i64: 1, 9, 4, 4>}, {transform_indices = @transform_2, window_bounds = array<i64: 1, 4, 1>}, {transform_indices = @transform_3, window_bounds = array<i64: 1, 4, 2, 80>}]} {
    %cst = arith.constant 0.000000e+00 : f32
    %0 = vector.broadcast %cst : f32 to vector<4x80xf32>
    %c0 = arith.constant 0 : index
    %c0_0 = arith.constant 0 : index
    %c0_1 = arith.constant 0 : index
    %c0_2 = arith.constant 0 : index
    %1 = vector.load %arg1[%c0, %c0_0, %c0_1, %c0_2] : memref<1x4x2x102xf32, #tpu.memory_space<vmem>>, vector<1x4x1x80xf32>
    %2 = vector.shape_cast %1 : vector<1x4x1x80xf32> to vector<4x80xf32>
    %c0_3 = arith.constant 0 : index
    %c0_4 = arith.constant 0 : index
    %c0_5 = arith.constant 0 : index
    %c0_6 = arith.constant 0 : index
    %3 = vector.load %arg2[%c0_3, %c0_4, %c0_5, %c0_6] : memref<1x9x4x4xf32, #tpu.memory_space<vmem>>, vector<1x1x4x4xf32>
    %4 = vector.shape_cast %3 : vector<1x1x4x4xf32> to vector<4x4xf32>
    %cst_7 = arith.constant dense<0.000000e+00> : vector<4x80xf32>
    %5 = tpu.matmul %4, %2, %cst_7 {dimension_numbers = #tpu.dot_dimension_numbers<[1], [0], [0], [1], [0, 0, 1, 1], [], []>} : vector<4x4xf32>, vector<4x80xf32>, vector<4x80xf32> -> vector<4x80xf32>
    %6 = arith.addf %0, %5 : vector<4x80xf32>
    %c0_8 = arith.constant 0 : index
    %c0_9 = arith.constant 0 : index
    %c0_10 = arith.constant 0 : index
    %c1 = arith.constant 1 : index
    %7 = vector.load %arg1[%c0_8, %c0_9, %c0_10, %c1] : memref<1x4x2x102xf32, #tpu.memory_space<vmem>>, vector<1x4x1x80xf32>
    %8 = vector.shape_cast %7 : vector<1x4x1x80xf32> to vector<4x80xf32>
    %c0_11 = arith.constant 0 : index
    %c1_12 = arith.constant 1 : index
    %c0_13 = arith.constant 0 : index
    %c0_14 = arith.constant 0 : index
    %9 = vector.load %arg2[%c0_11, %c1_12, %c0_13, %c0_14] : memref<1x9x4x4xf32, #tpu.memory_space<vmem>>, vector<1x1x4x4xf32>
    %10 = vector.shape_cast %9 : vector<1x1x4x4xf32> to vector<4x4xf32>
    %cst_15 = arith.constant dense<0.000000e+00> : vector<4x80xf32>
    %11 = tpu.matmul %10, %8, %cst_15 {dimension_numbers = #tpu.dot_dimension_numbers<[1], [0], [0], [1], [0, 0, 1, 1], [], []>} : vector<4x4xf32>, vector<4x80xf32>, vector<4x80xf32> -> vector<4x80xf32>
    %12 = arith.addf %6, %11 : vector<4x80xf32>
    %c0_16 = arith.constant 0 : index
    %c0_17 = arith.constant 0 : index
    %c0_18 = arith.constant 0 : index
    %c2 = arith.constant 2 : index
    %13 = vector.load %arg1[%c0_16, %c0_17, %c0_18, %c2] : memref<1x4x2x102xf32, #tpu.memory_space<vmem>>, vector<1x4x1x80xf32>
    %14 = vector.shape_cast %13 : vector<1x4x1x80xf32> to vector<4x80xf32>
    %c0_19 = arith.constant 0 : index
    %c2_20 = arith.constant 2 : index
    %c0_21 = arith.constant 0 : index
    %c0_22 = arith.constant 0 : index
    %15 = vector.load %arg2[%c0_19, %c2_20, %c0_21, %c0_22] : memref<1x9x4x4xf32, #tpu.memory_space<vmem>>, vector<1x1x4x4xf32>
    %16 = vector.shape_cast %15 : vector<1x1x4x4xf32> to vector<4x4xf32>
    %cst_23 = arith.constant dense<0.000000e+00> : vector<4x80xf32>
    %17 = tpu.matmul %16, %14, %cst_23 {dimension_numbers = #tpu.dot_dimension_numbers<[1], [0], [0], [1], [0, 0, 1, 1], [], []>} : vector<4x4xf32>, vector<4x80xf32>, vector<4x80xf32> -> vector<4x80xf32>
    %18 = arith.addf %12, %17 : vector<4x80xf32>
    %c0_24 = arith.constant 0 : index
    %c0_25 = arith.constant 0 : index
    %c0_26 = arith.constant 0 : index
    %c10 = arith.constant 10 : index
    %19 = vector.load %arg1[%c0_24, %c0_25, %c0_26, %c10] : memref<1x4x2x102xf32, #tpu.memory_space<vmem>>, vector<1x4x1x80xf32>
    %20 = vector.shape_cast %19 : vector<1x4x1x80xf32> to vector<4x80xf32>
    %c0_27 = arith.constant 0 : index
    %c3 = arith.constant 3 : index
    %c0_28 = arith.constant 0 : index
    %c0_29 = arith.constant 0 : index
    %21 = vector.load %arg2[%c0_27, %c3, %c0_28, %c0_29] : memref<1x9x4x4xf32, #tpu.memory_space<vmem>>, vector<1x1x4x4xf32>
    %22 = vector.shape_cast %21 : vector<1x1x4x4xf32> to vector<4x4xf32>
    %cst_30 = arith.constant dense<0.000000e+00> : vector<4x80xf32>
    %23 = tpu.matmul %22, %20, %cst_30 {dimension_numbers = #tpu.dot_dimension_numbers<[1], [0], [0], [1], [0, 0, 1, 1], [], []>} : vector<4x4xf32>, vector<4x80xf32>, vector<4x80xf32> -> vector<4x80xf32>
    %24 = arith.addf %18, %23 : vector<4x80xf32>
    %c0_31 = arith.constant 0 : index
    %c0_32 = arith.constant 0 : index
    %c0_33 = arith.constant 0 : index
    %c11 = arith.constant 11 : index
    %25 = vector.load %arg1[%c0_31, %c0_32, %c0_33, %c11] : memref<1x4x2x102xf32, #tpu.memory_space<vmem>>, vector<1x4x1x80xf32>
    %26 = vector.shape_cast %25 : vector<1x4x1x80xf32> to vector<4x80xf32>
    %c0_34 = arith.constant 0 : index
    %c4 = arith.constant 4 : index
    %c0_35 = arith.constant 0 : index
    %c0_36 = arith.constant 0 : index
    %27 = vector.load %arg2[%c0_34, %c4, %c0_35, %c0_36] : memref<1x9x4x4xf32, #tpu.memory_space<vmem>>, vector<1x1x4x4xf32>
    %28 = vector.shape_cast %27 : vector<1x1x4x4xf32> to vector<4x4xf32>
    %cst_37 = arith.constant dense<0.000000e+00> : vector<4x80xf32>
    %29 = tpu.matmul %28, %26, %cst_37 {dimension_numbers = #tpu.dot_dimension_numbers<[1], [0], [0], [1], [0, 0, 1, 1], [], []>} : vector<4x4xf32>, vector<4x80xf32>, vector<4x80xf32> -> vector<4x80xf32>
    %30 = arith.addf %24, %29 : vector<4x80xf32>
    %c0_38 = arith.constant 0 : index
    %c0_39 = arith.constant 0 : index
    %c0_40 = arith.constant 0 : index
    %c12 = arith.constant 12 : index
    %31 = vector.load %arg1[%c0_38, %c0_39, %c0_40, %c12] : memref<1x4x2x102xf32, #tpu.memory_space<vmem>>, vector<1x4x1x80xf32>
    %32 = vector.shape_cast %31 : vector<1x4x1x80xf32> to vector<4x80xf32>
    %c0_41 = arith.constant 0 : index
    %c5 = arith.constant 5 : index
    %c0_42 = arith.constant 0 : index
    %c0_43 = arith.constant 0 : index
    %33 = vector.load %arg2[%c0_41, %c5, %c0_42, %c0_43] : memref<1x9x4x4xf32, #tpu.memory_space<vmem>>, vector<1x1x4x4xf32>
    %34 = vector.shape_cast %33 : vector<1x1x4x4xf32> to vector<4x4xf32>
    %cst_44 = arith.constant dense<0.000000e+00> : vector<4x80xf32>
    %35 = tpu.matmul %34, %32, %cst_44 {dimension_numbers = #tpu.dot_dimension_numbers<[1], [0], [0], [1], [0, 0, 1, 1], [], []>} : vector<4x4xf32>, vector<4x80xf32>, vector<4x80xf32> -> vector<4x80xf32>
    %36 = arith.addf %30, %35 : vector<4x80xf32>
    %c0_45 = arith.constant 0 : index
    %c0_46 = arith.constant 0 : index
    %c0_47 = arith.constant 0 : index
    %c20 = arith.constant 20 : index
    %37 = vector.load %arg1[%c0_45, %c0_46, %c0_47, %c20] : memref<1x4x2x102xf32, #tpu.memory_space<vmem>>, vector<1x4x1x80xf32>
    %38 = vector.shape_cast %37 : vector<1x4x1x80xf32> to vector<4x80xf32>
    %c0_48 = arith.constant 0 : index
    %c6 = arith.constant 6 : index
    %c0_49 = arith.constant 0 : index
    %c0_50 = arith.constant 0 : index
    %39 = vector.load %arg2[%c0_48, %c6, %c0_49, %c0_50] : memref<1x9x4x4xf32, #tpu.memory_space<vmem>>, vector<1x1x4x4xf32>
    %40 = vector.shape_cast %39 : vector<1x1x4x4xf32> to vector<4x4xf32>
    %cst_51 = arith.constant dense<0.000000e+00> : vector<4x80xf32>
    %41 = tpu.matmul %40, %38, %cst_51 {dimension_numbers = #tpu.dot_dimension_numbers<[1], [0], [0], [1], [0, 0, 1, 1], [], []>} : vector<4x4xf32>, vector<4x80xf32>, vector<4x80xf32> -> vector<4x80xf32>
    %42 = arith.addf %36, %41 : vector<4x80xf32>
    %c0_52 = arith.constant 0 : index
    %c0_53 = arith.constant 0 : index
    %c0_54 = arith.constant 0 : index
    %c21 = arith.constant 21 : index
    %43 = vector.load %arg1[%c0_52, %c0_53, %c0_54, %c21] : memref<1x4x2x102xf32, #tpu.memory_space<vmem>>, vector<1x4x1x80xf32>
    %44 = vector.shape_cast %43 : vector<1x4x1x80xf32> to vector<4x80xf32>
    %c0_55 = arith.constant 0 : index
    %c7 = arith.constant 7 : index
    %c0_56 = arith.constant 0 : index
    %c0_57 = arith.constant 0 : index
    %45 = vector.load %arg2[%c0_55, %c7, %c0_56, %c0_57] : memref<1x9x4x4xf32, #tpu.memory_space<vmem>>, vector<1x1x4x4xf32>
    %46 = vector.shape_cast %45 : vector<1x1x4x4xf32> to vector<4x4xf32>
    %cst_58 = arith.constant dense<0.000000e+00> : vector<4x80xf32>
    %47 = tpu.matmul %46, %44, %cst_58 {dimension_numbers = #tpu.dot_dimension_numbers<[1], [0], [0], [1], [0, 0, 1, 1], [], []>} : vector<4x4xf32>, vector<4x80xf32>, vector<4x80xf32> -> vector<4x80xf32>
    %48 = arith.addf %42, %47 : vector<4x80xf32>
    %c0_59 = arith.constant 0 : index
    %c0_60 = arith.constant 0 : index
    %c0_61 = arith.constant 0 : index
    %c22 = arith.constant 22 : index
    %49 = vector.load %arg1[%c0_59, %c0_60, %c0_61, %c22] : memref<1x4x2x102xf32, #tpu.memory_space<vmem>>, vector<1x4x1x80xf32>
    %50 = vector.shape_cast %49 : vector<1x4x1x80xf32> to vector<4x80xf32>
    %c0_62 = arith.constant 0 : index
    %c8 = arith.constant 8 : index
    %c0_63 = arith.constant 0 : index
    %c0_64 = arith.constant 0 : index
    %51 = vector.load %arg2[%c0_62, %c8, %c0_63, %c0_64] : memref<1x9x4x4xf32, #tpu.memory_space<vmem>>, vector<1x1x4x4xf32>
    %52 = vector.shape_cast %51 : vector<1x1x4x4xf32> to vector<4x4xf32>
    %cst_65 = arith.constant dense<0.000000e+00> : vector<4x80xf32>
    %53 = tpu.matmul %52, %50, %cst_65 {dimension_numbers = #tpu.dot_dimension_numbers<[1], [0], [0], [1], [0, 0, 1, 1], [], []>} : vector<4x4xf32>, vector<4x80xf32>, vector<4x80xf32> -> vector<4x80xf32>
    %54 = arith.addf %48, %53 : vector<4x80xf32>
    %c0_66 = arith.constant 0 : index
    %c0_67 = arith.constant 0 : index
    %c0_68 = arith.constant 0 : index
    %55 = vector.load %arg3[%c0_66, %c0_67, %c0_68] : memref<1x4x1xf32, #tpu.memory_space<vmem>>, vector<1x4x1xf32>
    %56 = vector.shape_cast %55 : vector<1x4x1xf32> to vector<4x1xf32>
    %57 = vector.broadcast %56 : vector<4x1xf32> to vector<4x80xf32>
    %58 = arith.addf %54, %57 : vector<4x80xf32>
    %c0_69 = arith.constant 0 : index
    %c0_70 = arith.constant 0 : index
    %c0_71 = arith.constant 0 : index
    %c0_72 = arith.constant 0 : index
    %59 = vector.load %arg4[%c0_69, %c0_70, %c0_71, %c0_72] : memref<1x4x2x80xf32, #tpu.memory_space<vmem>>, vector<1x4x1x80xf32>
    %60 = vector.shape_cast %59 : vector<1x4x1x80xf32> to vector<4x80xf32>
    %61 = vector.shape_cast %58 : vector<4x80xf32> to vector<1x4x1x80xf32>
    tpu.vector_store %arg4[%c0_69, %c0_70, %c0_71, %c0_72], %61 {strides = array<i32>} : memref<1x4x2x80xf32, #tpu.memory_space<vmem>>, vector<1x4x1x80xf32>,
    %cst_73 = arith.constant 0.000000e+00 : f32
    %62 = vector.broadcast %cst_73 : f32 to vector<4x80xf32>
    %c0_74 = arith.constant 0 : index
    %c0_75 = arith.constant 0 : index
    %c1_76 = arith.constant 1 : index
    %c0_77 = arith.constant 0 : index
    %63 = vector.load %arg1[%c0_74, %c0_75, %c1_76, %c0_77] : memref<1x4x2x102xf32, #tpu.memory_space<vmem>>, vector<1x4x1x80xf32>
    %64 = vector.shape_cast %63 : vector<1x4x1x80xf32> to vector<4x80xf32>
    %c0_78 = arith.constant 0 : index
    %c0_79 = arith.constant 0 : index
    %c0_80 = arith.constant 0 : index
    %c0_81 = arith.constant 0 : index
    %65 = vector.load %arg2[%c0_78, %c0_79, %c0_80, %c0_81] : memref<1x9x4x4xf32, #tpu.memory_space<vmem>>, vector<1x1x4x4xf32>
    %66 = vector.shape_cast %65 : vector<1x1x4x4xf32> to vector<4x4xf32>
    %cst_82 = arith.constant dense<0.000000e+00> : vector<4x80xf32>
    %67 = tpu.matmul %66, %64, %cst_82 {dimension_numbers = #tpu.dot_dimension_numbers<[1], [0], [0], [1], [0, 0, 1, 1], [], []>} : vector<4x4xf32>, vector<4x80xf32>, vector<4x80xf32> -> vector<4x80xf32>
    %68 = arith.addf %62, %67 : vector<4x80xf32>
    %c0_83 = arith.constant 0 : index
    %c0_84 = arith.constant 0 : index
    %c1_85 = arith.constant 1 : index
    %c1_86 = arith.constant 1 : index
    %69 = vector.load %arg1[%c0_83, %c0_84, %c1_85, %c1_86] : memref<1x4x2x102xf32, #tpu.memory_space<vmem>>, vector<1x4x1x80xf32>
    %70 = vector.shape_cast %69 : vector<1x4x1x80xf32> to vector<4x80xf32>
    %c0_87 = arith.constant 0 : index
    %c1_88 = arith.constant 1 : index
    %c0_89 = arith.constant 0 : index
    %c0_90 = arith.constant 0 : index
    %71 = vector.load %arg2[%c0_87, %c1_88, %c0_89, %c0_90] : memref<1x9x4x4xf32, #tpu.memory_space<vmem>>, vector<1x1x4x4xf32>
    %72 = vector.shape_cast %71 : vector<1x1x4x4xf32> to vector<4x4xf32>
    %cst_91 = arith.constant dense<0.000000e+00> : vector<4x80xf32>
    %73 = tpu.matmul %72, %70, %cst_91 {dimension_numbers = #tpu.dot_dimension_numbers<[1], [0], [0], [1], [0, 0, 1, 1], [], []>} : vector<4x4xf32>, vector<4x80xf32>, vector<4x80xf32> -> vector<4x80xf32>
    %74 = arith.addf %68, %73 : vector<4x80xf32>
    %c0_92 = arith.constant 0 : index
    %c0_93 = arith.constant 0 : index
    %c1_94 = arith.constant 1 : index
    %c2_95 = arith.constant 2 : index
    %75 = vector.load %arg1[%c0_92, %c0_93, %c1_94, %c2_95] : memref<1x4x2x102xf32, #tpu.memory_space<vmem>>, vector<1x4x1x80xf32>
    %76 = vector.shape_cast %75 : vector<1x4x1x80xf32> to vector<4x80xf32>
    %c0_96 = arith.constant 0 : index
    %c2_97 = arith.constant 2 : index
    %c0_98 = arith.constant 0 : index
    %c0_99 = arith.constant 0 : index
    %77 = vector.load %arg2[%c0_96, %c2_97, %c0_98, %c0_99] : memref<1x9x4x4xf32, #tpu.memory_space<vmem>>, vector<1x1x4x4xf32>
    %78 = vector.shape_cast %77 : vector<1x1x4x4xf32> to vector<4x4xf32>
    %cst_100 = arith.constant dense<0.000000e+00> : vector<4x80xf32>
    %79 = tpu.matmul %78, %76, %cst_100 {dimension_numbers = #tpu.dot_dimension_numbers<[1], [0], [0], [1], [0, 0, 1, 1], [], []>} : vector<4x4xf32>, vector<4x80xf32>, vector<4x80xf32> -> vector<4x80xf32>
    %80 = arith.addf %74, %79 : vector<4x80xf32>
    %c0_101 = arith.constant 0 : index
    %c0_102 = arith.constant 0 : index
    %c1_103 = arith.constant 1 : index
    %c10_104 = arith.constant 10 : index
    %81 = vector.load %arg1[%c0_101, %c0_102, %c1_103, %c10_104] : memref<1x4x2x102xf32, #tpu.memory_space<vmem>>, vector<1x4x1x80xf32>
    %82 = vector.shape_cast %81 : vector<1x4x1x80xf32> to vector<4x80xf32>
    %c0_105 = arith.constant 0 : index
    %c3_106 = arith.constant 3 : index
    %c0_107 = arith.constant 0 : index
    %c0_108 = arith.constant 0 : index
    %83 = vector.load %arg2[%c0_105, %c3_106, %c0_107, %c0_108] : memref<1x9x4x4xf32, #tpu.memory_space<vmem>>, vector<1x1x4x4xf32>
    %84 = vector.shape_cast %83 : vector<1x1x4x4xf32> to vector<4x4xf32>
    %cst_109 = arith.constant dense<0.000000e+00> : vector<4x80xf32>
    %85 = tpu.matmul %84, %82, %cst_109 {dimension_numbers = #tpu.dot_dimension_numbers<[1], [0], [0], [1], [0, 0, 1, 1], [], []>} : vector<4x4xf32>, vector<4x80xf32>, vector<4x80xf32> -> vector<4x80xf32>
    %86 = arith.addf %80, %85 : vector<4x80xf32>
    %c0_110 = arith.constant 0 : index
    %c0_111 = arith.constant 0 : index
    %c1_112 = arith.constant 1 : index
    %c11_113 = arith.constant 11 : index
    %87 = vector.load %arg1[%c0_110, %c0_111, %c1_112, %c11_113] : memref<1x4x2x102xf32, #tpu.memory_space<vmem>>, vector<1x4x1x80xf32>
    %88 = vector.shape_cast %87 : vector<1x4x1x80xf32> to vector<4x80xf32>
    %c0_114 = arith.constant 0 : index
    %c4_115 = arith.constant 4 : index
    %c0_116 = arith.constant 0 : index
    %c0_117 = arith.constant 0 : index
    %89 = vector.load %arg2[%c0_114, %c4_115, %c0_116, %c0_117] : memref<1x9x4x4xf32, #tpu.memory_space<vmem>>, vector<1x1x4x4xf32>
    %90 = vector.shape_cast %89 : vector<1x1x4x4xf32> to vector<4x4xf32>
    %cst_118 = arith.constant dense<0.000000e+00> : vector<4x80xf32>
    %91 = tpu.matmul %90, %88, %cst_118 {dimension_numbers = #tpu.dot_dimension_numbers<[1], [0], [0], [1], [0, 0, 1, 1], [], []>} : vector<4x4xf32>, vector<4x80xf32>, vector<4x80xf32> -> vector<4x80xf32>
    %92 = arith.addf %86, %91 : vector<4x80xf32>
    %c0_119 = arith.constant 0 : index
    %c0_120 = arith.constant 0 : index
    %c1_121 = arith.constant 1 : index
    %c12_122 = arith.constant 12 : index
    %93 = vector.load %arg1[%c0_119, %c0_120, %c1_121, %c12_122] : memref<1x4x2x102xf32, #tpu.memory_space<vmem>>, vector<1x4x1x80xf32>
    %94 = vector.shape_cast %93 : vector<1x4x1x80xf32> to vector<4x80xf32>
    %c0_123 = arith.constant 0 : index
    %c5_124 = arith.constant 5 : index
    %c0_125 = arith.constant 0 : index
    %c0_126 = arith.constant 0 : index
    %95 = vector.load %arg2[%c0_123, %c5_124, %c0_125, %c0_126] : memref<1x9x4x4xf32, #tpu.memory_space<vmem>>, vector<1x1x4x4xf32>
    %96 = vector.shape_cast %95 : vector<1x1x4x4xf32> to vector<4x4xf32>
    %cst_127 = arith.constant dense<0.000000e+00> : vector<4x80xf32>
    %97 = tpu.matmul %96, %94, %cst_127 {dimension_numbers = #tpu.dot_dimension_numbers<[1], [0], [0], [1], [0, 0, 1, 1], [], []>} : vector<4x4xf32>, vector<4x80xf32>, vector<4x80xf32> -> vector<4x80xf32>
    %98 = arith.addf %92, %97 : vector<4x80xf32>
    %c0_128 = arith.constant 0 : index
    %c0_129 = arith.constant 0 : index
    %c1_130 = arith.constant 1 : index
    %c20_131 = arith.constant 20 : index
    %99 = vector.load %arg1[%c0_128, %c0_129, %c1_130, %c20_131] : memref<1x4x2x102xf32, #tpu.memory_space<vmem>>, vector<1x4x1x80xf32>
    %100 = vector.shape_cast %99 : vector<1x4x1x80xf32> to vector<4x80xf32>
    %c0_132 = arith.constant 0 : index
    %c6_133 = arith.constant 6 : index
    %c0_134 = arith.constant 0 : index
    %c0_135 = arith.constant 0 : index
    %101 = vector.load %arg2[%c0_132, %c6_133, %c0_134, %c0_135] : memref<1x9x4x4xf32, #tpu.memory_space<vmem>>, vector<1x1x4x4xf32>
    %102 = vector.shape_cast %101 : vector<1x1x4x4xf32> to vector<4x4xf32>
    %cst_136 = arith.constant dense<0.000000e+00> : vector<4x80xf32>
    %103 = tpu.matmul %102, %100, %cst_136 {dimension_numbers = #tpu.dot_dimension_numbers<[1], [0], [0], [1], [0, 0, 1, 1], [], []>} : vector<4x4xf32>, vector<4x80xf32>, vector<4x80xf32> -> vector<4x80xf32>
    %104 = arith.addf %98, %103 : vector<4x80xf32>
    %c0_137 = arith.constant 0 : index
    %c0_138 = arith.constant 0 : index
    %c1_139 = arith.constant 1 : index
    %c21_140 = arith.constant 21 : index
    %105 = vector.load %arg1[%c0_137, %c0_138, %c1_139, %c21_140] : memref<1x4x2x102xf32, #tpu.memory_space<vmem>>, vector<1x4x1x80xf32>
    %106 = vector.shape_cast %105 : vector<1x4x1x80xf32> to vector<4x80xf32>
    %c0_141 = arith.constant 0 : index
    %c7_142 = arith.constant 7 : index
    %c0_143 = arith.constant 0 : index
    %c0_144 = arith.constant 0 : index
    %107 = vector.load %arg2[%c0_141, %c7_142, %c0_143, %c0_144] : memref<1x9x4x4xf32, #tpu.memory_space<vmem>>, vector<1x1x4x4xf32>
    %108 = vector.shape_cast %107 : vector<1x1x4x4xf32> to vector<4x4xf32>
    %cst_145 = arith.constant dense<0.000000e+00> : vector<4x80xf32>
    %109 = tpu.matmul %108, %106, %cst_145 {dimension_numbers = #tpu.dot_dimension_numbers<[1], [0], [0], [1], [0, 0, 1, 1], [], []>} : vector<4x4xf32>, vector<4x80xf32>, vector<4x80xf32> -> vector<4x80xf32>
    %110 = arith.addf %104, %109 : vector<4x80xf32>
    %c0_146 = arith.constant 0 : index
    %c0_147 = arith.constant 0 : index
    %c1_148 = arith.constant 1 : index
    %c22_149 = arith.constant 22 : index
    %111 = vector.load %arg1[%c0_146, %c0_147, %c1_148, %c22_149] : memref<1x4x2x102xf32, #tpu.memory_space<vmem>>, vector<1x4x1x80xf32>
    %112 = vector.shape_cast %111 : vector<1x4x1x80xf32> to vector<4x80xf32>
    %c0_150 = arith.constant 0 : index
    %c8_151 = arith.constant 8 : index
    %c0_152 = arith.constant 0 : index
    %c0_153 = arith.constant 0 : index
    %113 = vector.load %arg2[%c0_150, %c8_151, %c0_152, %c0_153] : memref<1x9x4x4xf32, #tpu.memory_space<vmem>>, vector<1x1x4x4xf32>
    %114 = vector.shape_cast %113 : vector<1x1x4x4xf32> to vector<4x4xf32>
    %cst_154 = arith.constant dense<0.000000e+00> : vector<4x80xf32>
    %115 = tpu.matmul %114, %112, %cst_154 {dimension_numbers = #tpu.dot_dimension_numbers<[1], [0], [0], [1], [0, 0, 1, 1], [], []>} : vector<4x4xf32>, vector<4x80xf32>, vector<4x80xf32> -> vector<4x80xf32>
    %116 = arith.addf %110, %115 : vector<4x80xf32>
    %c0_155 = arith.constant 0 : index
    %c0_156 = arith.constant 0 : index
    %c0_157 = arith.constant 0 : index
    %117 = vector.load %arg3[%c0_155, %c0_156, %c0_157] : memref<1x4x1xf32, #tpu.memory_space<vmem>>, vector<1x4x1xf32>
    %118 = vector.shape_cast %117 : vector<1x4x1xf32> to vector<4x1xf32>
    %119 = vector.broadcast %118 : vector<4x1xf32> to vector<4x80xf32>
    %120 = arith.addf %116, %119 : vector<4x80xf32>
    %c0_158 = arith.constant 0 : index
    %c0_159 = arith.constant 0 : index
    %c1_160 = arith.constant 1 : index
    %c0_161 = arith.constant 0 : index
    %121 = vector.load %arg4[%c0_158, %c0_159, %c1_160, %c0_161] : memref<1x4x2x80xf32, #tpu.memory_space<vmem>>, vector<1x4x1x80xf32>
    %122 = vector.shape_cast %121 : vector<1x4x1x80xf32> to vector<4x80xf32>
    %123 = vector.shape_cast %120 : vector<4x80xf32> to vector<1x4x1x80xf32>
    tpu.vector_store %arg4[%c0_158, %c0_159, %c1_160, %c0_161], %123 {strides = array<i32>} : memref<1x4x2x80xf32, #tpu.memory_space<vmem>>, vector<1x4x1x80xf32>,
    return
  }
  func.func @transform_0(%arg0: i32) -> (i32, i32, i32, i32) {
    %c0_i32 = arith.constant 0 : i32
    %c0_i32_0 = arith.constant 0 : i32
    %c0_i32_1 = arith.constant 0 : i32
    %c0_i32_2 = arith.constant 0 : i32
    return %arg0, %c0_i32, %c0_i32_0, %c0_i32_1 : i32, i32, i32, i32
  }
  func.func @transform_1(%arg0: i32) -> (i32, i32, i32, i32) {
    %c0_i32 = arith.constant 0 : i32
    %c0_i32_0 = arith.constant 0 : i32
    %c0_i32_1 = arith.constant 0 : i32
    %c0_i32_2 = arith.constant 0 : i32
    return %arg0, %c0_i32, %c0_i32_0, %c0_i32_1 : i32, i32, i32, i32
  }
  func.func @transform_2(%arg0: i32) -> (i32, i32, i32) {
    %c0_i32 = arith.constant 0 : i32
    %c0_i32_0 = arith.constant 0 : i32
    %c0_i32_1 = arith.constant 0 : i32
    return %arg0, %c0_i32, %c0_i32_0 : i32, i32, i32
  }
  func.func @transform_3(%arg0: i32) -> (i32, i32, i32, i32) {
    %c0_i32 = arith.constant 0 : i32
    %c0_i32_0 = arith.constant 0 : i32
    %c0_i32_1 = arith.constant 0 : i32
    %c0_i32_2 = arith.constant 0 : i32
    return %arg0, %c0_i32, %c0_i32_0, %c0_i32_1 : i32, i32, i32, i32
  }
}

module attributes {stable_mosaic.version = 11 : i64} {
  func.func @kernel(%arg0: i32, %arg1: i32, %arg2: i32, %arg3: memref<8x128xbf16, #tpu.memory_space<vmem>>, %arg4: memref<128x128xbf16, #tpu.memory_space<vmem>>, %arg5: memref<8x1xf32, #tpu.memory_space<vmem>>, %arg6: memref<8x128xf32, #tpu.memory_space<vmem>>, %arg7: memref<8x128xf32, #tpu.memory_space<vmem>>) attributes {dimension_semantics = [#tpu.dimension_semantics<parallel>, #tpu.dimension_semantics<parallel>, #tpu.dimension_semantics<arbitrary>], iteration_bounds = array<i64: 1, 1, 1>, scalar_prefetch = 0 : i64, scratch_operands = 1 : i64, tpu.core_type = #tpu.core_type<tc>, window_params = [{transform_indices = @transform_0, window_bounds = array<i64: 8, 128>}, {transform_indices = @transform_1, window_bounds = array<i64: 128, 128>}, {transform_indices = @transform_2, window_bounds = array<i64: 8, 1>}, {transform_indices = @transform_3, window_bounds = array<i64: 8, 128>}]} {
    %c0_i32 = arith.constant 0 : i32
    %0 = arith.cmpi eq, %arg2, %c0_i32 : i32
    %1 = arith.extui %0 : i1 to i32
    %c0_i32_0 = arith.constant 0 : i32
    %2 = arith.cmpi ne, %1, %c0_i32_0 : i32
    scf.if %2 {
      %cst_10 = arith.constant 0.000000e+00 : f32
      %12 = vector.broadcast %cst_10 : f32 to vector<8x128xf32>
      %c0_11 = arith.constant 0 : index
      %c0_12 = arith.constant 0 : index
      %13 = vector.load %arg7[%c0_11, %c0_12] : memref<8x128xf32, #tpu.memory_space<vmem>>, vector<8x128xf32>
      tpu.vector_store %arg7[%c0_11, %c0_12], %12 {strides = array<i32>} : memref<8x128xf32, #tpu.memory_space<vmem>>, vector<8x128xf32>,
    } else {
    }
    %c0 = arith.constant 0 : index
    %c0_1 = arith.constant 0 : index
    %3 = vector.load %arg7[%c0, %c0_1] : memref<8x128xf32, #tpu.memory_space<vmem>>, vector<8x128xf32>
    %c0_2 = arith.constant 0 : index
    %c0_3 = arith.constant 0 : index
    %4 = vector.load %arg3[%c0_2, %c0_3] : memref<8x128xbf16, #tpu.memory_space<vmem>>, vector<8x128xbf16>
    %c0_4 = arith.constant 0 : index
    %c0_5 = arith.constant 0 : index
    %5 = vector.load %arg4[%c0_4, %c0_5] : memref<128x128xbf16, #tpu.memory_space<vmem>>, vector<128x128xbf16>
    %cst = arith.constant dense<0.000000e+00> : vector<8x128xf32>
    %6 = tpu.matmul %4, %5, %cst {dimension_numbers = #tpu.dot_dimension_numbers<[1], [0], [0], [1], [0, 0, 1, 1], [], []>} : vector<8x128xbf16>, vector<128x128xbf16>, vector<8x128xf32> -> vector<8x128xf32>
    %7 = arith.addf %3, %6 : vector<8x128xf32>
    %c0_6 = arith.constant 0 : index
    %c0_7 = arith.constant 0 : index
    %8 = vector.load %arg7[%c0_6, %c0_7] : memref<8x128xf32, #tpu.memory_space<vmem>>, vector<8x128xf32>
    tpu.vector_store %arg7[%c0_6, %c0_7], %7 {strides = array<i32>} : memref<8x128xf32, #tpu.memory_space<vmem>>, vector<8x128xf32>,
    %c0_i32_8 = arith.constant 0 : i32
    %9 = arith.cmpi eq, %arg2, %c0_i32_8 : i32
    %10 = arith.extui %9 : i1 to i32
    %c0_i32_9 = arith.constant 0 : i32
    %11 = arith.cmpi ne, %10, %c0_i32_9 : i32
    scf.if %11 {
      %c0_10 = arith.constant 0 : index
      %c0_11 = arith.constant 0 : index
      %12 = vector.load %arg7[%c0_10, %c0_11] : memref<8x128xf32, #tpu.memory_space<vmem>>, vector<8x128xf32>
      %c0_12 = arith.constant 0 : index
      %c0_13 = arith.constant 0 : index
      %13 = vector.load %arg5[%c0_12, %c0_13] : memref<8x1xf32, #tpu.memory_space<vmem>>, vector<8x1xf32>
      %14 = vector.broadcast %13 : vector<8x1xf32> to vector<8x128xf32>
      %15 = arith.addf %12, %14 : vector<8x128xf32>
      %c0_14 = arith.constant 0 : index
      %c0_15 = arith.constant 0 : index
      %16 = vector.load %arg6[%c0_14, %c0_15] : memref<8x128xf32, #tpu.memory_space<vmem>>, vector<8x128xf32>
      tpu.vector_store %arg6[%c0_14, %c0_15], %15 {strides = array<i32>} : memref<8x128xf32, #tpu.memory_space<vmem>>, vector<8x128xf32>,
    } else {
    }
    return
  }
  func.func @transform_0(%arg0: i32, %arg1: i32, %arg2: i32) -> (i32, i32) {
    %c0_i32 = arith.constant 0 : i32
    return %arg0, %arg2 : i32, i32
  }
  func.func @transform_1(%arg0: i32, %arg1: i32, %arg2: i32) -> (i32, i32) {
    %c0_i32 = arith.constant 0 : i32
    return %arg2, %arg1 : i32, i32
  }
  func.func @transform_2(%arg0: i32, %arg1: i32, %arg2: i32) -> (i32, i32) {
    %c0_i32 = arith.constant 0 : i32
    %c0_i32_0 = arith.constant 0 : i32
    return %arg0, %c0_i32 : i32, i32
  }
  func.func @transform_3(%arg0: i32, %arg1: i32, %arg2: i32) -> (i32, i32) {
    %c0_i32 = arith.constant 0 : i32
    return %arg0, %arg1 : i32, i32
  }
}

module attributes {stable_mosaic.version = 11 : i64} {
  func.func @kernel(%arg0: i32, %arg1: i32, %arg2: i32, %arg3: memref<8x128xbf16, #tpu.memory_space<vmem>>, %arg4: memref<128x128xbf16, #tpu.memory_space<vmem>>, %arg5: memref<8x1xf32, #tpu.memory_space<vmem>>, %arg6: memref<8x128xf32, #tpu.memory_space<vmem>>, %arg7: memref<8x128xf32, #tpu.memory_space<vmem>>) attributes {dimension_semantics = [#tpu.dimension_semantics<parallel>, #tpu.dimension_semantics<parallel>, #tpu.dimension_semantics<arbitrary>], iteration_bounds = array<i64: 1, 1, 1>, scalar_prefetch = 0 : i64, scratch_operands = 1 : i64, tpu.core_type = #tpu.core_type<tc>, window_params = [{transform_indices = @transform_0, window_bounds = array<i64: 8, 128>}, {transform_indices = @transform_1, window_bounds = array<i64: 128, 128>}, {transform_indices = @transform_2, window_bounds = array<i64: 8, 1>}, {transform_indices = @transform_3, window_bounds = array<i64: 8, 128>}]} {
    %c0_i32 = arith.constant 0 : i32
    %0 = arith.cmpi eq, %arg2, %c0_i32 : i32
    %1 = arith.extui %0 : i1 to i32
    %c0_i32_0 = arith.constant 0 : i32
    %2 = arith.cmpi ne, %1, %c0_i32_0 : i32
    scf.if %2 {
      %cst_10 = arith.constant 0.000000e+00 : f32
      %12 = vector.broadcast %cst_10 : f32 to vector<8x128xf32>
      %c0_11 = arith.constant 0 : index
      %c0_12 = arith.constant 0 : index
      %13 = vector.load %arg7[%c0_11, %c0_12] : memref<8x128xf32, #tpu.memory_space<vmem>>, vector<8x128xf32>
      tpu.vector_store %arg7[%c0_11, %c0_12], %12 {strides = array<i32>} : memref<8x128xf32, #tpu.memory_space<vmem>>, vector<8x128xf32>,
    } else {
    }
    %c0 = arith.constant 0 : index
    %c0_1 = arith.constant 0 : index
    %3 = vector.load %arg7[%c0, %c0_1] : memref<8x128xf32, #tpu.memory_space<vmem>>, vector<8x128xf32>
    %c0_2 = arith.constant 0 : index
    %c0_3 = arith.constant 0 : index
    %4 = vector.load %arg3[%c0_2, %c0_3] : memref<8x128xbf16, #tpu.memory_space<vmem>>, vector<8x128xbf16>
    %c0_4 = arith.constant 0 : index
    %c0_5 = arith.constant 0 : index
    %5 = vector.load %arg4[%c0_4, %c0_5] : memref<128x128xbf16, #tpu.memory_space<vmem>>, vector<128x128xbf16>
    %cst = arith.constant dense<0.000000e+00> : vector<8x128xf32>
    %6 = tpu.matmul %4, %5, %cst {dimension_numbers = #tpu.dot_dimension_numbers<[1], [0], [0], [1], [0, 0, 1, 1], [], []>} : vector<8x128xbf16>, vector<128x128xbf16>, vector<8x128xf32> -> vector<8x128xf32>
    %7 = arith.addf %3, %6 : vector<8x128xf32>
    %c0_6 = arith.constant 0 : index
    %c0_7 = arith.constant 0 : index
    %8 = vector.load %arg7[%c0_6, %c0_7] : memref<8x128xf32, #tpu.memory_space<vmem>>, vector<8x128xf32>
    tpu.vector_store %arg7[%c0_6, %c0_7], %7 {strides = array<i32>} : memref<8x128xf32, #tpu.memory_space<vmem>>, vector<8x128xf32>,
    %c0_i32_8 = arith.constant 0 : i32
    %9 = arith.cmpi eq, %arg2, %c0_i32_8 : i32
    %10 = arith.extui %9 : i1 to i32
    %c0_i32_9 = arith.constant 0 : i32
    %11 = arith.cmpi ne, %10, %c0_i32_9 : i32
    scf.if %11 {
      %c0_10 = arith.constant 0 : index
      %c0_11 = arith.constant 0 : index
      %12 = vector.load %arg7[%c0_10, %c0_11] : memref<8x128xf32, #tpu.memory_space<vmem>>, vector<8x128xf32>
      %c0_12 = arith.constant 0 : index
      %c0_13 = arith.constant 0 : index
      %13 = vector.load %arg5[%c0_12, %c0_13] : memref<8x1xf32, #tpu.memory_space<vmem>>, vector<8x1xf32>
      %14 = vector.broadcast %13 : vector<8x1xf32> to vector<8x128xf32>
      %15 = arith.addf %12, %14 : vector<8x128xf32>
      %cst_14 = arith.constant 0.000000e+00 : f32
      %16 = vector.broadcast %cst_14 : f32 to vector<8x128xf32>
      %17 = arith.maximumf %15, %16 : vector<8x128xf32>
      %c0_15 = arith.constant 0 : index
      %c0_16 = arith.constant 0 : index
      %18 = vector.load %arg6[%c0_15, %c0_16] : memref<8x128xf32, #tpu.memory_space<vmem>>, vector<8x128xf32>
      tpu.vector_store %arg6[%c0_15, %c0_16], %17 {strides = array<i32>} : memref<8x128xf32, #tpu.memory_space<vmem>>, vector<8x128xf32>,
    } else {
    }
    return
  }
  func.func @transform_0(%arg0: i32, %arg1: i32, %arg2: i32) -> (i32, i32) {
    %c0_i32 = arith.constant 0 : i32
    return %arg0, %arg2 : i32, i32
  }
  func.func @transform_1(%arg0: i32, %arg1: i32, %arg2: i32) -> (i32, i32) {
    %c0_i32 = arith.constant 0 : i32
    return %arg2, %arg1 : i32, i32
  }
  func.func @transform_2(%arg0: i32, %arg1: i32, %arg2: i32) -> (i32, i32) {
    %c0_i32 = arith.constant 0 : i32
    %c0_i32_0 = arith.constant 0 : i32
    return %arg0, %c0_i32 : i32, i32
  }
  func.func @transform_3(%arg0: i32, %arg1: i32, %arg2: i32) -> (i32, i32) {
    %c0_i32 = arith.constant 0 : i32
    return %arg0, %arg1 : i32, i32
  }
}

module attributes {stable_mosaic.version = 11 : i64} {
  func.func @_gate_kernel(%arg0: i32, %arg1: i32, %arg2: memref<8x128xf32, #tpu.memory_space<vmem>>, %arg3: memref<8x128xf32, #tpu.memory_space<vmem>>, %arg4: memref<8x128xf32, #tpu.memory_space<vmem>>, %arg5: memref<8x128xf32, #tpu.memory_space<vmem>>) attributes {dimension_semantics = [#tpu.dimension_semantics<parallel>, #tpu.dimension_semantics<parallel>], iteration_bounds = array<i64: 1, 1>, scalar_prefetch = 0 : i64, scratch_operands = 0 : i64, tpu.core_type = #tpu.core_type<tc>, window_params = [{transform_indices = @transform_0, window_bounds = array<i64: 8, 128>}, {transform_indices = @transform_1, window_bounds = array<i64: 8, 128>}, {transform_indices = @transform_2, window_bounds = array<i64: 8, 128>}, {transform_indices = @transform_3, window_bounds = array<i64: 8, 128>}]} {
    %c0 = arith.constant 0 : index
    %c0_0 = arith.constant 0 : index
    %0 = vector.load %arg2[%c0, %c0_0] : memref<8x128xf32, #tpu.memory_space<vmem>>, vector<8x128xf32>
    %cst = arith.constant 0.000000e+00 : f32
    %1 = vector.broadcast %cst : f32 to vector<8x128xf32>
    %2 = arith.subf %1, %0 : vector<8x128xf32>
    %3 = math.exp %2 : vector<8x128xf32>
    %cst_1 = arith.constant 1.000000e+00 : f32
    %4 = vector.broadcast %cst_1 : f32 to vector<8x128xf32>
    %5 = arith.addf %4, %3 : vector<8x128xf32>
    %6 = tpu.reciprocal %5 {approx = true} : vector<8x128xf32> -> vector<8x128xf32>
    %c0_2 = arith.constant 0 : index
    %c0_3 = arith.constant 0 : index
    %7 = vector.load %arg3[%c0_2, %c0_3] : memref<8x128xf32, #tpu.memory_space<vmem>>, vector<8x128xf32>
    %8 = arith.mulf %6, %7 : vector<8x128xf32>
    %c0_4 = arith.constant 0 : index
    %c0_5 = arith.constant 0 : index
    %9 = vector.load %arg4[%c0_4, %c0_5] : memref<8x128xf32, #tpu.memory_space<vmem>>, vector<8x128xf32>
    %10 = arith.addf %8, %9 : vector<8x128xf32>
    %c0_6 = arith.constant 0 : index
    %c0_7 = arith.constant 0 : index
    %11 = vector.load %arg5[%c0_6, %c0_7] : memref<8x128xf32, #tpu.memory_space<vmem>>, vector<8x128xf32>
    tpu.vector_store %arg5[%c0_6, %c0_7], %10 {strides = array<i32>} : memref<8x128xf32, #tpu.memory_space<vmem>>, vector<8x128xf32>,
    return
  }
  func.func @transform_0(%arg0: i32, %arg1: i32) -> (i32, i32) {
    %c0_i32 = arith.constant 0 : i32
    return %arg0, %arg1 : i32, i32
  }
  func.func @transform_1(%arg0: i32, %arg1: i32) -> (i32, i32) {
    %c0_i32 = arith.constant 0 : i32
    return %arg0, %arg1 : i32, i32
  }
  func.func @transform_2(%arg0: i32, %arg1: i32) -> (i32, i32) {
    %c0_i32 = arith.constant 0 : i32
    return %arg0, %arg1 : i32, i32
  }
  func.func @transform_3(%arg0: i32, %arg1: i32) -> (i32, i32) {
    %c0_i32 = arith.constant 0 : i32
    return %arg0, %arg1 : i32, i32
  }
}

</mosaic_0001>

<llo_original>
// kernel: _lambda_.9
$region0: #{_lambda_.9}
  #allocation0 [shape = 'u32[]', space=smem, size = 0x4, offset = 0x4, fixed_abs, tag = 'smem constant byte address 0x4 - core index']
  #allocation1 [shape = 'u32[144,128]{1,0:T(1,128)}', space=vmem, size = 0x12000, scoped, tag = 'internal scratch']
  #allocation2 [shape = 'f32[16,128]{1,0:T(8,128)}', space=vmem, size = 0x2000, scoped, tag = 'scratch operand']
  %s0 = inlined_call_operand.vmem [shape: bf16[16,128], index: 0, kind: input, shape index: {}]
  %s1 = inlined_call_operand.vmem [shape: bf16[128,128], index: 1, kind: input, shape index: {}]
  %s2 = inlined_call_operand.vmem [shape: f32[16,1], index: 2, kind: input, shape index: {}]
  %s3 = inlined_call_operand.vmem [shape: f32[16,128], index: 3, kind: output, shape index: {}]
  %s4 = sld [smem:[#allocation0]]
  $region30: #{_lambda_.9} parent=0
    _
  %s6 = ssub.s32 1, %s4
  %s7 = scalar_select 0, %s6, %s4
  // Predicated region
  $region2: #{_lambda_.9} parent=0 // pred_check
    _
  $region3: #{_lambda_.9} parent=0 // pred_check_branch
    %9 = sbr.rel (0) target = $region5
  $region4: #{_lambda_.9} parent=0 // pred_region
    _
  $region5: #{_lambda_.9} parent=0 // pred_fallthru
    _
  // Predicated region
  $region6: #{_lambda_.9} parent=0 // pred_check
    _
  $region7: #{_lambda_.9} parent=0 // pred_check_branch
    %11 = sbr.rel (0) target = $region9
  $region8: #{_lambda_.9} parent=0 // pred_region
    _
  $region9: #{_lambda_.9} parent=0 // pred_fallthru
    _
  // Predicated region
  $region10: #{_lambda_.9} parent=0 // pred_check
    _
  $region11: #{_lambda_.9} parent=0 // pred_check_branch
    %13 = sbr.rel (0) target = $region13
  $region12: #{_lambda_.9} parent=0 // pred_region
    _
  $region13: #{_lambda_.9} parent=0 // pred_fallthru
    _
  %p15 = scmp.eq.s32.totalorder 0, 0
  // Predicated region
  $region14: #{_lambda_.9} parent=0 // pred_check
    %p16 = pneg %p15
  $region15: #{_lambda_.9} parent=0 // pred_check_branch
    %18 = sbr.rel (%p16) target = $region17
  $region16: #{_lambda_.9} parent=0 // pred_region
    %19 = vst [vmem:[#allocation2] sm:$0xff] 0.0
    %20 = vst [vmem:[#allocation2 + $0x8] sm:$0xff] 0.0
  $region17: #{_lambda_.9} parent=0 // pred_fallthru
    _
  %v21 = vld [vmem:[#allocation2] sm:$0xff]
  %v22 = vld [vmem:[#allocation2 + $0x8] sm:$0xff]
  %v23 = vld [vmem:[%s0] sm:$0xf]
  %v24 = vld [vmem:[%s0 + $0x4] sm:$0xf]
  %v25 = vld [vmem:[%s1] sm:$0xf]
  %v26 = vld [vmem:[%s1 + $0x4] sm:$0xf]
  %v27 = vld [vmem:[%s1 + $0x8] sm:$0xf]
  %v28 = vld [vmem:[%s1 + $0xc] sm:$0xf]
  %v29 = vld [vmem:[%s1 + $0x10] sm:$0xf]
  %v30 = vld [vmem:[%s1 + $0x14] sm:$0xf]
  %v31 = vld [vmem:[%s1 + $0x18] sm:$0xf]
  %v32 = vld [vmem:[%s1 + $0x1c] sm:$0xf]
  %v33 = vld [vmem:[%s1 + $0x20] sm:$0xf]
  %v34 = vld [vmem:[%s1 + $0x24] sm:$0xf]
  %v35 = vld [vmem:[%s1 + $0x28] sm:$0xf]
  %v36 = vld [vmem:[%s1 + $0x2c] sm:$0xf]
  %v37 = vld [vmem:[%s1 + $0x30] sm:$0xf]
  %v38 = vld [vmem:[%s1 + $0x34] sm:$0xf]
  %v39 = vld [vmem:[%s1 + $0x38] sm:$0xf]
  %v40 = vld [vmem:[%s1 + $0x3c] sm:$0xf]
  %v43 = vunpack.c.l.b16 %v23
  %v44 = vunpack.c.l.b16 %v24
  %v45 = vpack.c.b16 %v44, %v43
  %v63 = vunpack.c.l.b16 %v25
  %v64 = vunpack.c.l.b16 %v26
  %v65 = vunpack.c.l.b16 %v27
  %v66 = vunpack.c.l.b16 %v28
  %v67 = vunpack.c.l.b16 %v29
  %v68 = vunpack.c.l.b16 %v30
  %v69 = vunpack.c.l.b16 %v31
  %v70 = vunpack.c.l.b16 %v32
  %v71 = vunpack.c.l.b16 %v33
  %v72 = vunpack.c.l.b16 %v34
  %v73 = vunpack.c.l.b16 %v35
  %v74 = vunpack.c.l.b16 %v36
  %v75 = vunpack.c.l.b16 %v37
  %v76 = vunpack.c.l.b16 %v38
  %v77 = vunpack.c.l.b16 %v39
  %v78 = vunpack.c.l.b16 %v40
  %v79 = vpack.c.b16 %v64, %v63
  %v80 = vpack.c.b16 %v66, %v65
  %v81 = vpack.c.b16 %v68, %v67
  %v82 = vpack.c.b16 %v70, %v69
  %v83 = vpack.c.b16 %v72, %v71
  %v84 = vpack.c.b16 %v74, %v73
  %v85 = vpack.c.b16 %v76, %v75
  %v86 = vpack.c.b16 %v78, %v77
  %95 = vmatprep.subr.bf16.mxu0 0
  %96 = vmatpush1.bf16.msra.mxu0 %v79
  %97 = vmatprep.subr.bf16.mxu0 0
  %98 = vmatpush1.bf16.msra.mxu0 %v80
  %99 = vmatprep.subr.bf16.mxu0 0
  %100 = vmatpush1.bf16.msra.mxu0 %v81
  %101 = vmatprep.subr.bf16.mxu0 0
  %102 = vmatpush1.bf16.msra.mxu0 %v82
  %103 = vmatprep.subr.bf16.mxu0 0
  %104 = vmatpush1.bf16.msra.mxu0 %v83
  %105 = vmatprep.subr.bf16.mxu0 0
  %106 = vmatpush1.bf16.msra.mxu0 %v84
  %107 = vmatprep.subr.bf16.mxu0 0
  %108 = vmatpush1.bf16.msra.mxu0 %v85
  %109 = vmatprep.subr.bf16.mxu0 0
  %110 = vmatpush1.bf16.msra.mxu0 %v86
  %111 = vmatprep.subr.bf16.mxu0 0
  %112 = vmatpush1.bf16.msra.mxu0 0
  %113 = vmatprep.subr.bf16.mxu0 0
  %114 = vmatpush1.bf16.msra.mxu0 0
  %115 = vmatprep.subr.bf16.mxu0 0
  %116 = vmatpush1.bf16.msra.mxu0 0
  %117 = vmatprep.subr.bf16.mxu0 0
  %118 = vmatpush1.bf16.msra.mxu0 0
  %119 = vmatprep.subr.bf16.mxu0 0
  %120 = vmatpush1.bf16.msra.mxu0 0
  %121 = vmatprep.subr.bf16.mxu0 0
  %122 = vmatpush1.bf16.msra.mxu0 0
  %123 = vmatprep.subr.bf16.mxu0 0
  %124 = vmatpush1.bf16.msra.mxu0 0
  %125 = vmatprep.subr.bf16.mxu0 0
  %126 = vmatpush1.bf16.msra.mxu0 0
  %127 = vmatprep.mubr.bf16.mxu0 0
  %128 = vmatmul.mubr.bf16.gmra.mrb[0].mxu0 %v45
  %v129 = vpop.f32.mrb[0].mxu0
  %v130 = vadd.f32 0.0, %v129
  %v131 = vpop.f32.mrb[0].mxu0
  %v132 = vpop.f32.mrb[0].mxu0
  %v133 = vadd.f32 0.0, %v132
  %v134 = vpop.f32.mrb[0].mxu0
  %135 = vdwg.mxu0
  %v136 = vadd.f32 %v21, %v130
  %v137 = vadd.f32 %v22, %v133
  %138 = vst [vmem:[#allocation2] sm:$0xff] %v136
  %139 = vst [vmem:[#allocation2 + $0x8] sm:$0xff] %v137
  // Predicated region
  $region18: #{_lambda_.9} parent=0 // pred_check
    %p140 = pneg %p15
  $region19: #{_lambda_.9} parent=0 // pred_check_branch
    %142 = sbr.rel (%p140) target = $region21
  $region20: #{_lambda_.9} parent=0 // pred_region
    %v143 = vld [vmem:[#allocation2] sm:$0xff]
    %v144 = vld [vmem:[#allocation2 + $0x8] sm:$0xff]
    %v145 = vld [vmem:[%s2] sm:$0xff]
    %v146 = vld [vmem:[%s2 + $0x8] sm:$0xff]
    %148 = vset.pattern.permute.xlu0 0
    %149 = vperm.xlu0 %148, %v145
    %v150 = vpop.permute.xlu0 %149
    %153 = vset.pattern.permute.xlu0 0
    %154 = vperm.xlu0 %153, %v146
    %v155 = vpop.permute.xlu0 %154
    %v157 = vadd.f32 %v143, %v150
    %v158 = vadd.f32 %v144, %v155
    %159 = vst [vmem:[%s3] sm:$0xff] %v157
    %160 = vst [vmem:[%s3 + $0x8] sm:$0xff] %v158
  $region21: #{_lambda_.9} parent=0 // pred_fallthru
    _
  // Predicated region
  $region22: #{_lambda_.9} parent=0 // pred_check
    _
  $region23: #{_lambda_.9} parent=0 // pred_check_branch
    %162 = sbr.rel (0) target = $region25
  $region24: #{_lambda_.9} parent=0 // pred_region
    _
  $region25: #{_lambda_.9} parent=0 // pred_fallthru
    _
  // Predicated region
  $region26: #{_lambda_.9} parent=0 // pred_check
    _
  $region27: #{_lambda_.9} parent=0 // pred_check_branch
    %164 = sbr.rel (0) target = $region29
  $region28: #{_lambda_.9} parent=0 // pred_region
    _
  $region29: #{_lambda_.9} parent=0 // pred_fallthru
    _

// kernel: _lambda_.10
$region0: #{_lambda_.10}
  #allocation0 [shape = 'u32[]', space=smem, size = 0x4, offset = 0x4, fixed_abs, tag = 'smem constant byte address 0x4 - core index']
  #allocation1 [shape = 'u32[144,128]{1,0:T(1,128)}', space=vmem, size = 0x12000, scoped, tag = 'internal scratch']
  %s0 = inlined_call_operand.vmem [shape: f32[2,4], index: 0, kind: input, shape index: {}]
  %s1 = inlined_call_operand.vmem [shape: f32[2,4,3], index: 1, kind: input, shape index: {}]
  %s2 = inlined_call_operand.vmem [shape: f32[2,2,64,2], index: 2, kind: input, shape index: {}]
  %s3 = inlined_call_operand.vmem [shape: f32[2,2,64,2], index: 3, kind: input, shape index: {}]
  %s4 = inlined_call_operand.vmem [shape: f32[2,2,4,64], index: 4, kind: input, shape index: {}]
  %s5 = inlined_call_operand.vmem [shape: f32[2,64,64], index: 5, kind: input, shape index: {}]
  %s6 = inlined_call_operand.vmem [shape: f32[2,64,64], index: 6, kind: input, shape index: {}]
  %s7 = inlined_call_operand.vmem [shape: f32[4,64,64], index: 7, kind: input, shape index: {}]
  %s8 = inlined_call_operand.vmem [shape: f32[2,2,4,64], index: 8, kind: output, shape index: {}]
  %s9 = sld [smem:[#allocation0]]
  $region69: #{_lambda_.10} parent=0
    _
  %s11 = ssub.s32 1, %s9
  %s12 = scalar_select 0, %s11, %s9
  $region1: #{_lambda_.10} parent=0
    #allocation2 [shape = 'u8[1024]{0}', space=smem, size = 0x400, scoped, tag = 'input window, operand 0, single buffered']
    #allocation3 [shape = 's32[2]{0}', space=sflag, size = 0x8, scoped, tag = 'scoped memory for _lambda_.10']
    %13 = vsyncpa [#allocation3], 0
    loop: start=0, step=1, limit=6
    $region2: #{_lambda_.10} parent=1 // loop_pre_header
      _
    $region3: #{_lambda_.10} parent=1 // loop_header
      %s15 = sphi 0, %s19
      %p16 = scmp.ge.s32.totalorder %s15, 6
      %s22 = sphi 0, %s34
      %s23 = sphi 0, %s30
      %s24 = sphi 0, %s22
      %s25 = sphi 0, %s23
      %s26 = sphi 0, %s24
      %s27 = sphi 0, %s25
      %s35 = sphi 0, %s35
      %s37 = sphi 0, %s35
      %s38 = sphi 0, %s37
      %s52 = sphi 0, %s38
      %s58 = sphi 0, %s60
      %s61 = sphi 0, %s58
      %s62 = sphi 0, %s61
      %s78 = sphi 0, %s62
      %s86 = sphi 0, %s88
      %s89 = sphi 0, %s86
      %s90 = sphi 0, %s89
      %s106 = sphi 0, %s90
      %s114 = sphi 0, %s116
      %s117 = sphi 0, %s114
      %s118 = sphi 0, %s117
      %s134 = sphi 0, %s118
      %s142 = sphi 0, %s144
      %s145 = sphi 0, %s142
      %s146 = sphi 0, %s145
      %s162 = sphi 0, %s146
      %s166 = sphi 0, %s166
      %s168 = sphi 0, %s166
      %s169 = sphi 0, %s168
      %s183 = sphi 0, %s169
      %s187 = sphi 0, %s187
      %s189 = sphi 0, %s187
      %s190 = sphi 0, %s189
      %s204 = sphi 0, %s190
      %s208 = sphi 0, %s208
      %s210 = sphi 0, %s208
      %s211 = sphi 0, %s210
      %s225 = sphi 0, %s211
      %s233 = sphi 0, %s235
      %s236 = sphi 0, %s233
      %s237 = sphi 0, %s236
      %s253 = sphi 0, %s237
    $region4: #{_lambda_.10} parent=1 // loop_header_branch
      %18 = sbr.rel (%p16) target = $region8
    $region5: #{_lambda_.10} parent=1 // loop_body
      %s20 = ssub.s32 %s15, 1
      %s21 = ssub.s32 %s15, 2
      %s28 = sadd.s32 1, %s23
      %p29 = scmp.ge.s32.totalorder %s28, 2
      %s30 = scalar_select %p29, 0, %s28
      %s31 = sadd.s32 1, %s22
      %s32 = scalar_select %p29, %s31, %s22
      %p33 = scmp.ge.s32.totalorder %s32, 2
      %s34 = scalar_select %p33, 0, %s32
      %s36 = sadd.s32 %s35, 1
      %p39 = scmp.eq.s32.totalorder %s15, 3
      %p40 = scmp.ne.s32.totalorder %s35, %s37
      %p41 = scmp.eq.s32.totalorder %s15, 0
      %p42 = por %p40, %p41
      %p43 = scmp.ne.s32.totalorder %s35, %s37
      %p44 = scmp.eq.s32.totalorder %s20, 3
      %p45 = por %p43, %p44
      %p46 = scmp.ne.s32.totalorder %s37, %s38
      %p47 = scmp.eq.s32.totalorder %s20, 0
      %p48 = por %p46, %p47
      %p49 = scmp.ne.s32.totalorder %s37, %s38
      %p50 = scmp.eq.s32.totalorder %s21, 3
      %p51 = por %p49, %p50
      %p53 = scmp.ne.s32.totalorder %s38, %s52
      %p54 = scmp.eq.s32.totalorder %s21, 0
      %p55 = por %p53, %p54
      %s56 = ssub.s32 %s23, %s30
      %p57 = scmp.eq.s32.totalorder %s56, 0
      %s59 = sadd.s32 %s58, 1
      %s60 = scalar_select %p57, %s58, %s59
      %p63 = pneg %p57
      %p64 = scmp.eq.s32.totalorder %s15, 3
      %p65 = por %p63, %p64
      %p66 = scmp.ne.s32.totalorder %s58, %s61
      %p67 = scmp.eq.s32.totalorder %s15, 0
      %p68 = por %p66, %p67
      %p69 = scmp.ne.s32.totalorder %s58, %s61
      %p70 = scmp.eq.s32.totalorder %s20, 3
      %p71 = por %p69, %p70
      %p72 = scmp.ne.s32.totalorder %s61, %s62
      %p73 = scmp.eq.s32.totalorder %s20, 0
      %p74 = por %p72, %p73
      %p75 = scmp.ne.s32.totalorder %s61, %s62
      %p76 = scmp.eq.s32.totalorder %s21, 3
      %p77 = por %p75, %p76
      %p79 = scmp.ne.s32.totalorder %s62, %s78
      %p80 = scmp.eq.s32.totalorder %s21, 0
      %p81 = por %p79, %p80
      %s82 = ssub.s32 %s22, %s34
      %s83 = ssub.s32 %s23, %s30
      %s84 = sor.u32 %s82, %s83
      %p85 = scmp.eq.s32.totalorder %s84, 0
      %s87 = sadd.s32 %s86, 1
      %s88 = scalar_select %p85, %s86, %s87
      %p91 = pneg %p85
      %p92 = scmp.eq.s32.totalorder %s15, 3
      %p93 = por %p91, %p92
      %p94 = scmp.ne.s32.totalorder %s86, %s89
      %p95 = scmp.eq.s32.totalorder %s15, 0
      %p96 = por %p94, %p95
      %p97 = scmp.ne.s32.totalorder %s86, %s89
      %p98 = scmp.eq.s32.totalorder %s20, 3
      %p99 = por %p97, %p98
      %p100 = scmp.ne.s32.totalorder %s89, %s90
      %p101 = scmp.eq.s32.totalorder %s20, 0
      %p102 = por %p100, %p101
      %p103 = scmp.ne.s32.totalorder %s89, %s90
      %p104 = scmp.eq.s32.totalorder %s21, 3
      %p105 = por %p103, %p104
      %p107 = scmp.ne.s32.totalorder %s90, %s106
      %p108 = scmp.eq.s32.totalorder %s21, 0
      %p109 = por %p107, %p108
      %s110 = ssub.s32 %s22, %s34
      %s111 = ssub.s32 %s23, %s30
      %s112 = sor.u32 %s110, %s111
      %p113 = scmp.eq.s32.totalorder %s112, 0
      %s115 = sadd.s32 %s114, 1
      %s116 = scalar_select %p113, %s114, %s115
      %p119 = pneg %p113
      %p120 = scmp.eq.s32.totalorder %s15, 3
      %p121 = por %p119, %p120
      %p122 = scmp.ne.s32.totalorder %s114, %s117
      %p123 = scmp.eq.s32.totalorder %s15, 0
      %p124 = por %p122, %p123
      %p125 = scmp.ne.s32.totalorder %s114, %s117
      %p126 = scmp.eq.s32.totalorder %s20, 3
      %p127 = por %p125, %p126
      %p128 = scmp.ne.s32.totalorder %s117, %s118
      %p129 = scmp.eq.s32.totalorder %s20, 0
      %p130 = por %p128, %p129
      %p131 = scmp.ne.s32.totalorder %s117, %s118
      %p132 = scmp.eq.s32.totalorder %s21, 3
      %p133 = por %p131, %p132
      %p135 = scmp.ne.s32.totalorder %s118, %s134
      %p136 = scmp.eq.s32.totalorder %s21, 0
      %p137 = por %p135, %p136
      %s138 = ssub.s32 %s22, %s34
      %s139 = ssub.s32 %s23, %s30
      %s140 = sor.u32 %s138, %s139
      %p141 = scmp.eq.s32.totalorder %s140, 0
      %s143 = sadd.s32 %s142, 1
      %s144 = scalar_select %p141, %s142, %s143
      %p147 = pneg %p141
      %p148 = scmp.eq.s32.totalorder %s15, 3
      %p149 = por %p147, %p148
      %p150 = scmp.ne.s32.totalorder %s142, %s145
      %p151 = scmp.eq.s32.totalorder %s15, 0
      %p152 = por %p150, %p151
      %p153 = scmp.ne.s32.totalorder %s142, %s145
      %p154 = scmp.eq.s32.totalorder %s20, 3
      %p155 = por %p153, %p154
      %p156 = scmp.ne.s32.totalorder %s145, %s146
      %p157 = scmp.eq.s32.totalorder %s20, 0
      %p158 = por %p156, %p157
      %p159 = scmp.ne.s32.totalorder %s145, %s146
      %p160 = scmp.eq.s32.totalorder %s21, 3
      %p161 = por %p159, %p160
      %p163 = scmp.ne.s32.totalorder %s146, %s162
      %p164 = scmp.eq.s32.totalorder %s21, 0
      %p165 = por %p163, %p164
      %s167 = sadd.s32 %s166, 1
      %p170 = scmp.eq.s32.totalorder %s15, 3
      %p171 = scmp.ne.s32.totalorder %s166, %s168
      %p172 = scmp.eq.s32.totalorder %s15, 0
      %p173 = por %p171, %p172
      %p174 = scmp.ne.s32.totalorder %s166, %s168
      %p175 = scmp.eq.s32.totalorder %s20, 3
      %p176 = por %p174, %p175
      %p177 = scmp.ne.s32.totalorder %s168, %s169
      %p178 = scmp.eq.s32.totalorder %s20, 0
      %p179 = por %p177, %p178
      %p180 = scmp.ne.s32.totalorder %s168, %s169
      %p181 = scmp.eq.s32.totalorder %s21, 3
      %p182 = por %p180, %p181
      %p184 = scmp.ne.s32.totalorder %s169, %s183
      %p185 = scmp.eq.s32.totalorder %s21, 0
      %p186 = por %p184, %p185
      %s188 = sadd.s32 %s187, 1
      %p191 = scmp.eq.s32.totalorder %s15, 3
      %p192 = scmp.ne.s32.totalorder %s187, %s189
      %p193 = scmp.eq.s32.totalorder %s15, 0
      %p194 = por %p192, %p193
      %p195 = scmp.ne.s32.totalorder %s187, %s189
      %p196 = scmp.eq.s32.totalorder %s20, 3
      %p197 = por %p195, %p196
      %p198 = scmp.ne.s32.totalorder %s189, %s190
      %p199 = scmp.eq.s32.totalorder %s20, 0
      %p200 = por %p198, %p199
      %p201 = scmp.ne.s32.totalorder %s189, %s190
      %p202 = scmp.eq.s32.totalorder %s21, 3
      %p203 = por %p201, %p202
      %p205 = scmp.ne.s32.totalorder %s190, %s204
      %p206 = scmp.eq.s32.totalorder %s21, 0
      %p207 = por %p205, %p206
      %s209 = sadd.s32 %s208, 1
      %p212 = scmp.eq.s32.totalorder %s15, 3
      %p213 = scmp.ne.s32.totalorder %s208, %s210
      %p214 = scmp.eq.s32.totalorder %s15, 0
      %p215 = por %p213, %p214
      %p216 = scmp.ne.s32.totalorder %s208, %s210
      %p217 = scmp.eq.s32.totalorder %s20, 3
      %p218 = por %p216, %p217
      %p219 = scmp.ne.s32.totalorder %s210, %s211
      %p220 = scmp.eq.s32.totalorder %s20, 0
      %p221 = por %p219, %p220
      %p222 = scmp.ne.s32.totalorder %s210, %s211
      %p223 = scmp.eq.s32.totalorder %s21, 3
      %p224 = por %p222, %p223
      %p226 = scmp.ne.s32.totalorder %s211, %s225
      %p227 = scmp.eq.s32.totalorder %s21, 0
      %p228 = por %p226, %p227
      %s229 = ssub.s32 %s22, %s34
      %s230 = ssub.s32 %s23, %s30
      %s231 = sor.u32 %s229, %s230
      %p232 = scmp.eq.s32.totalorder %s231, 0
      %s234 = sadd.s32 %s233, 1
      %s235 = scalar_select %p232, %s233, %s234
      %p238 = pneg %p232
      %p239 = scmp.eq.s32.totalorder %s15, 3
      %p240 = por %p238, %p239
      %p241 = scmp.ne.s32.totalorder %s233, %s236
      %p242 = scmp.eq.s32.totalorder %s15, 0
      %p243 = por %p241, %p242
      %p244 = scmp.ne.s32.totalorder %s233, %s236
      %p245 = scmp.eq.s32.totalorder %s20, 3
      %p246 = por %p244, %p245
      %p247 = scmp.ne.s32.totalorder %s236, %s237
      %p248 = scmp.eq.s32.totalorder %s20, 0
      %p249 = por %p247, %p248
      %p250 = scmp.ne.s32.totalorder %s236, %s237
      %p251 = scmp.eq.s32.totalorder %s21, 3
      %p252 = por %p250, %p251
      %p254 = scmp.ne.s32.totalorder %s237, %s253
      %p255 = scmp.eq.s32.totalorder %s21, 0
      %p256 = por %p254, %p255
      %p257 = scmp.le.s32.totalorder 1, %s15
      %p258 = scmp.lt.s32.totalorder %s15, 5
      %p259 = pnand %p257, %p258
      %p260 = pneg %p259
      // Predicated region
      $region9: #{_lambda_.10} parent=5 // pred_check
        _
      $region10: #{_lambda_.10} parent=5 // pred_check_branch
        %262 = sbr.rel (%p259) target = $region12
      $region11: #{_lambda_.10} parent=5 // pred_region
        %s263 = ssub.s32 %s15, 1
        // Predicated region
        $region13: #{_lambda_.10} parent=11 // pred_check
          %p264 = pneg %p48
        $region14: #{_lambda_.10} parent=11 // pred_check_branch
          %266 = sbr.rel (%p264) target = $region16
        $region15: #{_lambda_.10} parent=11 // pred_region
          %s268 = ssub.s32 32, 32
          %269 = vsyncadd [#allocation3], %s268
          %s271 = sshll.u32 %s0, 4
          %s272 = int_to_ptr.vmem [resolvable:$true] %s271
          %274 = dma.vmem_to_smem %s272, 32, [#allocation2], [#allocation3]
        $region16: #{_lambda_.10} parent=11 // pred_fallthru
          _
        // Predicated region
        $region17: #{_lambda_.10} parent=11 // pred_check
          %p275 = pneg %p179
        $region18: #{_lambda_.10} parent=11 // pred_check_branch
          %277 = sbr.rel (%p275) target = $region20
        $region19: #{_lambda_.10} parent=11 // pred_region
          _
        $region20: #{_lambda_.10} parent=11 // pred_fallthru
          _
        // Predicated region
        $region21: #{_lambda_.10} parent=11 // pred_check
          %p278 = pneg %p200
        $region22: #{_lambda_.10} parent=11 // pred_check_branch
          %280 = sbr.rel (%p278) target = $region24
        $region23: #{_lambda_.10} parent=11 // pred_region
          _
        $region24: #{_lambda_.10} parent=11 // pred_fallthru
          _
        // Predicated region
        $region25: #{_lambda_.10} parent=11 // pred_check
          %p281 = pneg %p221
        $region26: #{_lambda_.10} parent=11 // pred_check_branch
          %283 = sbr.rel (%p281) target = $region28
        $region27: #{_lambda_.10} parent=11 // pred_region
          _
        $region28: #{_lambda_.10} parent=11 // pred_fallthru
          _
      $region12: #{_lambda_.10} parent=5 // pred_fallthru
        _
      %p284 = scmp.lt.s32.totalorder %s15, 4
      // Predicated region
      $region29: #{_lambda_.10} parent=5 // pred_check
        %p285 = pneg %p284
      $region30: #{_lambda_.10} parent=5 // pred_check_branch
        %287 = sbr.rel (%p285) target = $region32
      $region31: #{_lambda_.10} parent=5 // pred_region
        // Predicated region
        $region33: #{_lambda_.10} parent=31 // pred_check
          %p288 = pneg %p68
        $region34: #{_lambda_.10} parent=31 // pred_check_branch
          %290 = sbr.rel (%p288) target = $region36
        $region35: #{_lambda_.10} parent=31 // pred_region
          %p291 = scmp.lt.s32.totalorder %s23, 1
          %s292 = scalar_select %p291, %s23, 1
          %s293 = smul.addr %s292, 4
          %s294 = scalar_lea.vmem %s1, %s293
        $region36: #{_lambda_.10} parent=31 // pred_fallthru
          _
        // Predicated region
        $region37: #{_lambda_.10} parent=31 // pred_check
          %p295 = pneg %p96
        $region38: #{_lambda_.10} parent=31 // pred_check_branch
          %297 = sbr.rel (%p295) target = $region40
        $region39: #{_lambda_.10} parent=31 // pred_region
          %p298 = scmp.lt.s32.totalorder %s22, 1
          %s299 = scalar_select %p298, %s22, 1
          %p300 = scmp.lt.s32.totalorder %s23, 1
          %s301 = scalar_select %p300, %s23, 1
          %s302 = smul.addr %s301, 8
          %s303 = smul.addr %s299, 16
          %s304 = sadd.s32 %s302, %s303
          %s305 = smul.addr %s304, 8
          %s306 = scalar_lea.vmem %s2, %s305
        $region40: #{_lambda_.10} parent=31 // pred_fallthru
          _
        // Predicated region
        $region41: #{_lambda_.10} parent=31 // pred_check
          %p307 = pneg %p124
        $region42: #{_lambda_.10} parent=31 // pred_check_branch
          %309 = sbr.rel (%p307) target = $region44
        $region43: #{_lambda_.10} parent=31 // pred_region
          %p310 = scmp.lt.s32.totalorder %s22, 1
          %s311 = scalar_select %p310, %s22, 1
          %p312 = scmp.lt.s32.totalorder %s23, 1
          %s313 = scalar_select %p312, %s23, 1
          %s314 = smul.addr %s313, 8
          %s315 = smul.addr %s311, 16
          %s316 = sadd.s32 %s314, %s315
          %s317 = smul.addr %s316, 8
          %s318 = scalar_lea.vmem %s3, %s317
        $region44: #{_lambda_.10} parent=31 // pred_fallthru
          _
        // Predicated region
        $region45: #{_lambda_.10} parent=31 // pred_check
          %p319 = pneg %p152
        $region46: #{_lambda_.10} parent=31 // pred_check_branch
          %321 = sbr.rel (%p319) target = $region48
        $region47: #{_lambda_.10} parent=31 // pred_region
          %p322 = scmp.lt.s32.totalorder %s22, 1
          %s323 = scalar_select %p322, %s22, 1
          %p324 = scmp.lt.s32.totalorder %s23, 1
          %s325 = scalar_select %p324, %s23, 1
          %s326 = smul.addr %s323, 2
          %s327 = sadd.s32 %s325, %s326
          %s328 = smul.addr %s327, 4
          %s329 = scalar_lea.vmem %s4, %s328
        $region48: #{_lambda_.10} parent=31 // pred_fallthru
          _
      $region32: #{_lambda_.10} parent=5 // pred_fallthru
        _
      %p330 = scmp.le.s32.totalorder 1, %s15
      %p331 = scmp.lt.s32.totalorder %s15, 5
      %p332 = pnand %p330, %p331
      %p333 = pneg %p332
      // Predicated region
      $region49: #{_lambda_.10} parent=5 // pred_check
        _
      $region50: #{_lambda_.10} parent=5 // pred_check_branch
        %335 = sbr.rel (%p332) target = $region52
      $region51: #{_lambda_.10} parent=5 // pred_region
        %s336 = ssub.s32 %s15, 1
        // Predicated region
        $region53: #{_lambda_.10} parent=51 // pred_check
          %p337 = pneg %p48
        $region54: #{_lambda_.10} parent=51 // pred_check_branch
          %339 = sbr.rel (%p337) target = $region56
        $region55: #{_lambda_.10} parent=51 // pred_region
          %340 = dma.done [#allocation3], 32
        $region56: #{_lambda_.10} parent=51 // pred_fallthru
          _
        %341 = sfence
        %p342 = pneg %p48
        %p343 = pneg %p45
        %p344 = scmp.lt.s32.totalorder %s25, 1
        %s345 = scalar_select %p344, %s25, 1
        %s346 = smul.addr %s345, 4
        %s347 = scalar_lea.vmem %s1, %s346
        %p348 = pneg %p74
        %p349 = pneg %p71
        %p350 = scmp.lt.s32.totalorder %s24, 1
        %s351 = scalar_select %p350, %s24, 1
        %p352 = scmp.lt.s32.totalorder %s25, 1
        %s353 = scalar_select %p352, %s25, 1
        %s354 = smul.addr %s353, 8
        %s355 = smul.addr %s351, 16
        %s356 = sadd.s32 %s354, %s355
        %s357 = smul.addr %s356, 8
        %s358 = scalar_lea.vmem %s2, %s357
        %p359 = pneg %p102
        %p360 = pneg %p99
        %p361 = scmp.lt.s32.totalorder %s24, 1
        %s362 = scalar_select %p361, %s24, 1
        %p363 = scmp.lt.s32.totalorder %s25, 1
        %s364 = scalar_select %p363, %s25, 1
        %s365 = smul.addr %s364, 8
        %s366 = smul.addr %s362, 16
        %s367 = sadd.s32 %s365, %s366
        %s368 = smul.addr %s367, 8
        %s369 = scalar_lea.vmem %s3, %s368
        %p370 = pneg %p130
        %p371 = pneg %p127
        %p372 = scmp.lt.s32.totalorder %s24, 1
        %s373 = scalar_select %p372, %s24, 1
        %p374 = scmp.lt.s32.totalorder %s25, 1
        %s375 = scalar_select %p374, %s25, 1
        %s376 = smul.addr %s373, 2
        %s377 = sadd.s32 %s375, %s376
        %s378 = smul.addr %s377, 4
        %s379 = scalar_lea.vmem %s4, %s378
        %p380 = pneg %p158
        %p381 = pneg %p155
        %p382 = pneg %p179
        %p383 = pneg %p176
        %p384 = pneg %p200
        %p385 = pneg %p197
        %p386 = pneg %p221
        %p387 = pneg %p218
        %p388 = pneg %p249
        %p389 = pneg %p246
        %p390 = scmp.lt.s32.totalorder %s24, 1
        %s391 = scalar_select %p390, %s24, 1
        %p392 = scmp.lt.s32.totalorder %s25, 1
        %s393 = scalar_select %p392, %s25, 1
        %s394 = smul.addr %s391, 2
        %s395 = sadd.s32 %s393, %s394
        %s396 = smul.addr %s395, 4
        %s397 = scalar_lea.vmem %s8, %s396
        %p398 = scmp.lt.s32.totalorder %s25, 1
        %s399 = scalar_select %p398, %s25, 1
        %s400 = smul.addr %s399, 4
        %s401 = scalar_lea.vmem %s1, %s400
        %p402 = scmp.lt.s32.totalorder %s24, 1
        %s403 = scalar_select %p402, %s24, 1
        %p404 = scmp.lt.s32.totalorder %s25, 1
        %s405 = scalar_select %p404, %s25, 1
        %s406 = smul.addr %s405, 8
        %s407 = smul.addr %s403, 16
        %s408 = sadd.s32 %s406, %s407
        %s409 = smul.addr %s408, 8
        %s410 = scalar_lea.vmem %s2, %s409
        %p411 = scmp.lt.s32.totalorder %s24, 1
        %s412 = scalar_select %p411, %s24, 1
        %p413 = scmp.lt.s32.totalorder %s25, 1
        %s414 = scalar_select %p413, %s25, 1
        %s415 = smul.addr %s414, 8
        %s416 = smul.addr %s412, 16
        %s417 = sadd.s32 %s415, %s416
        %s418 = smul.addr %s417, 8
        %s419 = scalar_lea.vmem %s3, %s418
        %p420 = scmp.lt.s32.totalorder %s24, 1
        %s421 = scalar_select %p420, %s24, 1
        %p422 = scmp.lt.s32.totalorder %s25, 1
        %s423 = scalar_select %p422, %s25, 1
        %s424 = smul.addr %s421, 2
        %s425 = sadd.s32 %s423, %s424
        %s426 = smul.addr %s425, 4
        %s427 = scalar_lea.vmem %s4, %s426
        %p428 = scmp.lt.s32.totalorder %s24, 1
        %s429 = scalar_select %p428, %s24, 1
        %p430 = scmp.lt.s32.totalorder %s25, 1
        %s431 = scalar_select %p430, %s25, 1
        %s432 = smul.addr %s429, 2
        %s433 = sadd.s32 %s431, %s432
        %s434 = smul.addr %s433, 4
        %s435 = scalar_lea.vmem %s8, %s434
        %v436 = vld [vmem:[%s410] sm:$0xff]
        %v437 = vld [vmem:[%s410 + $0x8] sm:$0xff]
        %v438 = vld [vmem:[%s410 + $0x10] sm:$0xff]
        %v439 = vld [vmem:[%s410 + $0x18] sm:$0xff]
        %v440 = vld [vmem:[%s410 + $0x20] sm:$0xff]
        %v441 = vld [vmem:[%s410 + $0x28] sm:$0xff]
        %v442 = vld [vmem:[%s410 + $0x30] sm:$0xff]
        %v443 = vld [vmem:[%s410 + $0x38] sm:$0xff]
        %v444 = vld [vmem:[%s419] sm:$0xff]
        %v445 = vld [vmem:[%s419 + $0x8] sm:$0xff]
        %v446 = vld [vmem:[%s419 + $0x10] sm:$0xff]
        %v447 = vld [vmem:[%s419 + $0x18] sm:$0xff]
        %v448 = vld [vmem:[%s419 + $0x20] sm:$0xff]
        %v449 = vld [vmem:[%s419 + $0x28] sm:$0xff]
        %v450 = vld [vmem:[%s419 + $0x30] sm:$0xff]
        %v451 = vld [vmem:[%s419 + $0x38] sm:$0xff]
        %v452 = vld [vmem:[%s427] sm:$0xf]
        %s453 = smul.u32 %s25, 128
        %s454 = sld [smem:[#allocation2 + %s453]]
        %s455 = sadd.s32 %s453, 1
        %s456 = sld [smem:[#allocation2 + %s455]]
        %s457 = sadd.s32 %s453, 2
        %s458 = sld [smem:[#allocation2 + %s457]]
        %s459 = sadd.s32 %s453, 3
        %s460 = sld [smem:[#allocation2 + %s459]]
        %vm461 = vcmask 15360
        %v463 = vsel %vm461, %v436, 0
        %v466 = vsel %vm461, %v437, 0
        %v469 = vsel %vm461, %v438, 0
        %v472 = vsel %vm461, %v439, 0
        %v475 = vsel %vm461, %v440, 0
        %v478 = vsel %vm461, %v441, 0
        %v481 = vsel %vm461, %v442, 0
        %v484 = vsel %vm461, %v443, 0
        %v487 = vsel %vm461, %v444, 0
        %v490 = vsel %vm461, %v445, 0
        %v493 = vsel %vm461, %v446, 0
        %v496 = vsel %vm461, %v447, 0
        %v499 = vsel %vm461, %v448, 0
        %v502 = vsel %vm461, %v449, 0
        %v505 = vsel %vm461, %v450, 0
        %v508 = vsel %vm461, %v451, 0
        %510 = vmatprep.subr.mxu0 0.0
        %511 = vmatpush1.xpose.msra.mxu0 %v487
        %512 = vmatprep.subr.mxu0 0.0
        %513 = vmatpush1.xpose.msra.mxu0 %v490
        %514 = vmatprep.subr.mxu0 0.0
        %515 = vmatpush1.xpose.msra.mxu0 %v493
        %516 = vmatprep.subr.mxu0 0.0
        %517 = vmatpush1.xpose.msra.mxu0 %v496
        %518 = vmatprep.subr.mxu0 0.0
        %519 = vmatpush1.xpose.msra.mxu0 %v499
        %520 = vmatprep.subr.mxu0 0.0
        %521 = vmatpush1.xpose.msra.mxu0 %v502
        %522 = vmatprep.subr.mxu0 0.0
        %523 = vmatpush1.xpose.msra.mxu0 %v505
        %524 = vmatprep.subr.mxu0 0.0
        %525 = vmatpush1.xpose.msra.mxu0 %v508
        %526 = vmatprep.subr.mxu0 0.0
        %527 = vmatpush1.xpose.msra.mxu0 0.0
        %528 = vmatprep.subr.mxu0 0.0
        %529 = vmatpush1.xpose.msra.mxu0 0.0
        %530 = vmatprep.subr.mxu0 0.0
        %531 = vmatpush1.xpose.msra.mxu0 0.0
        %532 = vmatprep.subr.mxu0 0.0
        %533 = vmatpush1.xpose.msra.mxu0 0.0
        %534 = vmatprep.subr.mxu0 0.0
        %535 = vmatpush1.xpose.msra.mxu0 0.0
        %536 = vmatprep.subr.mxu0 0.0
        %537 = vmatpush1.xpose.msra.mxu0 0.0
        %538 = vmatprep.subr.mxu0 0.0
        %539 = vmatpush1.xpose.msra.mxu0 0.0
        %540 = vmatprep.subr.mxu0 0.0
        %541 = vmatpush1.xpose.msra.mxu0 0.0
        %542 = vmatprep.subr.mxu0 0.0
        %543 = vmatpush1.xpose.msra.mxu0 0.0
        %544 = vmatprep.subr.mxu0 0.0
        %545 = vmatpush1.xpose.msra.mxu0 0.0
        %546 = vmatprep.subr.mxu0 0.0
        %547 = vmatpush1.xpose.msra.mxu0 0.0
        %548 = vmatprep.subr.mxu0 0.0
        %549 = vmatpush1.xpose.msra.mxu0 0.0
        %550 = vmatprep.subr.mxu0 0.0
        %551 = vmatpush1.xpose.msra.mxu0 0.0
        %552 = vmatprep.subr.mxu0 0.0
        %553 = vmatpush1.xpose.msra.mxu0 0.0
        %554 = vmatprep.subr.mxu0 0.0
        %555 = vmatpush1.xpose.msra.mxu0 0.0
        %556 = vmatprep.subr.mxu0 0.0
        %557 = vmatpush1.xpose.msra.mxu0 0.0
        %558 = vmatprep.subr.mxu0 0.0
        %559 = vmatpush1.xpose.msra.mxu0 0.0
        %560 = vmatprep.subr.mxu0 0.0
        %561 = vmatpush1.xpose.msra.mxu0 0.0
        %562 = vmatprep.subr.mxu0 0.0
        %563 = vmatpush1.xpose.msra.mxu0 0.0
        %564 = vmatprep.subr.mxu0 0.0
        %565 = vmatpush1.xpose.msra.mxu0 0.0
        %566 = vmatprep.subr.mxu0 0.0
        %567 = vmatpush1.xpose.msra.mxu0 0.0
        %568 = vmatprep.subr.mxu0 0.0
        %569 = vmatpush1.xpose.msra.mxu0 0.0
        %570 = vmatprep.subr.mxu0 0.0
        %571 = vmatpush1.xpose.msra.mxu0 0.0
        %572 = vmatprep.subr.mxu0 0.0
        %573 = vmatpush1.xpose.msra.mxu0 0.0
        %574 = vmatprep.mubr.f32.mxu0 0.0
        %575 = vmatmul.mubr.f32.gmra.mrb[0].mxu0 %v463
        %v576 = vpop.f32.mrb[0].mxu0
        %v577 = vadd.f32 0.0, %v576
        %v578 = vpop.f32.mrb[0].mxu0
        %579 = vmatprep.mubr.f32.mxu0 0.0
        %580 = vmatmul.mubr.f32.gmra.mrb[0].mxu0 %v466
        %v581 = vpop.f32.mrb[0].mxu0
        %v582 = vadd.f32 0.0, %v581
        %v583 = vpop.f32.mrb[0].mxu0
        %584 = vmatprep.mubr.f32.mxu0 0.0
        %585 = vmatmul.mubr.f32.gmra.mrb[0].mxu0 %v469
        %v586 = vpop.f32.mrb[0].mxu0
        %v587 = vadd.f32 0.0, %v586
        %v588 = vpop.f32.mrb[0].mxu0
        %589 = vmatprep.mubr.f32.mxu0 0.0
        %590 = vmatmul.mubr.f32.gmra.mrb[0].mxu0 %v472
        %v591 = vpop.f32.mrb[0].mxu0
        %v592 = vadd.f32 0.0, %v591
        %v593 = vpop.f32.mrb[0].mxu0
        %594 = vmatprep.mubr.f32.mxu0 0.0
        %595 = vmatmul.mubr.f32.gmra.mrb[0].mxu0 %v475
        %v596 = vpop.f32.mrb[0].mxu0
        %v597 = vadd.f32 0.0, %v596
        %v598 = vpop.f32.mrb[0].mxu0
        %599 = vmatprep.mubr.f32.mxu0 0.0
        %600 = vmatmul.mubr.f32.gmra.mrb[0].mxu0 %v478
        %v601 = vpop.f32.mrb[0].mxu0
        %v602 = vadd.f32 0.0, %v601
        %v603 = vpop.f32.mrb[0].mxu0
        %604 = vmatprep.mubr.f32.mxu0 0.0
        %605 = vmatmul.mubr.f32.gmra.mrb[0].mxu0 %v481
        %v606 = vpop.f32.mrb[0].mxu0
        %v607 = vadd.f32 0.0, %v606
        %v608 = vpop.f32.mrb[0].mxu0
        %609 = vmatprep.mubr.f32.mxu0 0.0
        %610 = vmatmul.mubr.f32.gmra.mrb[0].mxu0 %v484
        %v611 = vpop.f32.mrb[0].mxu0
        %v612 = vadd.f32 0.0, %v611
        %v613 = vpop.f32.mrb[0].mxu0
        %614 = vdwg.mxu0
        %v615 = vld [vmem:[%s5] sm:$0xff]
        %v616 = vld [vmem:[%s5 + $0x8] sm:$0xff]
        %v617 = vld [vmem:[%s5 + $0x10] sm:$0xff]
        %v618 = vld [vmem:[%s5 + $0x18] sm:$0xff]
        %v619 = vld [vmem:[%s5 + $0x20] sm:$0xff]
        %v620 = vld [vmem:[%s5 + $0x28] sm:$0xff]
        %v621 = vld [vmem:[%s5 + $0x30] sm:$0xff]
        %v622 = vld [vmem:[%s5 + $0x38] sm:$0xff]
        %623 = vset.pattern.permute.xlu0 0
        %624 = vperm.xlu0 %623, %v436
        %v625 = vpop.permute.xlu0 %624
        %627 = vset.pattern.permute.xlu0 0
        %628 = vperm.xlu0 %627, %v437
        %v629 = vpop.permute.xlu0 %628
        %631 = vset.pattern.permute.xlu0 0
        %632 = vperm.xlu0 %631, %v438
        %v633 = vpop.permute.xlu0 %632
        %635 = vset.pattern.permute.xlu0 0
        %636 = vperm.xlu0 %635, %v439
        %v637 = vpop.permute.xlu0 %636
        %639 = vset.pattern.permute.xlu0 0
        %640 = vperm.xlu0 %639, %v440
        %v641 = vpop.permute.xlu0 %640
        %643 = vset.pattern.permute.xlu0 0
        %644 = vperm.xlu0 %643, %v441
        %v645 = vpop.permute.xlu0 %644
        %647 = vset.pattern.permute.xlu0 0
        %648 = vperm.xlu0 %647, %v442
        %v649 = vpop.permute.xlu0 %648
        %651 = vset.pattern.permute.xlu0 0
        %652 = vperm.xlu0 %651, %v443
        %v653 = vpop.permute.xlu0 %652
        %v655 = vmul.f32 %v625, %v615
        %v656 = vmul.f32 %v629, %v616
        %v657 = vmul.f32 %v633, %v617
        %v658 = vmul.f32 %v637, %v618
        %v659 = vmul.f32 %v641, %v619
        %v660 = vmul.f32 %v645, %v620
        %v661 = vmul.f32 %v649, %v621
        %v662 = vmul.f32 %v653, %v622
        %v663 = vadd.f32 %v655, 0.0
        %v664 = vadd.f32 %v656, 0.0
        %v665 = vadd.f32 %v657, 0.0
        %v666 = vadd.f32 %v658, 0.0
        %v667 = vadd.f32 %v659, 0.0
        %v668 = vadd.f32 %v660, 0.0
        %v669 = vadd.f32 %v661, 0.0
        %v670 = vadd.f32 %v662, 0.0
        %v671 = vld [vmem:[%s6] sm:$0xff]
        %v672 = vld [vmem:[%s6 + $0x8] sm:$0xff]
        %v673 = vld [vmem:[%s6 + $0x10] sm:$0xff]
        %v674 = vld [vmem:[%s6 + $0x18] sm:$0xff]
        %v675 = vld [vmem:[%s6 + $0x20] sm:$0xff]
        %v676 = vld [vmem:[%s6 + $0x28] sm:$0xff]
        %v677 = vld [vmem:[%s6 + $0x30] sm:$0xff]
        %v678 = vld [vmem:[%s6 + $0x38] sm:$0xff]
        %679 = vset.pattern.permute.xlu0 0
        %680 = vperm.xlu0 %679, %v444
        %v681 = vpop.permute.xlu0 %680
        %683 = vset.pattern.permute.xlu0 0
        %684 = vperm.xlu0 %683, %v445
        %v685 = vpop.permute.xlu0 %684
        %687 = vset.pattern.permute.xlu0 0
        %688 = vperm.xlu0 %687, %v446
        %v689 = vpop.permute.xlu0 %688
        %691 = vset.pattern.permute.xlu0 0
        %692 = vperm.xlu0 %691, %v447
        %v693 = vpop.permute.xlu0 %692
        %695 = vset.pattern.permute.xlu0 0
        %696 = vperm.xlu0 %695, %v448
        %v697 = vpop.permute.xlu0 %696
        %699 = vset.pattern.permute.xlu0 0
        %700 = vperm.xlu0 %699, %v449
        %v701 = vpop.permute.xlu0 %700
        %703 = vset.pattern.permute.xlu0 0
        %704 = vperm.xlu0 %703, %v450
        %v705 = vpop.permute.xlu0 %704
        %707 = vset.pattern.permute.xlu0 0
        %708 = vperm.xlu0 %707, %v451
        %v709 = vpop.permute.xlu0 %708
        %v711 = vmul.f32 %v681, %v671
        %v712 = vmul.f32 %v685, %v672
        %v713 = vmul.f32 %v689, %v673
        %v714 = vmul.f32 %v693, %v674
        %v715 = vmul.f32 %v697, %v675
        %v716 = vmul.f32 %v701, %v676
        %v717 = vmul.f32 %v705, %v677
        %v718 = vmul.f32 %v709, %v678
        %v719 = vadd.f32 %v711, 0.0
        %v720 = vadd.f32 %v712, 0.0
        %v721 = vadd.f32 %v713, 0.0
        %v722 = vadd.f32 %v714, 0.0
        %v723 = vadd.f32 %v715, 0.0
        %v724 = vadd.f32 %v716, 0.0
        %v725 = vadd.f32 %v717, 0.0
        %v726 = vadd.f32 %v718, 0.0
        %s727 = scalar_lea.vmem %s5, 64
        %v728 = vld [vmem:[%s727] sm:$0xff]
        %v729 = vld [vmem:[%s727 + $0x8] sm:$0xff]
        %v730 = vld [vmem:[%s727 + $0x10] sm:$0xff]
        %v731 = vld [vmem:[%s727 + $0x18] sm:$0xff]
        %v732 = vld [vmem:[%s727 + $0x20] sm:$0xff]
        %v733 = vld [vmem:[%s727 + $0x28] sm:$0xff]
        %v734 = vld [vmem:[%s727 + $0x30] sm:$0xff]
        %v735 = vld [vmem:[%s727 + $0x38] sm:$0xff]
        %736 = vset.pattern.permute.xlu0 1
        %737 = vperm.xlu0 %736, %v436
        %v738 = vpop.permute.xlu0 %737
        %740 = vset.pattern.permute.xlu0 1
        %741 = vperm.xlu0 %740, %v437
        %v742 = vpop.permute.xlu0 %741
        %744 = vset.pattern.permute.xlu0 1
        %745 = vperm.xlu0 %744, %v438
        %v746 = vpop.permute.xlu0 %745
        %748 = vset.pattern.permute.xlu0 1
        %749 = vperm.xlu0 %748, %v439
        %v750 = vpop.permute.xlu0 %749
        %752 = vset.pattern.permute.xlu0 1
        %753 = vperm.xlu0 %752, %v440
        %v754 = vpop.permute.xlu0 %753
        %756 = vset.pattern.permute.xlu0 1
        %757 = vperm.xlu0 %756, %v441
        %v758 = vpop.permute.xlu0 %757
        %760 = vset.pattern.permute.xlu0 1
        %761 = vperm.xlu0 %760, %v442
        %v762 = vpop.permute.xlu0 %761
        %764 = vset.pattern.permute.xlu0 1
        %765 = vperm.xlu0 %764, %v443
        %v766 = vpop.permute.xlu0 %765
        %v768 = vmul.f32 %v738, %v728
        %v769 = vmul.f32 %v742, %v729
        %v770 = vmul.f32 %v746, %v730
        %v771 = vmul.f32 %v750, %v731
        %v772 = vmul.f32 %v754, %v732
        %v773 = vmul.f32 %v758, %v733
        %v774 = vmul.f32 %v762, %v734
        %v775 = vmul.f32 %v766, %v735
        %v776 = vadd.f32 %v663, %v768
        %v777 = vadd.f32 %v664, %v769
        %v778 = vadd.f32 %v665, %v770
        %v779 = vadd.f32 %v666, %v771
        %v780 = vadd.f32 %v667, %v772
        %v781 = vadd.f32 %v668, %v773
        %v782 = vadd.f32 %v669, %v774
        %v783 = vadd.f32 %v670, %v775
        %s784 = scalar_lea.vmem %s6, 64
        %v785 = vld [vmem:[%s784] sm:$0xff]
        %v786 = vld [vmem:[%s784 + $0x8] sm:$0xff]
        %v787 = vld [vmem:[%s784 + $0x10] sm:$0xff]
        %v788 = vld [vmem:[%s784 + $0x18] sm:$0xff]
        %v789 = vld [vmem:[%s784 + $0x20] sm:$0xff]
        %v790 = vld [vmem:[%s784 + $0x28] sm:$0xff]
        %v791 = vld [vmem:[%s784 + $0x30] sm:$0xff]
        %v792 = vld [vmem:[%s784 + $0x38] sm:$0xff]
        %793 = vset.pattern.permute.xlu0 1
        %794 = vperm.xlu0 %793, %v444
        %v795 = vpop.permute.xlu0 %794
        %797 = vset.pattern.permute.xlu0 1
        %798 = vperm.xlu0 %797, %v445
        %v799 = vpop.permute.xlu0 %798
        %801 = vset.pattern.permute.xlu0 1
        %802 = vperm.xlu0 %801, %v446
        %v803 = vpop.permute.xlu0 %802
        %805 = vset.pattern.permute.xlu0 1
        %806 = vperm.xlu0 %805, %v447
        %v807 = vpop.permute.xlu0 %806
        %809 = vset.pattern.permute.xlu0 1
        %810 = vperm.xlu0 %809, %v448
        %v811 = vpop.permute.xlu0 %810
        %813 = vset.pattern.permute.xlu0 1
        %814 = vperm.xlu0 %813, %v449
        %v815 = vpop.permute.xlu0 %814
        %817 = vset.pattern.permute.xlu0 1
        %818 = vperm.xlu0 %817, %v450
        %v819 = vpop.permute.xlu0 %818
        %821 = vset.pattern.permute.xlu0 1
        %822 = vperm.xlu0 %821, %v451
        %v823 = vpop.permute.xlu0 %822
        %v825 = vmul.f32 %v795, %v785
        %v826 = vmul.f32 %v799, %v786
        %v827 = vmul.f32 %v803, %v787
        %v828 = vmul.f32 %v807, %v788
        %v829 = vmul.f32 %v811, %v789
        %v830 = vmul.f32 %v815, %v790
        %v831 = vmul.f32 %v819, %v791
        %v832 = vmul.f32 %v823, %v792
        %v833 = vadd.f32 %v719, %v825
        %v834 = vadd.f32 %v720, %v826
        %v835 = vadd.f32 %v721, %v827
        %v836 = vadd.f32 %v722, %v828
        %v837 = vadd.f32 %v723, %v829
        %v838 = vadd.f32 %v724, %v830
        %v839 = vadd.f32 %v725, %v831
        %v840 = vadd.f32 %v726, %v832
        %v841 = vstv %s454
        %v842 = vmul.f32 %v841, %v577
        %v843 = vmul.f32 %v841, %v582
        %v844 = vmul.f32 %v841, %v587
        %v845 = vmul.f32 %v841, %v592
        %v846 = vmul.f32 %v841, %v597
        %v847 = vmul.f32 %v841, %v602
        %v848 = vmul.f32 %v841, %v607
        %v849 = vmul.f32 %v841, %v612
        %v850 = vstv %s456
        %v851 = vmul.f32 %v850, %v776
        %v852 = vmul.f32 %v850, %v777
        %v853 = vmul.f32 %v850, %v778
        %v854 = vmul.f32 %v850, %v779
        %v855 = vmul.f32 %v850, %v780
        %v856 = vmul.f32 %v850, %v781
        %v857 = vmul.f32 %v850, %v782
        %v858 = vmul.f32 %v850, %v783
        %v859 = vadd.f32 %v842, %v851
        %v860 = vadd.f32 %v843, %v852
        %v861 = vadd.f32 %v844, %v853
        %v862 = vadd.f32 %v845, %v854
        %v863 = vadd.f32 %v846, %v855
        %v864 = vadd.f32 %v847, %v856
        %v865 = vadd.f32 %v848, %v857
        %v866 = vadd.f32 %v849, %v858
        %867 = vxpose.xlu0.b32.start [1/16] %v833, 128
        %868 = vxpose.xlu0.b32.cont [2/16] %v834, 128
        %869 = vxpose.xlu0.b32.cont [3/16] %v835, 128
        %870 = vxpose.xlu0.b32.cont [4/16] %v836, 128
        %871 = vxpose.xlu0.b32.cont [5/16] %v837, 128
        %872 = vxpose.xlu0.b32.cont [6/16] %v838, 128
        %873 = vxpose.xlu0.b32.cont [7/16] %v839, 128
        %874 = vxpose.xlu0.b32.cont [8/16] %v840, 128
        %875 = vxpose.xlu0.b32.cont [9/16] 0.0, 128
        %876 = vxpose.xlu0.b32.cont [10/16] 0.0, 128
        %877 = vxpose.xlu0.b32.cont [11/16] 0.0, 128
        %878 = vxpose.xlu0.b32.cont [12/16] 0.0, 128
        %879 = vxpose.xlu0.b32.cont [13/16] 0.0, 128
        %880 = vxpose.xlu0.b32.cont [14/16] 0.0, 128
        %881 = vxpose.xlu0.b32.cont [15/16] 0.0, 128
        %882 = vxpose.xlu0.b32.end [16/16] 0.0, 128
        %v883 = vpop.trf.xlu0
        %v884 = vpop.trf.xlu0
        %v885 = vpop.trf.xlu0
        %v886 = vpop.trf.xlu0
        %v887 = vpop.trf.xlu0
        %v888 = vpop.trf.xlu0
        %v889 = vpop.trf.xlu0
        %v890 = vpop.trf.xlu0
        %v891 = vpop.trf.xlu0
        %v892 = vpop.trf.xlu0
        %v893 = vpop.trf.xlu0
        %v894 = vpop.trf.xlu0
        %v895 = vpop.trf.xlu0
        %v896 = vpop.trf.xlu0
        %v897 = vpop.trf.xlu0
        %v898 = vpop.trf.xlu0
        %v899 = vstv %s458
        %v900 = vmul.f32 %v899, %v883
        %v901 = vmul.f32 %v899, %v884
        %v902 = vmul.f32 %v899, %v885
        %v903 = vmul.f32 %v899, %v886
        %v904 = vmul.f32 %v899, %v887
        %v905 = vmul.f32 %v899, %v888
        %v906 = vmul.f32 %v899, %v889
        %v907 = vmul.f32 %v899, %v890
        %v908 = vadd.f32 %v859, %v900
        %v909 = vadd.f32 %v860, %v901
        %v910 = vadd.f32 %v861, %v902
        %v911 = vadd.f32 %v862, %v903
        %v912 = vadd.f32 %v863, %v904
        %v913 = vadd.f32 %v864, %v905
        %v914 = vadd.f32 %v865, %v906
        %v915 = vadd.f32 %v866, %v907
        %v916 = vstv %s460
        %v917 = vadd.f32 %v908, %v916
        %v918 = vadd.f32 %v909, %v916
        %v919 = vadd.f32 %v910, %v916
        %v920 = vadd.f32 %v911, %v916
        %v921 = vadd.f32 %v912, %v916
        %v922 = vadd.f32 %v913, %v916
        %v923 = vadd.f32 %v914, %v916
        %v924 = vadd.f32 %v915, %v916
        %vm925 = vcmask 523264
        %v926 = vsel %vm925, %v917, -inf
        %927 = vmax.xlane.f32.xlu0 %v926
        %v928 = vpop.xlane.xlu0 %927
        %v929 = vsel %vm925, %v918, -inf
        %930 = vmax.xlane.f32.xlu0 %v929
        %v931 = vpop.xlane.xlu0 %930
        %v932 = vsel %vm925, %v919, -inf
        %933 = vmax.xlane.f32.xlu0 %v932
        %v934 = vpop.xlane.xlu0 %933
        %v935 = vsel %vm925, %v920, -inf
        %936 = vmax.xlane.f32.xlu0 %v935
        %v937 = vpop.xlane.xlu0 %936
        %v938 = vsel %vm925, %v921, -inf
        %939 = vmax.xlane.f32.xlu0 %v938
        %v940 = vpop.xlane.xlu0 %939
        %v941 = vsel %vm925, %v922, -inf
        %942 = vmax.xlane.f32.xlu0 %v941
        %v943 = vpop.xlane.xlu0 %942
        %v944 = vsel %vm925, %v923, -inf
        %945 = vmax.xlane.f32.xlu0 %v944
        %v946 = vpop.xlane.xlu0 %945
        %v947 = vsel %vm925, %v924, -inf
        %948 = vmax.xlane.f32.xlu0 %v947
        %v949 = vpop.xlane.xlu0 %948
        %v950 = vsub.f32 %v917, %v928
        %v951 = vsub.f32 %v918, %v931
        %v952 = vsub.f32 %v919, %v934
        %v953 = vsub.f32 %v920, %v937
        %v954 = vsub.f32 %v921, %v940
        %v955 = vsub.f32 %v922, %v943
        %v956 = vsub.f32 %v923, %v946
        %v957 = vsub.f32 %v924, %v949
        %v958 = vmul.f32 %v950, 1.442695
        %v959 = vpow.pop %v958
        %v960 = vmul.f32 %v951, 1.442695
        %v961 = vpow.pop %v960
        %v962 = vmul.f32 %v952, 1.442695
        %v963 = vpow.pop %v962
        %v964 = vmul.f32 %v953, 1.442695
        %v965 = vpow.pop %v964
        %v966 = vmul.f32 %v954, 1.442695
        %v967 = vpow.pop %v966
        %v968 = vmul.f32 %v955, 1.442695
        %v969 = vpow.pop %v968
        %v970 = vmul.f32 %v956, 1.442695
        %v971 = vpow.pop %v970
        %v972 = vmul.f32 %v957, 1.442695
        %v973 = vpow.pop %v972
        %v974 = vsel %vm925, %v959, 0.0
        %975 = vadd.xlane.f32.xlu0 %v974
        %v976 = vpop.xlane.xlu0 %975
        %v977 = vsel %vm925, %v961, 0.0
        %978 = vadd.xlane.f32.xlu0 %v977
        %v979 = vpop.xlane.xlu0 %978
        %v980 = vsel %vm925, %v963, 0.0
        %981 = vadd.xlane.f32.xlu0 %v980
        %v982 = vpop.xlane.xlu0 %981
        %v983 = vsel %vm925, %v965, 0.0
        %984 = vadd.xlane.f32.xlu0 %v983
        %v985 = vpop.xlane.xlu0 %984
        %v986 = vsel %vm925, %v967, 0.0
        %987 = vadd.xlane.f32.xlu0 %v986
        %v988 = vpop.xlane.xlu0 %987
        %v989 = vsel %vm925, %v969, 0.0
        %990 = vadd.xlane.f32.xlu0 %v989
        %v991 = vpop.xlane.xlu0 %990
        %v992 = vsel %vm925, %v971, 0.0
        %993 = vadd.xlane.f32.xlu0 %v992
        %v994 = vpop.xlane.xlu0 %993
        %v995 = vsel %vm925, %v973, 0.0
        %996 = vadd.xlane.f32.xlu0 %v995
        %v997 = vpop.xlane.xlu0 %996
        %v998 = vrcp.pop %v976
        %v999 = vrcp.pop %v979
        %v1000 = vrcp.pop %v982
        %v1001 = vrcp.pop %v985
        %v1002 = vrcp.pop %v988
        %v1003 = vrcp.pop %v991
        %v1004 = vrcp.pop %v994
        %v1005 = vrcp.pop %v997
        %v1006 = vmul.f32 %v959, %v998
        %v1007 = vmul.f32 %v961, %v999
        %v1008 = vmul.f32 %v963, %v1000
        %v1009 = vmul.f32 %v965, %v1001
        %v1010 = vmul.f32 %v967, %v1002
        %v1011 = vmul.f32 %v969, %v1003
        %v1012 = vmul.f32 %v971, %v1004
        %v1013 = vmul.f32 %v973, %v1005
        %v1015 = vsel %vm925, %v452, 0
        %v1018 = vsel %vm925, %v1006, 0
        %v1021 = vsel %vm925, %v1007, 0
        %v1024 = vsel %vm925, %v1008, 0
        %v1027 = vsel %vm925, %v1009, 0
        %v1030 = vsel %vm925, %v1010, 0
        %v1033 = vsel %vm925, %v1011, 0
        %v1036 = vsel %vm925, %v1012, 0
        %v1039 = vsel %vm925, %v1013, 0
        %1041 = vmatprep.subr.mxu0 0.0
        %1042 = vmatpush1.xpose.msra.mxu0 %v1018
        %1043 = vmatprep.subr.mxu0 0.0
        %1044 = vmatpush1.xpose.msra.mxu0 %v1021
        %1045 = vmatprep.subr.mxu0 0.0
        %1046 = vmatpush1.xpose.msra.mxu0 %v1024
        %1047 = vmatprep.subr.mxu0 0.0
        %1048 = vmatpush1.xpose.msra.mxu0 %v1027
        %1049 = vmatprep.subr.mxu0 0.0
        %1050 = vmatpush1.xpose.msra.mxu0 %v1030
        %1051 = vmatprep.subr.mxu0 0.0
        %1052 = vmatpush1.xpose.msra.mxu0 %v1033
        %1053 = vmatprep.subr.mxu0 0.0
        %1054 = vmatpush1.xpose.msra.mxu0 %v1036
        %1055 = vmatprep.subr.mxu0 0.0
        %1056 = vmatpush1.xpose.msra.mxu0 %v1039
        %1057 = vmatprep.subr.mxu0 0.0
        %1058 = vmatpush1.xpose.msra.mxu0 0.0
        %1059 = vmatprep.subr.mxu0 0.0
        %1060 = vmatpush1.xpose.msra.mxu0 0.0
        %1061 = vmatprep.subr.mxu0 0.0
        %1062 = vmatpush1.xpose.msra.mxu0 0.0
        %1063 = vmatprep.subr.mxu0 0.0
        %1064 = vmatpush1.xpose.msra.mxu0 0.0
        %1065 = vmatprep.subr.mxu0 0.0
        %1066 = vmatpush1.xpose.msra.mxu0 0.0
        %1067 = vmatprep.subr.mxu0 0.0
        %1068 = vmatpush1.xpose.msra.mxu0 0.0
        %1069 = vmatprep.subr.mxu0 0.0
        %1070 = vmatpush1.xpose.msra.mxu0 0.0
        %1071 = vmatprep.subr.mxu0 0.0
        %1072 = vmatpush1.xpose.msra.mxu0 0.0
        %1073 = vmatprep.subr.mxu0 0.0
        %1074 = vmatpush1.xpose.msra.mxu0 0.0
        %1075 = vmatprep.subr.mxu0 0.0
        %1076 = vmatpush1.xpose.msra.mxu0 0.0
        %1077 = vmatprep.subr.mxu0 0.0
        %1078 = vmatpush1.xpose.msra.mxu0 0.0
        %1079 = vmatprep.subr.mxu0 0.0
        %1080 = vmatpush1.xpose.msra.mxu0 0.0
        %1081 = vmatprep.subr.mxu0 0.0
        %1082 = vmatpush1.xpose.msra.mxu0 0.0
        %1083 = vmatprep.subr.mxu0 0.0
        %1084 = vmatpush1.xpose.msra.mxu0 0.0
        %1085 = vmatprep.subr.mxu0 0.0
        %1086 = vmatpush1.xpose.msra.mxu0 0.0
        %1087 = vmatprep.subr.mxu0 0.0
        %1088 = vmatpush1.xpose.msra.mxu0 0.0
        %1089 = vmatprep.subr.mxu0 0.0
        %1090 = vmatpush1.xpose.msra.mxu0 0.0
        %1091 = vmatprep.subr.mxu0 0.0
        %1092 = vmatpush1.xpose.msra.mxu0 0.0
        %1093 = vmatprep.subr.mxu0 0.0
        %1094 = vmatpush1.xpose.msra.mxu0 0.0
        %1095 = vmatprep.subr.mxu0 0.0
        %1096 = vmatpush1.xpose.msra.mxu0 0.0
        %1097 = vmatprep.subr.mxu0 0.0
        %1098 = vmatpush1.xpose.msra.mxu0 0.0
        %1099 = vmatprep.subr.mxu0 0.0
        %1100 = vmatpush1.xpose.msra.mxu0 0.0
        %1101 = vmatprep.subr.mxu0 0.0
        %1102 = vmatpush1.xpose.msra.mxu0 0.0
        %1103 = vmatprep.subr.mxu0 0.0
        %1104 = vmatpush1.xpose.msra.mxu0 0.0
        %1105 = vmatprep.mubr.f32.mxu0 0.0
        %1106 = vmatmul.mubr.f32.gmra.mrb[0].mxu0 %v1015
        %v1107 = vpop.f32.mrb[0].mxu0
        %v1108 = vadd.f32 0.0, %v1107
        %v1109 = vpop.f32.mrb[0].mxu0
        %1110 = vdwg.mxu0
        %v1111 = vld [vmem:[%s7] sm:$0xff]
        %v1112 = vld [vmem:[%s7 + $0x8] sm:$0xff]
        %v1113 = vld [vmem:[%s7 + $0x10] sm:$0xff]
        %v1114 = vld [vmem:[%s7 + $0x18] sm:$0xff]
        %v1115 = vld [vmem:[%s7 + $0x20] sm:$0xff]
        %v1116 = vld [vmem:[%s7 + $0x28] sm:$0xff]
        %v1117 = vld [vmem:[%s7 + $0x30] sm:$0xff]
        %v1118 = vld [vmem:[%s7 + $0x38] sm:$0xff]
        %v1119 = vld [vmem:[%s7 + $0x40] sm:$0xff]
        %v1120 = vld [vmem:[%s7 + $0x48] sm:$0xff]
        %v1121 = vld [vmem:[%s7 + $0x50] sm:$0xff]
        %v1122 = vld [vmem:[%s7 + $0x58] sm:$0xff]
        %v1123 = vld [vmem:[%s7 + $0x60] sm:$0xff]
        %v1124 = vld [vmem:[%s7 + $0x68] sm:$0xff]
        %v1125 = vld [vmem:[%s7 + $0x70] sm:$0xff]
        %v1126 = vld [vmem:[%s7 + $0x78] sm:$0xff]
        %v1127 = vld [vmem:[%s7 + $0x80] sm:$0xff]
        %v1128 = vld [vmem:[%s7 + $0x88] sm:$0xff]
        %v1129 = vld [vmem:[%s7 + $0x90] sm:$0xff]
        %v1130 = vld [vmem:[%s7 + $0x98] sm:$0xff]
        %v1131 = vld [vmem:[%s7 + $0xa0] sm:$0xff]
        %v1132 = vld [vmem:[%s7 + $0xa8] sm:$0xff]
        %v1133 = vld [vmem:[%s7 + $0xb0] sm:$0xff]
        %v1134 = vld [vmem:[%s7 + $0xb8] sm:$0xff]
        %v1135 = vld [vmem:[%s7 + $0xc0] sm:$0xff]
        %v1136 = vld [vmem:[%s7 + $0xc8] sm:$0xff]
        %v1137 = vld [vmem:[%s7 + $0xd0] sm:$0xff]
        %v1138 = vld [vmem:[%s7 + $0xd8] sm:$0xff]
        %v1139 = vld [vmem:[%s7 + $0xe0] sm:$0xff]
        %v1140 = vld [vmem:[%s7 + $0xe8] sm:$0xff]
        %v1141 = vld [vmem:[%s7 + $0xf0] sm:$0xff]
        %v1142 = vld [vmem:[%s7 + $0xf8] sm:$0xff]
        %v1143 = vmul.f32 %v1006, %v1111
        %v1144 = vmul.f32 %v1007, %v1112
        %v1145 = vmul.f32 %v1008, %v1113
        %v1146 = vmul.f32 %v1009, %v1114
        %v1147 = vmul.f32 %v1010, %v1115
        %v1148 = vmul.f32 %v1011, %v1116
        %v1149 = vmul.f32 %v1012, %v1117
        %v1150 = vmul.f32 %v1013, %v1118
        %v1151 = vmul.f32 %v1006, %v1119
        %v1152 = vmul.f32 %v1007, %v1120
        %v1153 = vmul.f32 %v1008, %v1121
        %v1154 = vmul.f32 %v1009, %v1122
        %v1155 = vmul.f32 %v1010, %v1123
        %v1156 = vmul.f32 %v1011, %v1124
        %v1157 = vmul.f32 %v1012, %v1125
        %v1158 = vmul.f32 %v1013, %v1126
        %v1159 = vmul.f32 %v1006, %v1127
        %v1160 = vmul.f32 %v1007, %v1128
        %v1161 = vmul.f32 %v1008, %v1129
        %v1162 = vmul.f32 %v1009, %v1130
        %v1163 = vmul.f32 %v1010, %v1131
        %v1164 = vmul.f32 %v1011, %v1132
        %v1165 = vmul.f32 %v1012, %v1133
        %v1166 = vmul.f32 %v1013, %v1134
        %v1167 = vmul.f32 %v1006, %v1135
        %v1168 = vmul.f32 %v1007, %v1136
        %v1169 = vmul.f32 %v1008, %v1137
        %v1170 = vmul.f32 %v1009, %v1138
        %v1171 = vmul.f32 %v1010, %v1139
        %v1172 = vmul.f32 %v1011, %v1140
        %v1173 = vmul.f32 %v1012, %v1141
        %v1174 = vmul.f32 %v1013, %v1142
        %v1175 = vsel %vm925, %v1143, 0.0
        %1176 = vadd.xlane.f32.xlu0 %v1175
        %v1177 = vpop.xlane.xlu0 %1176
        %v1178 = vsel %vm925, %v1144, 0.0
        %1179 = vadd.xlane.f32.xlu0 %v1178
        %v1180 = vpop.xlane.xlu0 %1179
        %v1181 = vsel %vm925, %v1145, 0.0
        %1182 = vadd.xlane.f32.xlu0 %v1181
        %v1183 = vpop.xlane.xlu0 %1182
        %v1184 = vsel %vm925, %v1146, 0.0
        %1185 = vadd.xlane.f32.xlu0 %v1184
        %v1186 = vpop.xlane.xlu0 %1185
        %v1187 = vsel %vm925, %v1147, 0.0
        %1188 = vadd.xlane.f32.xlu0 %v1187
        %v1189 = vpop.xlane.xlu0 %1188
        %v1190 = vsel %vm925, %v1148, 0.0
        %1191 = vadd.xlane.f32.xlu0 %v1190
        %v1192 = vpop.xlane.xlu0 %1191
        %v1193 = vsel %vm925, %v1149, 0.0
        %1194 = vadd.xlane.f32.xlu0 %v1193
        %v1195 = vpop.xlane.xlu0 %1194
        %v1196 = vsel %vm925, %v1150, 0.0
        %1197 = vadd.xlane.f32.xlu0 %v1196
        %v1198 = vpop.xlane.xlu0 %1197
        %v1199 = vsel %vm925, %v1151, 0.0
        %1200 = vadd.xlane.f32.xlu0 %v1199
        %v1201 = vpop.xlane.xlu0 %1200
        %v1202 = vsel %vm925, %v1152, 0.0
        %1203 = vadd.xlane.f32.xlu0 %v1202
        %v1204 = vpop.xlane.xlu0 %1203
        %v1205 = vsel %vm925, %v1153, 0.0
        %1206 = vadd.xlane.f32.xlu0 %v1205
        %v1207 = vpop.xlane.xlu0 %1206
        %v1208 = vsel %vm925, %v1154, 0.0
        %1209 = vadd.xlane.f32.xlu0 %v1208
        %v1210 = vpop.xlane.xlu0 %1209
        %v1211 = vsel %vm925, %v1155, 0.0
        %1212 = vadd.xlane.f32.xlu0 %v1211
        %v1213 = vpop.xlane.xlu0 %1212
        %v1214 = vsel %vm925, %v1156, 0.0
        %1215 = vadd.xlane.f32.xlu0 %v1214
        %v1216 = vpop.xlane.xlu0 %1215
        %v1217 = vsel %vm925, %v1157, 0.0
        %1218 = vadd.xlane.f32.xlu0 %v1217
        %v1219 = vpop.xlane.xlu0 %1218
        %v1220 = vsel %vm925, %v1158, 0.0
        %1221 = vadd.xlane.f32.xlu0 %v1220
        %v1222 = vpop.xlane.xlu0 %1221
        %v1223 = vsel %vm925, %v1159, 0.0
        %1224 = vadd.xlane.f32.xlu0 %v1223
        %v1225 = vpop.xlane.xlu0 %1224
        %v1226 = vsel %vm925, %v1160, 0.0
        %1227 = vadd.xlane.f32.xlu0 %v1226
        %v1228 = vpop.xlane.xlu0 %1227
        %v1229 = vsel %vm925, %v1161, 0.0
        %1230 = vadd.xlane.f32.xlu0 %v1229
        %v1231 = vpop.xlane.xlu0 %1230
        %v1232 = vsel %vm925, %v1162, 0.0
        %1233 = vadd.xlane.f32.xlu0 %v1232
        %v1234 = vpop.xlane.xlu0 %1233
        %v1235 = vsel %vm925, %v1163, 0.0
        %1236 = vadd.xlane.f32.xlu0 %v1235
        %v1237 = vpop.xlane.xlu0 %1236
        %v1238 = vsel %vm925, %v1164, 0.0
        %1239 = vadd.xlane.f32.xlu0 %v1238
        %v1240 = vpop.xlane.xlu0 %1239
        %v1241 = vsel %vm925, %v1165, 0.0
        %1242 = vadd.xlane.f32.xlu0 %v1241
        %v1243 = vpop.xlane.xlu0 %1242
        %v1244 = vsel %vm925, %v1166, 0.0
        %1245 = vadd.xlane.f32.xlu0 %v1244
        %v1246 = vpop.xlane.xlu0 %1245
        %v1247 = vsel %vm925, %v1167, 0.0
        %1248 = vadd.xlane.f32.xlu0 %v1247
        %v1249 = vpop.xlane.xlu0 %1248
        %v1250 = vsel %vm925, %v1168, 0.0
        %1251 = vadd.xlane.f32.xlu0 %v1250
        %v1252 = vpop.xlane.xlu0 %1251
        %v1253 = vsel %vm925, %v1169, 0.0
        %1254 = vadd.xlane.f32.xlu0 %v1253
        %v1255 = vpop.xlane.xlu0 %1254
        %v1256 = vsel %vm925, %v1170, 0.0
        %1257 = vadd.xlane.f32.xlu0 %v1256
        %v1258 = vpop.xlane.xlu0 %1257
        %v1259 = vsel %vm925, %v1171, 0.0
        %1260 = vadd.xlane.f32.xlu0 %v1259
        %v1261 = vpop.xlane.xlu0 %1260
        %v1262 = vsel %vm925, %v1172, 0.0
        %1263 = vadd.xlane.f32.xlu0 %v1262
        %v1264 = vpop.xlane.xlu0 %1263
        %v1265 = vsel %vm925, %v1173, 0.0
        %1266 = vadd.xlane.f32.xlu0 %v1265
        %v1267 = vpop.xlane.xlu0 %1266
        %v1268 = vsel %vm925, %v1174, 0.0
        %1269 = vadd.xlane.f32.xlu0 %v1268
        %v1270 = vpop.xlane.xlu0 %1269
        %v1271 = vld [vmem:[%s401] sm:$0xf]
        %1273 = vset.pattern.permute.xlu0 0
        %1274 = vperm.xlu0 %1273, %v1271
        %v1275 = vpop.permute.xlu0 %1274
        %v1277 = vmul.f32 %v1275, %v1108
        %1278 = vset.pattern.permute.xlu0 1
        %1279 = vperm.xlu0 %1278, %v1271
        %v1280 = vpop.permute.xlu0 %1279
        %v1314 = vlaneseq
        %v1315 = vand.u32 %v1314, 127
        %v1316 = vlaneseq
        %v1317 = vshrl.u32 %v1316, 7
        %v1318 = vsub.s32 %v1315, %v1317
        %v1319 = vrot.slane %v1177, %v1318
        %v1320 = vadd.s32 %v1315, 4294967288
        %v1321 = vlaneseq
        %v1322 = vshrl.u32 %v1321, 7
        %v1323 = vsub.s32 %v1320, %v1322
        %v1324 = vrot.slane %v1180, %v1323
        %vm1325 = vcmask 130112
        %v1326 = vsel %vm1325, %v1324, %v1319
        %v1327 = vadd.s32 %v1315, 4294967280
        %v1328 = vlaneseq
        %v1329 = vshrl.u32 %v1328, 7
        %v1330 = vsub.s32 %v1327, %v1329
        %v1331 = vrot.slane %v1183, %v1330
        %vm1332 = vcmask 195712
        %v1333 = vsel %vm1332, %v1331, %v1326
        %v1334 = vadd.s32 %v1315, 4294967272
        %v1335 = vlaneseq
        %v1336 = vshrl.u32 %v1335, 7
        %v1337 = vsub.s32 %v1334, %v1336
        %v1338 = vrot.slane %v1186, %v1337
        %vm1339 = vcmask 261312
        %v1340 = vsel %vm1339, %v1338, %v1333
        %v1341 = vadd.s32 %v1315, 4294967264
        %v1342 = vlaneseq
        %v1343 = vshrl.u32 %v1342, 7
        %v1344 = vsub.s32 %v1341, %v1343
        %v1345 = vrot.slane %v1189, %v1344
        %vm1346 = vcmask 326912
        %v1347 = vsel %vm1346, %v1345, %v1340
        %v1348 = vadd.s32 %v1315, 4294967256
        %v1349 = vlaneseq
        %v1350 = vshrl.u32 %v1349, 7
        %v1351 = vsub.s32 %v1348, %v1350
        %v1352 = vrot.slane %v1192, %v1351
        %vm1353 = vcmask 392512
        %v1354 = vsel %vm1353, %v1352, %v1347
        %v1355 = vadd.s32 %v1315, 4294967248
        %v1356 = vlaneseq
        %v1357 = vshrl.u32 %v1356, 7
        %v1358 = vsub.s32 %v1355, %v1357
        %v1359 = vrot.slane %v1195, %v1358
        %vm1360 = vcmask 458112
        %v1361 = vsel %vm1360, %v1359, %v1354
        %v1362 = vadd.s32 %v1315, 4294967240
        %v1363 = vlaneseq
        %v1364 = vshrl.u32 %v1363, 7
        %v1365 = vsub.s32 %v1362, %v1364
        %v1366 = vrot.slane %v1198, %v1365
        %vm1367 = vcmask 523712
        %v1368 = vsel %vm1367, %v1366, %v1361
        %v1369 = vlaneseq
        %v1370 = vshrl.u32 %v1369, 7
        %v1371 = vsub.s32 %v1315, %v1370
        %v1372 = vrot.slane %v1201, %v1371
        %v1373 = vlaneseq
        %v1374 = vshrl.u32 %v1373, 7
        %v1375 = vsub.s32 %v1320, %v1374
        %v1376 = vrot.slane %v1204, %v1375
        %v1377 = vsel %vm1325, %v1376, %v1372
        %v1378 = vlaneseq
        %v1379 = vshrl.u32 %v1378, 7
        %v1380 = vsub.s32 %v1327, %v1379
        %v1381 = vrot.slane %v1207, %v1380
        %v1382 = vsel %vm1332, %v1381, %v1377
        %v1383 = vlaneseq
        %v1384 = vshrl.u32 %v1383, 7
        %v1385 = vsub.s32 %v1334, %v1384
        %v1386 = vrot.slane %v1210, %v1385
        %v1387 = vsel %vm1339, %v1386, %v1382
        %v1388 = vlaneseq
        %v1389 = vshrl.u32 %v1388, 7
        %v1390 = vsub.s32 %v1341, %v1389
        %v1391 = vrot.slane %v1213, %v1390
        %v1392 = vsel %vm1346, %v1391, %v1387
        %v1393 = vlaneseq
        %v1394 = vshrl.u32 %v1393, 7
        %v1395 = vsub.s32 %v1348, %v1394
        %v1396 = vrot.slane %v1216, %v1395
        %v1397 = vsel %vm1353, %v1396, %v1392
        %v1398 = vlaneseq
        %v1399 = vshrl.u32 %v1398, 7
        %v1400 = vsub.s32 %v1355, %v1399
        %v1401 = vrot.slane %v1219, %v1400
        %v1402 = vsel %vm1360, %v1401, %v1397
        %v1403 = vlaneseq
        %v1404 = vshrl.u32 %v1403, 7
        %v1405 = vsub.s32 %v1362, %v1404
        %v1406 = vrot.slane %v1222, %v1405
        %v1407 = vsel %vm1367, %v1406, %v1402
        %v1408 = vlaneseq
        %v1409 = vshrl.u32 %v1408, 7
        %v1410 = vsub.s32 %v1315, %v1409
        %v1411 = vrot.slane %v1225, %v1410
        %v1412 = vlaneseq
        %v1413 = vshrl.u32 %v1412, 7
        %v1414 = vsub.s32 %v1320, %v1413
        %v1415 = vrot.slane %v1228, %v1414
        %v1416 = vsel %vm1325, %v1415, %v1411
        %v1417 = vlaneseq
        %v1418 = vshrl.u32 %v1417, 7
        %v1419 = vsub.s32 %v1327, %v1418
        %v1420 = vrot.slane %v1231, %v1419
        %v1421 = vsel %vm1332, %v1420, %v1416
        %v1422 = vlaneseq
        %v1423 = vshrl.u32 %v1422, 7
        %v1424 = vsub.s32 %v1334, %v1423
        %v1425 = vrot.slane %v1234, %v1424
        %v1426 = vsel %vm1339, %v1425, %v1421
        %v1427 = vlaneseq
        %v1428 = vshrl.u32 %v1427, 7
        %v1429 = vsub.s32 %v1341, %v1428
        %v1430 = vrot.slane %v1237, %v1429
        %v1431 = vsel %vm1346, %v1430, %v1426
        %v1432 = vlaneseq
        %v1433 = vshrl.u32 %v1432, 7
        %v1434 = vsub.s32 %v1348, %v1433
        %v1435 = vrot.slane %v1240, %v1434
        %v1436 = vsel %vm1353, %v1435, %v1431
        %v1437 = vlaneseq
        %v1438 = vshrl.u32 %v1437, 7
        %v1439 = vsub.s32 %v1355, %v1438
        %v1440 = vrot.slane %v1243, %v1439
        %v1441 = vsel %vm1360, %v1440, %v1436
        %v1442 = vlaneseq
        %v1443 = vshrl.u32 %v1442, 7
        %v1444 = vsub.s32 %v1362, %v1443
        %v1445 = vrot.slane %v1246, %v1444
        %v1446 = vsel %vm1367, %v1445, %v1441
        %v1447 = vlaneseq
        %v1448 = vshrl.u32 %v1447, 7
        %v1449 = vsub.s32 %v1315, %v1448
        %v1450 = vrot.slane %v1249, %v1449
        %v1451 = vlaneseq
        %v1452 = vshrl.u32 %v1451, 7
        %v1453 = vsub.s32 %v1320, %v1452
        %v1454 = vrot.slane %v1252, %v1453
        %v1455 = vsel %vm1325, %v1454, %v1450
        %v1456 = vlaneseq
        %v1457 = vshrl.u32 %v1456, 7
        %v1458 = vsub.s32 %v1327, %v1457
        %v1459 = vrot.slane %v1255, %v1458
        %v1460 = vsel %vm1332, %v1459, %v1455
        %v1461 = vlaneseq
        %v1462 = vshrl.u32 %v1461, 7
        %v1463 = vsub.s32 %v1334, %v1462
        %v1464 = vrot.slane %v1258, %v1463
        %v1465 = vsel %vm1339, %v1464, %v1460
        %v1466 = vlaneseq
        %v1467 = vshrl.u32 %v1466, 7
        %v1468 = vsub.s32 %v1341, %v1467
        %v1469 = vrot.slane %v1261, %v1468
        %v1470 = vsel %vm1346, %v1469, %v1465
        %v1471 = vlaneseq
        %v1472 = vshrl.u32 %v1471, 7
        %v1473 = vsub.s32 %v1348, %v1472
        %v1474 = vrot.slane %v1264, %v1473
        %v1475 = vsel %vm1353, %v1474, %v1470
        %v1476 = vlaneseq
        %v1477 = vshrl.u32 %v1476, 7
        %v1478 = vsub.s32 %v1355, %v1477
        %v1479 = vrot.slane %v1267, %v1478
        %v1480 = vsel %vm1360, %v1479, %v1475
        %v1481 = vlaneseq
        %v1482 = vshrl.u32 %v1481, 7
        %v1483 = vsub.s32 %v1362, %v1482
        %v1484 = vrot.slane %v1270, %v1483
        %v1485 = vsel %vm1367, %v1484, %v1480
        %vm1486 = vcmask 1041409
        %v1487 = vsel %vm1486, %v1407, %v1368
        %vm1488 = vcmask 1042434
        %v1489 = vsel %vm1488, %v1446, %v1487
        %vm1490 = vcmask 1043459
        %v1491 = vsel %vm1490, %v1485, %v1489
        %v1493 = vmul.f32 %v1280, %v1491
        %v1494 = vadd.f32 %v1277, %v1493
        %1495 = vset.pattern.permute.xlu0 2
        %1496 = vperm.xlu0 %1495, %v1271
        %v1497 = vpop.permute.xlu0 %1496
        %v1499 = vadd.f32 %v1494, %v1497
        %vm1500 = vcmask 519168
        %1501 = vst.msk [vmem:[%s435] sm:$0xf] %vm1500, %v1499
        %p1502 = scmp.lt.s32.totalorder %s24, 1
        %s1503 = scalar_select %p1502, %s24, 1
        %p1504 = scmp.lt.s32.totalorder %s25, 1
        %s1505 = scalar_select %p1504, %s25, 1
        %s1506 = smul.addr %s1503, 2
        %s1507 = sadd.s32 %s1505, %s1506
        %s1508 = smul.addr %s1507, 4
        %s1509 = scalar_lea.vmem %s8, %s1508
        // Predicated region
        $region57: #{_lambda_.10} parent=51 // pred_check
          %p1510 = pneg %p246
        $region58: #{_lambda_.10} parent=51 // pred_check_branch
          %1512 = sbr.rel (%p1510) target = $region60
        $region59: #{_lambda_.10} parent=51 // pred_region
          _
        $region60: #{_lambda_.10} parent=51 // pred_fallthru
          _
      $region52: #{_lambda_.10} parent=5 // pred_fallthru
        _
      %p1513 = scmp.le.s32.totalorder 2, %s15
      // Predicated region
      $region61: #{_lambda_.10} parent=5 // pred_check
        %p1514 = pneg %p1513
      $region62: #{_lambda_.10} parent=5 // pred_check_branch
        %1516 = sbr.rel (%p1514) target = $region64
      $region63: #{_lambda_.10} parent=5 // pred_region
        %s1517 = ssub.s32 %s15, 2
        // Predicated region
        $region65: #{_lambda_.10} parent=63 // pred_check
          %p1518 = pneg %p252
        $region66: #{_lambda_.10} parent=63 // pred_check_branch
          %1520 = sbr.rel (%p1518) target = $region68
        $region67: #{_lambda_.10} parent=63 // pred_region
          %p1521 = scmp.lt.s32.totalorder %s26, 1
          %s1522 = scalar_select %p1521, %s26, 1
          %p1523 = scmp.lt.s32.totalorder %s27, 1
          %s1524 = scalar_select %p1523, %s27, 1
          %s1525 = smul.addr %s1522, 2
          %s1526 = sadd.s32 %s1524, %s1525
          %s1527 = smul.addr %s1526, 4
          %s1528 = scalar_lea.vmem %s8, %s1527
        $region68: #{_lambda_.10} parent=63 // pred_fallthru
          _
      $region64: #{_lambda_.10} parent=5 // pred_fallthru
        _
    $region6: #{_lambda_.10} parent=1 // loop_footer
      %s19 = sadd.s32 1, %s15
    $region7: #{_lambda_.10} parent=1 // loop_footer_branch
      %14 = sbr.rel target = $region3
    $region8: #{_lambda_.10} parent=1 // loop_exit
      _
    %1529 = vsyncpa [#allocation3], 1
    %s1530 = scalar_lea.sflag [#allocation3], 1
    %1531 = vsyncpa %s1530, 1

// kernel: _lambda_.8
$region0: #{_lambda_.8}
  #allocation0 [shape = 'u32[]', space=smem, size = 0x4, offset = 0x4, fixed_abs, tag = 'smem constant byte address 0x4 - core index']
  #allocation1 [shape = 'u32[144,128]{1,0:T(1,128)}', space=vmem, size = 0x12000, scoped, tag = 'internal scratch']
  #allocation2 [shape = 'f32[8,128]{1,0:T(8,128)}', space=vmem, size = 0x1000, scoped, tag = 'scratch operand']
  %s0 = inlined_call_operand.vmem [shape: bf16[8,128], index: 0, kind: input, shape index: {}]
  %s1 = inlined_call_operand.vmem [shape: bf16[128,128], index: 1, kind: input, shape index: {}]
  %s2 = inlined_call_operand.vmem [shape: f32[8,1], index: 2, kind: input, shape index: {}]
  %s3 = inlined_call_operand.vmem [shape: f32[8,128], index: 3, kind: output, shape index: {}]
  %s4 = sld [smem:[#allocation0]]
  $region30: #{_lambda_.8} parent=0
    _
  %s6 = ssub.s32 1, %s4
  %s7 = scalar_select 0, %s6, %s4
  // Predicated region
  $region2: #{_lambda_.8} parent=0 // pred_check
    _
  $region3: #{_lambda_.8} parent=0 // pred_check_branch
    %9 = sbr.rel (0) target = $region5
  $region4: #{_lambda_.8} parent=0 // pred_region
    _
  $region5: #{_lambda_.8} parent=0 // pred_fallthru
    _
  // Predicated region
  $region6: #{_lambda_.8} parent=0 // pred_check
    _
  $region7: #{_lambda_.8} parent=0 // pred_check_branch
    %11 = sbr.rel (0) target = $region9
  $region8: #{_lambda_.8} parent=0 // pred_region
    _
  $region9: #{_lambda_.8} parent=0 // pred_fallthru
    _
  // Predicated region
  $region10: #{_lambda_.8} parent=0 // pred_check
    _
  $region11: #{_lambda_.8} parent=0 // pred_check_branch
    %13 = sbr.rel (0) target = $region13
  $region12: #{_lambda_.8} parent=0 // pred_region
    _
  $region13: #{_lambda_.8} parent=0 // pred_fallthru
    _
  %p15 = scmp.eq.s32.totalorder 0, 0
  // Predicated region
  $region14: #{_lambda_.8} parent=0 // pred_check
    %p16 = pneg %p15
  $region15: #{_lambda_.8} parent=0 // pred_check_branch
    %18 = sbr.rel (%p16) target = $region17
  $region16: #{_lambda_.8} parent=0 // pred_region
    %19 = vst [vmem:[#allocation2] sm:$0xff] 0.0
  $region17: #{_lambda_.8} parent=0 // pred_fallthru
    _
  %v20 = vld [vmem:[#allocation2] sm:$0xff]
  %v21 = vld [vmem:[%s0] sm:$0xf]
  %v22 = vld [vmem:[%s1] sm:$0xf]
  %v23 = vld [vmem:[%s1 + $0x4] sm:$0xf]
  %v24 = vld [vmem:[%s1 + $0x8] sm:$0xf]
  %v25 = vld [vmem:[%s1 + $0xc] sm:$0xf]
  %v26 = vld [vmem:[%s1 + $0x10] sm:$0xf]
  %v27 = vld [vmem:[%s1 + $0x14] sm:$0xf]
  %v28 = vld [vmem:[%s1 + $0x18] sm:$0xf]
  %v29 = vld [vmem:[%s1 + $0x1c] sm:$0xf]
  %v30 = vld [vmem:[%s1 + $0x20] sm:$0xf]
  %v31 = vld [vmem:[%s1 + $0x24] sm:$0xf]
  %v32 = vld [vmem:[%s1 + $0x28] sm:$0xf]
  %v33 = vld [vmem:[%s1 + $0x2c] sm:$0xf]
  %v34 = vld [vmem:[%s1 + $0x30] sm:$0xf]
  %v35 = vld [vmem:[%s1 + $0x34] sm:$0xf]
  %v36 = vld [vmem:[%s1 + $0x38] sm:$0xf]
  %v37 = vld [vmem:[%s1 + $0x3c] sm:$0xf]
  %v54 = vunpack.c.l.b16 %v22
  %v55 = vunpack.c.l.b16 %v23
  %v56 = vunpack.c.l.b16 %v24
  %v57 = vunpack.c.l.b16 %v25
  %v58 = vunpack.c.l.b16 %v26
  %v59 = vunpack.c.l.b16 %v27
  %v60 = vunpack.c.l.b16 %v28
  %v61 = vunpack.c.l.b16 %v29
  %v62 = vunpack.c.l.b16 %v30
  %v63 = vunpack.c.l.b16 %v31
  %v64 = vunpack.c.l.b16 %v32
  %v65 = vunpack.c.l.b16 %v33
  %v66 = vunpack.c.l.b16 %v34
  %v67 = vunpack.c.l.b16 %v35
  %v68 = vunpack.c.l.b16 %v36
  %v69 = vunpack.c.l.b16 %v37
  %v70 = vpack.c.b16 %v55, %v54
  %v71 = vpack.c.b16 %v57, %v56
  %v72 = vpack.c.b16 %v59, %v58
  %v73 = vpack.c.b16 %v61, %v60
  %v74 = vpack.c.b16 %v63, %v62
  %v75 = vpack.c.b16 %v65, %v64
  %v76 = vpack.c.b16 %v67, %v66
  %v77 = vpack.c.b16 %v69, %v68
  %86 = vmatprep.subr.bf16.mxu0 0
  %87 = vmatpush1.bf16.msra.mxu0 %v70
  %88 = vmatprep.subr.bf16.mxu0 0
  %89 = vmatpush1.bf16.msra.mxu0 %v71
  %90 = vmatprep.subr.bf16.mxu0 0
  %91 = vmatpush1.bf16.msra.mxu0 %v72
  %92 = vmatprep.subr.bf16.mxu0 0
  %93 = vmatpush1.bf16.msra.mxu0 %v73
  %94 = vmatprep.subr.bf16.mxu0 0
  %95 = vmatpush1.bf16.msra.mxu0 %v74
  %96 = vmatprep.subr.bf16.mxu0 0
  %97 = vmatpush1.bf16.msra.mxu0 %v75
  %98 = vmatprep.subr.bf16.mxu0 0
  %99 = vmatpush1.bf16.msra.mxu0 %v76
  %100 = vmatprep.subr.bf16.mxu0 0
  %101 = vmatpush1.bf16.msra.mxu0 %v77
  %102 = vmatprep.subr.bf16.mxu0 0
  %103 = vmatpush1.bf16.msra.mxu0 0
  %104 = vmatprep.subr.bf16.mxu0 0
  %105 = vmatpush1.bf16.msra.mxu0 0
  %106 = vmatprep.subr.bf16.mxu0 0
  %107 = vmatpush1.bf16.msra.mxu0 0
  %108 = vmatprep.subr.bf16.mxu0 0
  %109 = vmatpush1.bf16.msra.mxu0 0
  %110 = vmatprep.subr.bf16.mxu0 0
  %111 = vmatpush1.bf16.msra.mxu0 0
  %112 = vmatprep.subr.bf16.mxu0 0
  %113 = vmatpush1.bf16.msra.mxu0 0
  %114 = vmatprep.subr.bf16.mxu0 0
  %115 = vmatpush1.bf16.msra.mxu0 0
  %116 = vmatprep.subr.bf16.mxu0 0
  %117 = vmatpush1.bf16.msra.mxu0 0
  %118 = vmatprep.mubr.bf16.mxu0 0
  %119 = vmatmul.mubr.bf16.gmra.mrb[0].mxu0 %v21
  %v120 = vpop.f32.mrb[0].mxu0
  %v121 = vadd.f32 0.0, %v120
  %v122 = vpop.f32.mrb[0].mxu0
  %v123 = vpop.f32.mrb[0].mxu0
  %v124 = vpop.f32.mrb[0].mxu0
  %125 = vdwg.mxu0
  %v126 = vadd.f32 %v20, %v121
  %127 = vst [vmem:[#allocation2] sm:$0xff] %v126
  // Predicated region
  $region18: #{_lambda_.8} parent=0 // pred_check
    %p128 = pneg %p15
  $region19: #{_lambda_.8} parent=0 // pred_check_branch
    %130 = sbr.rel (%p128) target = $region21
  $region20: #{_lambda_.8} parent=0 // pred_region
    %v131 = vld [vmem:[#allocation2] sm:$0xff]
    %v132 = vld [vmem:[%s2] sm:$0xff]
    %134 = vset.pattern.permute.xlu0 0
    %135 = vperm.xlu0 %134, %v132
    %v136 = vpop.permute.xlu0 %135
    %v138 = vadd.f32 %v131, %v136
    %139 = vst [vmem:[%s3] sm:$0xff] %v138
  $region21: #{_lambda_.8} parent=0 // pred_fallthru
    _
  // Predicated region
  $region22: #{_lambda_.8} parent=0 // pred_check
    _
  $region23: #{_lambda_.8} parent=0 // pred_check_branch
    %141 = sbr.rel (0) target = $region25
  $region24: #{_lambda_.8} parent=0 // pred_region
    _
  $region25: #{_lambda_.8} parent=0 // pred_fallthru
    _
  // Predicated region
  $region26: #{_lambda_.8} parent=0 // pred_check
    _
  $region27: #{_lambda_.8} parent=0 // pred_check_branch
    %143 = sbr.rel (0) target = $region29
  $region28: #{_lambda_.8} parent=0 // pred_region
    _
  $region29: #{_lambda_.8} parent=0 // pred_fallthru
    _

// kernel: _lambda_.13
$region0: #{_lambda_.13}
  #allocation0 [shape = 'u32[]', space=smem, size = 0x4, offset = 0x4, fixed_abs, tag = 'smem constant byte address 0x4 - core index']
  #allocation1 [shape = 'u32[144,128]{1,0:T(1,128)}', space=vmem, size = 0x12000, scoped, tag = 'internal scratch']
  %s0 = inlined_call_operand.vmem [shape: f32[8,128], index: 0, kind: input, shape index: {}]
  %s1 = inlined_call_operand.vmem [shape: f32[8,128], index: 1, kind: input, shape index: {}]
  %s2 = inlined_call_operand.vmem [shape: f32[8,128], index: 2, kind: input, shape index: {}]
  %s3 = inlined_call_operand.vmem [shape: f32[8,128], index: 3, kind: output, shape index: {}]
  %s4 = sld [smem:[#allocation0]]
  $region22: #{_lambda_.13} parent=0
    _
  %s6 = ssub.s32 1, %s4
  %s7 = scalar_select 0, %s6, %s4
  // Predicated region
  $region2: #{_lambda_.13} parent=0 // pred_check
    _
  $region3: #{_lambda_.13} parent=0 // pred_check_branch
    %9 = sbr.rel (0) target = $region5
  $region4: #{_lambda_.13} parent=0 // pred_region
    _
  $region5: #{_lambda_.13} parent=0 // pred_fallthru
    _
  // Predicated region
  $region6: #{_lambda_.13} parent=0 // pred_check
    _
  $region7: #{_lambda_.13} parent=0 // pred_check_branch
    %11 = sbr.rel (0) target = $region9
  $region8: #{_lambda_.13} parent=0 // pred_region
    _
  $region9: #{_lambda_.13} parent=0 // pred_fallthru
    _
  // Predicated region
  $region10: #{_lambda_.13} parent=0 // pred_check
    _
  $region11: #{_lambda_.13} parent=0 // pred_check_branch
    %13 = sbr.rel (0) target = $region13
  $region12: #{_lambda_.13} parent=0 // pred_region
    _
  $region13: #{_lambda_.13} parent=0 // pred_fallthru
    _
  %v14 = vld [vmem:[%s0] sm:$0xff]
  %v15 = vsub.f32 0.0, %v14
  %v16 = vmul.f32 %v15, 1.442695
  %v17 = vpow.pop %v16
  %v18 = vadd.f32 %v17, 1.0
  %v19 = vrcp.pop %v18
  %v20 = vld [vmem:[%s1] sm:$0xff]
  %v21 = vmul.f32 %v19, %v20
  %v22 = vld [vmem:[%s2] sm:$0xff]
  %v23 = vadd.f32 %v21, %v22
  %24 = vst [vmem:[%s3] sm:$0xff] %v23
  // Predicated region
  $region14: #{_lambda_.13} parent=0 // pred_check
    _
  $region15: #{_lambda_.13} parent=0 // pred_check_branch
    %26 = sbr.rel (0) target = $region17
  $region16: #{_lambda_.13} parent=0 // pred_region
    _
  $region17: #{_lambda_.13} parent=0 // pred_fallthru
    _
  // Predicated region
  $region18: #{_lambda_.13} parent=0 // pred_check
    _
  $region19: #{_lambda_.13} parent=0 // pred_check_branch
    %28 = sbr.rel (0) target = $region21
  $region20: #{_lambda_.13} parent=0 // pred_region
    _
  $region21: #{_lambda_.13} parent=0 // pred_fallthru
    _

// kernel: _lambda_.11
$region0: #{_lambda_.11}
  #allocation0 [shape = 'u32[]', space=smem, size = 0x4, offset = 0x4, fixed_abs, tag = 'smem constant byte address 0x4 - core index']
  #allocation1 [shape = 'u32[144,128]{1,0:T(1,128)}', space=vmem, size = 0x12000, scoped, tag = 'internal scratch']
  #allocation2 [shape = 'f32[8,128]{1,0:T(8,128)}', space=vmem, size = 0x1000, scoped, tag = 'scratch operand']
  %s0 = inlined_call_operand.vmem [shape: bf16[8,128], index: 0, kind: input, shape index: {}]
  %s1 = inlined_call_operand.vmem [shape: bf16[128,128], index: 1, kind: input, shape index: {}]
  %s2 = inlined_call_operand.vmem [shape: f32[8,1], index: 2, kind: input, shape index: {}]
  %s3 = inlined_call_operand.vmem [shape: f32[8,128], index: 3, kind: output, shape index: {}]
  %s4 = sld [smem:[#allocation0]]
  $region30: #{_lambda_.11} parent=0
    _
  %s6 = ssub.s32 1, %s4
  %s7 = scalar_select 0, %s6, %s4
  // Predicated region
  $region2: #{_lambda_.11} parent=0 // pred_check
    _
  $region3: #{_lambda_.11} parent=0 // pred_check_branch
    %9 = sbr.rel (0) target = $region5
  $region4: #{_lambda_.11} parent=0 // pred_region
    _
  $region5: #{_lambda_.11} parent=0 // pred_fallthru
    _
  // Predicated region
  $region6: #{_lambda_.11} parent=0 // pred_check
    _
  $region7: #{_lambda_.11} parent=0 // pred_check_branch
    %11 = sbr.rel (0) target = $region9
  $region8: #{_lambda_.11} parent=0 // pred_region
    _
  $region9: #{_lambda_.11} parent=0 // pred_fallthru
    _
  // Predicated region
  $region10: #{_lambda_.11} parent=0 // pred_check
    _
  $region11: #{_lambda_.11} parent=0 // pred_check_branch
    %13 = sbr.rel (0) target = $region13
  $region12: #{_lambda_.11} parent=0 // pred_region
    _
  $region13: #{_lambda_.11} parent=0 // pred_fallthru
    _
  %p15 = scmp.eq.s32.totalorder 0, 0
  // Predicated region
  $region14: #{_lambda_.11} parent=0 // pred_check
    %p16 = pneg %p15
  $region15: #{_lambda_.11} parent=0 // pred_check_branch
    %18 = sbr.rel (%p16) target = $region17
  $region16: #{_lambda_.11} parent=0 // pred_region
    %19 = vst [vmem:[#allocation2] sm:$0xff] 0.0
  $region17: #{_lambda_.11} parent=0 // pred_fallthru
    _
  %v20 = vld [vmem:[#allocation2] sm:$0xff]
  %v21 = vld [vmem:[%s0] sm:$0xf]
  %v22 = vld [vmem:[%s1] sm:$0xf]
  %v23 = vld [vmem:[%s1 + $0x4] sm:$0xf]
  %v24 = vld [vmem:[%s1 + $0x8] sm:$0xf]
  %v25 = vld [vmem:[%s1 + $0xc] sm:$0xf]
  %v26 = vld [vmem:[%s1 + $0x10] sm:$0xf]
  %v27 = vld [vmem:[%s1 + $0x14] sm:$0xf]
  %v28 = vld [vmem:[%s1 + $0x18] sm:$0xf]
  %v29 = vld [vmem:[%s1 + $0x1c] sm:$0xf]
  %v30 = vld [vmem:[%s1 + $0x20] sm:$0xf]
  %v31 = vld [vmem:[%s1 + $0x24] sm:$0xf]
  %v32 = vld [vmem:[%s1 + $0x28] sm:$0xf]
  %v33 = vld [vmem:[%s1 + $0x2c] sm:$0xf]
  %v34 = vld [vmem:[%s1 + $0x30] sm:$0xf]
  %v35 = vld [vmem:[%s1 + $0x34] sm:$0xf]
  %v36 = vld [vmem:[%s1 + $0x38] sm:$0xf]
  %v37 = vld [vmem:[%s1 + $0x3c] sm:$0xf]
  %v54 = vunpack.c.l.b16 %v22
  %v55 = vunpack.c.l.b16 %v23
  %v56 = vunpack.c.l.b16 %v24
  %v57 = vunpack.c.l.b16 %v25
  %v58 = vunpack.c.l.b16 %v26
  %v59 = vunpack.c.l.b16 %v27
  %v60 = vunpack.c.l.b16 %v28
  %v61 = vunpack.c.l.b16 %v29
  %v62 = vunpack.c.l.b16 %v30
  %v63 = vunpack.c.l.b16 %v31
  %v64 = vunpack.c.l.b16 %v32
  %v65 = vunpack.c.l.b16 %v33
  %v66 = vunpack.c.l.b16 %v34
  %v67 = vunpack.c.l.b16 %v35
  %v68 = vunpack.c.l.b16 %v36
  %v69 = vunpack.c.l.b16 %v37
  %v70 = vpack.c.b16 %v55, %v54
  %v71 = vpack.c.b16 %v57, %v56
  %v72 = vpack.c.b16 %v59, %v58
  %v73 = vpack.c.b16 %v61, %v60
  %v74 = vpack.c.b16 %v63, %v62
  %v75 = vpack.c.b16 %v65, %v64
  %v76 = vpack.c.b16 %v67, %v66
  %v77 = vpack.c.b16 %v69, %v68
  %86 = vmatprep.subr.bf16.mxu0 0
  %87 = vmatpush1.bf16.msra.mxu0 %v70
  %88 = vmatprep.subr.bf16.mxu0 0
  %89 = vmatpush1.bf16.msra.mxu0 %v71
  %90 = vmatprep.subr.bf16.mxu0 0
  %91 = vmatpush1.bf16.msra.mxu0 %v72
  %92 = vmatprep.subr.bf16.mxu0 0
  %93 = vmatpush1.bf16.msra.mxu0 %v73
  %94 = vmatprep.subr.bf16.mxu0 0
  %95 = vmatpush1.bf16.msra.mxu0 %v74
  %96 = vmatprep.subr.bf16.mxu0 0
  %97 = vmatpush1.bf16.msra.mxu0 %v75
  %98 = vmatprep.subr.bf16.mxu0 0
  %99 = vmatpush1.bf16.msra.mxu0 %v76
  %100 = vmatprep.subr.bf16.mxu0 0
  %101 = vmatpush1.bf16.msra.mxu0 %v77
  %102 = vmatprep.subr.bf16.mxu0 0
  %103 = vmatpush1.bf16.msra.mxu0 0
  %104 = vmatprep.subr.bf16.mxu0 0
  %105 = vmatpush1.bf16.msra.mxu0 0
  %106 = vmatprep.subr.bf16.mxu0 0
  %107 = vmatpush1.bf16.msra.mxu0 0
  %108 = vmatprep.subr.bf16.mxu0 0
  %109 = vmatpush1.bf16.msra.mxu0 0
  %110 = vmatprep.subr.bf16.mxu0 0
  %111 = vmatpush1.bf16.msra.mxu0 0
  %112 = vmatprep.subr.bf16.mxu0 0
  %113 = vmatpush1.bf16.msra.mxu0 0
  %114 = vmatprep.subr.bf16.mxu0 0
  %115 = vmatpush1.bf16.msra.mxu0 0
  %116 = vmatprep.subr.bf16.mxu0 0
  %117 = vmatpush1.bf16.msra.mxu0 0
  %118 = vmatprep.mubr.bf16.mxu0 0
  %119 = vmatmul.mubr.bf16.gmra.mrb[0].mxu0 %v21
  %v120 = vpop.f32.mrb[0].mxu0
  %v121 = vadd.f32 0.0, %v120
  %v122 = vpop.f32.mrb[0].mxu0
  %v123 = vpop.f32.mrb[0].mxu0
  %v124 = vpop.f32.mrb[0].mxu0
  %125 = vdwg.mxu0
  %v126 = vadd.f32 %v20, %v121
  %127 = vst [vmem:[#allocation2] sm:$0xff] %v126
  // Predicated region
  $region18: #{_lambda_.11} parent=0 // pred_check
    %p128 = pneg %p15
  $region19: #{_lambda_.11} parent=0 // pred_check_branch
    %130 = sbr.rel (%p128) target = $region21
  $region20: #{_lambda_.11} parent=0 // pred_region
    %v131 = vld [vmem:[#allocation2] sm:$0xff]
    %v132 = vld [vmem:[%s2] sm:$0xff]
    %134 = vset.pattern.permute.xlu0 0
    %135 = vperm.xlu0 %134, %v132
    %v136 = vpop.permute.xlu0 %135
    %v138 = vadd.f32 %v131, %v136
    %v139 = vmax.f32 %v138, 0.0
    %140 = vst [vmem:[%s3] sm:$0xff] %v139
  $region21: #{_lambda_.11} parent=0 // pred_fallthru
    _
  // Predicated region
  $region22: #{_lambda_.11} parent=0 // pred_check
    _
  $region23: #{_lambda_.11} parent=0 // pred_check_branch
    %142 = sbr.rel (0) target = $region25
  $region24: #{_lambda_.11} parent=0 // pred_region
    _
  $region25: #{_lambda_.11} parent=0 // pred_fallthru
    _
  // Predicated region
  $region26: #{_lambda_.11} parent=0 // pred_check
    _
  $region27: #{_lambda_.11} parent=0 // pred_check_branch
    %144 = sbr.rel (0) target = $region29
  $region28: #{_lambda_.11} parent=0 // pred_region
    _
  $region29: #{_lambda_.11} parent=0 // pred_fallthru
    _

// kernel: _lambda_.7
$region0: #{_lambda_.7}
  #allocation0 [shape = 'u32[]', space=smem, size = 0x4, offset = 0x4, fixed_abs, tag = 'smem constant byte address 0x4 - core index']
  #allocation1 [shape = 'u32[144,128]{1,0:T(1,128)}', space=vmem, size = 0x12000, scoped, tag = 'internal scratch']
  %s0 = inlined_call_operand.vmem [shape: f32[2,4,2,102], index: 0, kind: input, shape index: {}]
  %s1 = inlined_call_operand.vmem [shape: f32[2,9,4,4], index: 1, kind: input, shape index: {}]
  %s2 = inlined_call_operand.vmem [shape: f32[2,4,1], index: 2, kind: input, shape index: {}]
  %s3 = inlined_call_operand.vmem [shape: f32[2,4,2,80], index: 3, kind: output, shape index: {}]
  %s4 = sld [smem:[#allocation0]]
  $region45: #{_lambda_.7} parent=0
    _
  %s6 = ssub.s32 1, %s4
  %s7 = scalar_select 0, %s6, %s4
  loop: start=0, step=1, limit=4
  $region2: #{_lambda_.7} parent=0 // loop_pre_header
    _
  $region3: #{_lambda_.7} parent=0 // loop_header
    %s9 = sphi 0, %s13
    %p10 = scmp.ge.s32.totalorder %s9, 4
    %s19 = sphi 0, %s21
    %s22 = sphi 0, %s19
    %s23 = sphi 0, %s22
    %s39 = sphi 0, %s23
    %s45 = sphi 0, %s47
    %s48 = sphi 0, %s45
    %s49 = sphi 0, %s48
    %s65 = sphi 0, %s49
    %s71 = sphi 0, %s73
    %s74 = sphi 0, %s71
    %s75 = sphi 0, %s74
    %s91 = sphi 0, %s75
    %s97 = sphi 0, %s99
    %s100 = sphi 0, %s97
    %s101 = sphi 0, %s100
    %s117 = sphi 0, %s101
  $region4: #{_lambda_.7} parent=0 // loop_header_branch
    %12 = sbr.rel (%p10) target = $region8
  $region5: #{_lambda_.7} parent=0 // loop_body
    %s14 = ssub.s32 %s9, 1
    %s15 = ssub.s32 %s9, 2
    %s16 = sadd.s32 %s9, 1
    %s17 = ssub.s32 %s9, %s16
    %p18 = scmp.eq.s32.totalorder %s17, 0
    %s20 = sadd.s32 %s19, 1
    %s21 = scalar_select %p18, %s19, %s20
    %p24 = pneg %p18
    %p25 = scmp.eq.s32.totalorder %s9, 1
    %p26 = por %p24, %p25
    %p27 = scmp.ne.s32.totalorder %s19, %s22
    %p28 = scmp.eq.s32.totalorder %s9, 0
    %p29 = por %p27, %p28
    %p30 = scmp.ne.s32.totalorder %s19, %s22
    %p31 = scmp.eq.s32.totalorder %s14, 1
    %p32 = por %p30, %p31
    %p33 = scmp.ne.s32.totalorder %s22, %s23
    %p34 = scmp.eq.s32.totalorder %s14, 0
    %p35 = por %p33, %p34
    %p36 = scmp.ne.s32.totalorder %s22, %s23
    %p37 = scmp.eq.s32.totalorder %s15, 1
    %p38 = por %p36, %p37
    %p40 = scmp.ne.s32.totalorder %s23, %s39
    %p41 = scmp.eq.s32.totalorder %s15, 0
    %p42 = por %p40, %p41
    %s43 = ssub.s32 %s9, %s16
    %p44 = scmp.eq.s32.totalorder %s43, 0
    %s46 = sadd.s32 %s45, 1
    %s47 = scalar_select %p44, %s45, %s46
    %p50 = pneg %p44
    %p51 = scmp.eq.s32.totalorder %s9, 1
    %p52 = por %p50, %p51
    %p53 = scmp.ne.s32.totalorder %s45, %s48
    %p54 = scmp.eq.s32.totalorder %s9, 0
    %p55 = por %p53, %p54
    %p56 = scmp.ne.s32.totalorder %s45, %s48
    %p57 = scmp.eq.s32.totalorder %s14, 1
    %p58 = por %p56, %p57
    %p59 = scmp.ne.s32.totalorder %s48, %s49
    %p60 = scmp.eq.s32.totalorder %s14, 0
    %p61 = por %p59, %p60
    %p62 = scmp.ne.s32.totalorder %s48, %s49
    %p63 = scmp.eq.s32.totalorder %s15, 1
    %p64 = por %p62, %p63
    %p66 = scmp.ne.s32.totalorder %s49, %s65
    %p67 = scmp.eq.s32.totalorder %s15, 0
    %p68 = por %p66, %p67
    %s69 = ssub.s32 %s9, %s16
    %p70 = scmp.eq.s32.totalorder %s69, 0
    %s72 = sadd.s32 %s71, 1
    %s73 = scalar_select %p70, %s71, %s72
    %p76 = pneg %p70
    %p77 = scmp.eq.s32.totalorder %s9, 1
    %p78 = por %p76, %p77
    %p79 = scmp.ne.s32.totalorder %s71, %s74
    %p80 = scmp.eq.s32.totalorder %s9, 0
    %p81 = por %p79, %p80
    %p82 = scmp.ne.s32.totalorder %s71, %s74
    %p83 = scmp.eq.s32.totalorder %s14, 1
    %p84 = por %p82, %p83
    %p85 = scmp.ne.s32.totalorder %s74, %s75
    %p86 = scmp.eq.s32.totalorder %s14, 0
    %p87 = por %p85, %p86
    %p88 = scmp.ne.s32.totalorder %s74, %s75
    %p89 = scmp.eq.s32.totalorder %s15, 1
    %p90 = por %p88, %p89
    %p92 = scmp.ne.s32.totalorder %s75, %s91
    %p93 = scmp.eq.s32.totalorder %s15, 0
    %p94 = por %p92, %p93
    %s95 = ssub.s32 %s9, %s16
    %p96 = scmp.eq.s32.totalorder %s95, 0
    %s98 = sadd.s32 %s97, 1
    %s99 = scalar_select %p96, %s97, %s98
    %p102 = pneg %p96
    %p103 = scmp.eq.s32.totalorder %s9, 1
    %p104 = por %p102, %p103
    %p105 = scmp.ne.s32.totalorder %s97, %s100
    %p106 = scmp.eq.s32.totalorder %s9, 0
    %p107 = por %p105, %p106
    %p108 = scmp.ne.s32.totalorder %s97, %s100
    %p109 = scmp.eq.s32.totalorder %s14, 1
    %p110 = por %p108, %p109
    %p111 = scmp.ne.s32.totalorder %s100, %s101
    %p112 = scmp.eq.s32.totalorder %s14, 0
    %p113 = por %p111, %p112
    %p114 = scmp.ne.s32.totalorder %s100, %s101
    %p115 = scmp.eq.s32.totalorder %s15, 1
    %p116 = por %p114, %p115
    %p118 = scmp.ne.s32.totalorder %s101, %s117
    %p119 = scmp.eq.s32.totalorder %s15, 0
    %p120 = por %p118, %p119
    %p121 = scmp.le.s32.totalorder 1, %s9
    %p122 = scmp.lt.s32.totalorder %s9, 3
    %p123 = pnand %p121, %p122
    %p124 = pneg %p123
    // Predicated region
    $region9: #{_lambda_.7} parent=5 // pred_check
      _
    $region10: #{_lambda_.7} parent=5 // pred_check_branch
      %126 = sbr.rel (%p123) target = $region12
    $region11: #{_lambda_.7} parent=5 // pred_region
      %s127 = ssub.s32 %s9, 1
    $region12: #{_lambda_.7} parent=5 // pred_fallthru
      _
    %p128 = scmp.lt.s32.totalorder %s9, 2
    // Predicated region
    $region13: #{_lambda_.7} parent=5 // pred_check
      %p129 = pneg %p128
    $region14: #{_lambda_.7} parent=5 // pred_check_branch
      %131 = sbr.rel (%p129) target = $region16
    $region15: #{_lambda_.7} parent=5 // pred_region
      // Predicated region
      $region17: #{_lambda_.7} parent=15 // pred_check
        %p132 = pneg %p29
      $region18: #{_lambda_.7} parent=15 // pred_check_branch
        %134 = sbr.rel (%p132) target = $region20
      $region19: #{_lambda_.7} parent=15 // pred_region
        %p135 = scmp.lt.s32.totalorder %s9, 1
        %s136 = scalar_select %p135, %s9, 1
        %s137 = smul.addr %s136, 4
        %s138 = smul.addr %s137, 2
        %s139 = scalar_lea.vmem %s0, %s138
      $region20: #{_lambda_.7} parent=15 // pred_fallthru
        _
      // Predicated region
      $region21: #{_lambda_.7} parent=15 // pred_check
        %p140 = pneg %p55
      $region22: #{_lambda_.7} parent=15 // pred_check_branch
        %142 = sbr.rel (%p140) target = $region24
      $region23: #{_lambda_.7} parent=15 // pred_region
        %p143 = scmp.lt.s32.totalorder %s9, 1
        %s144 = scalar_select %p143, %s9, 1
        %s145 = smul.addr %s144, 9
        %s146 = smul.addr %s145, 4
        %s147 = scalar_lea.vmem %s1, %s146
      $region24: #{_lambda_.7} parent=15 // pred_fallthru
        _
      // Predicated region
      $region25: #{_lambda_.7} parent=15 // pred_check
        %p148 = pneg %p81
      $region26: #{_lambda_.7} parent=15 // pred_check_branch
        %150 = sbr.rel (%p148) target = $region28
      $region27: #{_lambda_.7} parent=15 // pred_region
        %p151 = scmp.lt.s32.totalorder %s9, 1
        %s152 = scalar_select %p151, %s9, 1
        %s153 = smul.addr %s152, 4
        %s154 = scalar_lea.vmem %s2, %s153
      $region28: #{_lambda_.7} parent=15 // pred_fallthru
        _
    $region16: #{_lambda_.7} parent=5 // pred_fallthru
      _
    %p155 = scmp.le.s32.totalorder 1, %s9
    %p156 = scmp.lt.s32.totalorder %s9, 3
    %p157 = pnand %p155, %p156
    %p158 = pneg %p157
    // Predicated region
    $region29: #{_lambda_.7} parent=5 // pred_check
      _
    $region30: #{_lambda_.7} parent=5 // pred_check_branch
      %160 = sbr.rel (%p157) target = $region32
    $region31: #{_lambda_.7} parent=5 // pred_region
      %s161 = ssub.s32 %s9, 1
      %p162 = scmp.lt.s32.totalorder %s14, 1
      %s163 = scalar_select %p162, %s14, 1
      %s164 = smul.addr %s163, 4
      %s165 = smul.addr %s164, 2
      %s166 = scalar_lea.vmem %s0, %s165
      %p167 = pneg %p35
      %p168 = pneg %p32
      %p169 = scmp.lt.s32.totalorder %s14, 1
      %s170 = scalar_select %p169, %s14, 1
      %s171 = smul.addr %s170, 9
      %s172 = smul.addr %s171, 4
      %s173 = scalar_lea.vmem %s1, %s172
      %p174 = pneg %p61
      %p175 = pneg %p58
      %p176 = scmp.lt.s32.totalorder %s14, 1
      %s177 = scalar_select %p176, %s14, 1
      %s178 = smul.addr %s177, 4
      %s179 = scalar_lea.vmem %s2, %s178
      %p180 = pneg %p87
      %p181 = pneg %p84
      %p182 = pneg %p113
      %p183 = pneg %p110
      %p184 = scmp.lt.s32.totalorder %s14, 1
      %s185 = scalar_select %p184, %s14, 1
      %s186 = smul.addr %s185, 4
      %s187 = smul.addr %s186, 2
      %s188 = scalar_lea.vmem %s3, %s187
      %p189 = scmp.lt.s32.totalorder %s14, 1
      %s190 = scalar_select %p189, %s14, 1
      %s191 = smul.addr %s190, 4
      %s192 = smul.addr %s191, 2
      %s193 = scalar_lea.vmem %s0, %s192
      %p194 = scmp.lt.s32.totalorder %s14, 1
      %s195 = scalar_select %p194, %s14, 1
      %s196 = smul.addr %s195, 9
      %s197 = smul.addr %s196, 4
      %s198 = scalar_lea.vmem %s1, %s197
      %p199 = scmp.lt.s32.totalorder %s14, 1
      %s200 = scalar_select %p199, %s14, 1
      %s201 = smul.addr %s200, 4
      %s202 = scalar_lea.vmem %s2, %s201
      %p203 = scmp.lt.s32.totalorder %s14, 1
      %s204 = scalar_select %p203, %s14, 1
      %s205 = smul.addr %s204, 4
      %s206 = smul.addr %s205, 2
      %s207 = scalar_lea.vmem %s3, %s206
      %v208 = vld [vmem:[%s193] sm:$0x1]
      %v209 = vld [vmem:[%s193 + $0x2] sm:$0x1]
      %v210 = vld [vmem:[%s193 + $0x4] sm:$0x1]
      %v211 = vld [vmem:[%s193 + $0x6] sm:$0x1]
      %v212 = vld [vmem:[%s198] sm:$0xf]
      %s213 = scalar_lea.vmem %s198, 4
      %v214 = vld [vmem:[%s213] sm:$0xf]
      %v219 = vrot.slane %v209, 7
      %vm220 = vcmask 1041409
      %v221 = vsel %vm220, %v219, %v208
      %v222 = vrot.slane %v210, 6
      %vm223 = vcmask 1042434
      %v224 = vsel %vm223, %v222, %v221
      %v225 = vrot.slane %v211, 5
      %vm226 = vcmask 1043459
      %v227 = vsel %vm226, %v225, %v224
      %228 = vrot.lane.b32.xlu0 %v227, 127
      %v229 = vpop.permute.xlu0 %228
      %vm230 = vcmask 31744
      %v232 = vsel %vm230, %v214, 0
      %vm234 = vcmask 1043456
      %v235 = vsel %vm234, %v229, 0
      %237 = vmatprep.subr.mxu0 0.0
      %238 = vmatpush1.msra.mxu0 %v235
      %239 = vmatprep.subr.mxu0 0.0
      %240 = vmatpush1.msra.mxu0 0.0
      %241 = vmatprep.subr.mxu0 0.0
      %242 = vmatpush1.msra.mxu0 0.0
      %243 = vmatprep.subr.mxu0 0.0
      %244 = vmatpush1.msra.mxu0 0.0
      %245 = vmatprep.subr.mxu0 0.0
      %246 = vmatpush1.msra.mxu0 0.0
      %247 = vmatprep.subr.mxu0 0.0
      %248 = vmatpush1.msra.mxu0 0.0
      %249 = vmatprep.subr.mxu0 0.0
      %250 = vmatpush1.msra.mxu0 0.0
      %251 = vmatprep.subr.mxu0 0.0
      %252 = vmatpush1.msra.mxu0 0.0
      %253 = vmatprep.subr.mxu0 0.0
      %254 = vmatpush1.msra.mxu0 0.0
      %255 = vmatprep.subr.mxu0 0.0
      %256 = vmatpush1.msra.mxu0 0.0
      %257 = vmatprep.subr.mxu0 0.0
      %258 = vmatpush1.msra.mxu0 0.0
      %259 = vmatprep.subr.mxu0 0.0
      %260 = vmatpush1.msra.mxu0 0.0
      %261 = vmatprep.subr.mxu0 0.0
      %262 = vmatpush1.msra.mxu0 0.0
      %263 = vmatprep.subr.mxu0 0.0
      %264 = vmatpush1.msra.mxu0 0.0
      %265 = vmatprep.subr.mxu0 0.0
      %266 = vmatpush1.msra.mxu0 0.0
      %267 = vmatprep.subr.mxu0 0.0
      %268 = vmatpush1.msra.mxu0 0.0
      %269 = vmatprep.subr.mxu0 0.0
      %270 = vmatpush1.msra.mxu0 0.0
      %271 = vmatprep.subr.mxu0 0.0
      %272 = vmatpush1.msra.mxu0 0.0
      %273 = vmatprep.subr.mxu0 0.0
      %274 = vmatpush1.msra.mxu0 0.0
      %275 = vmatprep.subr.mxu0 0.0
      %276 = vmatpush1.msra.mxu0 0.0
      %277 = vmatprep.subr.mxu0 0.0
      %278 = vmatpush1.msra.mxu0 0.0
      %279 = vmatprep.subr.mxu0 0.0
      %280 = vmatpush1.msra.mxu0 0.0
      %281 = vmatprep.subr.mxu0 0.0
      %282 = vmatpush1.msra.mxu0 0.0
      %283 = vmatprep.subr.mxu0 0.0
      %284 = vmatpush1.msra.mxu0 0.0
      %285 = vmatprep.subr.mxu0 0.0
      %286 = vmatpush1.msra.mxu0 0.0
      %287 = vmatprep.subr.mxu0 0.0
      %288 = vmatpush1.msra.mxu0 0.0
      %289 = vmatprep.subr.mxu0 0.0
      %290 = vmatpush1.msra.mxu0 0.0
      %291 = vmatprep.subr.mxu0 0.0
      %292 = vmatpush1.msra.mxu0 0.0
      %293 = vmatprep.subr.mxu0 0.0
      %294 = vmatpush1.msra.mxu0 0.0
      %295 = vmatprep.subr.mxu0 0.0
      %296 = vmatpush1.msra.mxu0 0.0
      %297 = vmatprep.subr.mxu0 0.0
      %298 = vmatpush1.msra.mxu0 0.0
      %299 = vmatprep.subr.mxu0 0.0
      %300 = vmatpush1.msra.mxu0 0.0
      %301 = vmatprep.mubr.f32.mxu0 0.0
      %302 = vmatmul.mubr.f32.gmra.mrb[0].mxu0 %v232
      %v303 = vpop.f32.mrb[0].mxu0
      %v304 = vadd.f32 0.0, %v303
      %v305 = vpop.f32.mrb[0].mxu0
      %306 = vdwg.mxu0
      %v308 = vsel %vm230, %v212, 0
      %v310 = vsel %vm234, %v227, 0
      %312 = vmatprep.subr.mxu0 0.0
      %313 = vmatpush1.msra.mxu0 %v310
      %314 = vmatprep.subr.mxu0 0.0
      %315 = vmatpush1.msra.mxu0 0.0
      %316 = vmatprep.subr.mxu0 0.0
      %317 = vmatpush1.msra.mxu0 0.0
      %318 = vmatprep.subr.mxu0 0.0
      %319 = vmatpush1.msra.mxu0 0.0
      %320 = vmatprep.subr.mxu0 0.0
      %321 = vmatpush1.msra.mxu0 0.0
      %322 = vmatprep.subr.mxu0 0.0
      %323 = vmatpush1.msra.mxu0 0.0
      %324 = vmatprep.subr.mxu0 0.0
      %325 = vmatpush1.msra.mxu0 0.0
      %326 = vmatprep.subr.mxu0 0.0
      %327 = vmatpush1.msra.mxu0 0.0
      %328 = vmatprep.subr.mxu0 0.0
      %329 = vmatpush1.msra.mxu0 0.0
      %330 = vmatprep.subr.mxu0 0.0
      %331 = vmatpush1.msra.mxu0 0.0
      %332 = vmatprep.subr.mxu0 0.0
      %333 = vmatpush1.msra.mxu0 0.0
      %334 = vmatprep.subr.mxu0 0.0
      %335 = vmatpush1.msra.mxu0 0.0
      %336 = vmatprep.subr.mxu0 0.0
      %337 = vmatpush1.msra.mxu0 0.0
      %338 = vmatprep.subr.mxu0 0.0
      %339 = vmatpush1.msra.mxu0 0.0
      %340 = vmatprep.subr.mxu0 0.0
      %341 = vmatpush1.msra.mxu0 0.0
      %342 = vmatprep.subr.mxu0 0.0
      %343 = vmatpush1.msra.mxu0 0.0
      %344 = vmatprep.subr.mxu0 0.0
      %345 = vmatpush1.msra.mxu0 0.0
      %346 = vmatprep.subr.mxu0 0.0
      %347 = vmatpush1.msra.mxu0 0.0
      %348 = vmatprep.subr.mxu0 0.0
      %349 = vmatpush1.msra.mxu0 0.0
      %350 = vmatprep.subr.mxu0 0.0
      %351 = vmatpush1.msra.mxu0 0.0
      %352 = vmatprep.subr.mxu0 0.0
      %353 = vmatpush1.msra.mxu0 0.0
      %354 = vmatprep.subr.mxu0 0.0
      %355 = vmatpush1.msra.mxu0 0.0
      %356 = vmatprep.subr.mxu0 0.0
      %357 = vmatpush1.msra.mxu0 0.0
      %358 = vmatprep.subr.mxu0 0.0
      %359 = vmatpush1.msra.mxu0 0.0
      %360 = vmatprep.subr.mxu0 0.0
      %361 = vmatpush1.msra.mxu0 0.0
      %362 = vmatprep.subr.mxu0 0.0
      %363 = vmatpush1.msra.mxu0 0.0
      %364 = vmatprep.subr.mxu0 0.0
      %365 = vmatpush1.msra.mxu0 0.0
      %366 = vmatprep.subr.mxu0 0.0
      %367 = vmatpush1.msra.mxu0 0.0
      %368 = vmatprep.subr.mxu0 0.0
      %369 = vmatpush1.msra.mxu0 0.0
      %370 = vmatprep.subr.mxu0 0.0
      %371 = vmatpush1.msra.mxu0 0.0
      %372 = vmatprep.subr.mxu0 0.0
      %373 = vmatpush1.msra.mxu0 0.0
      %374 = vmatprep.subr.mxu0 0.0
      %375 = vmatpush1.msra.mxu0 0.0
      %376 = vmatprep.mubr.f32.mxu0 0.0
      %377 = vmatmul.mubr.f32.gmra.mrb[0].mxu0 %v308
      %v378 = vpop.f32.mrb[0].mxu0
      %v379 = vadd.f32 %v304, %v378
      %v380 = vpop.f32.mrb[0].mxu0
      %381 = vdwg.mxu0
      %s382 = scalar_lea.vmem %s198, 8
      %v383 = vld [vmem:[%s382] sm:$0xf]
      %384 = vrot.lane.b32.xlu0 %v227, 126
      %v385 = vpop.permute.xlu0 %384
      %v387 = vsel %vm230, %v383, 0
      %v389 = vsel %vm234, %v385, 0
      %391 = vmatprep.subr.mxu0 0.0
      %392 = vmatpush1.msra.mxu0 %v389
      %393 = vmatprep.subr.mxu0 0.0
      %394 = vmatpush1.msra.mxu0 0.0
      %395 = vmatprep.subr.mxu0 0.0
      %396 = vmatpush1.msra.mxu0 0.0
      %397 = vmatprep.subr.mxu0 0.0
      %398 = vmatpush1.msra.mxu0 0.0
      %399 = vmatprep.subr.mxu0 0.0
      %400 = vmatpush1.msra.mxu0 0.0
      %401 = vmatprep.subr.mxu0 0.0
      %402 = vmatpush1.msra.mxu0 0.0
      %403 = vmatprep.subr.mxu0 0.0
      %404 = vmatpush1.msra.mxu0 0.0
      %405 = vmatprep.subr.mxu0 0.0
      %406 = vmatpush1.msra.mxu0 0.0
      %407 = vmatprep.subr.mxu0 0.0
      %408 = vmatpush1.msra.mxu0 0.0
      %409 = vmatprep.subr.mxu0 0.0
      %410 = vmatpush1.msra.mxu0 0.0
      %411 = vmatprep.subr.mxu0 0.0
      %412 = vmatpush1.msra.mxu0 0.0
      %413 = vmatprep.subr.mxu0 0.0
      %414 = vmatpush1.msra.mxu0 0.0
      %415 = vmatprep.subr.mxu0 0.0
      %416 = vmatpush1.msra.mxu0 0.0
      %417 = vmatprep.subr.mxu0 0.0
      %418 = vmatpush1.msra.mxu0 0.0
      %419 = vmatprep.subr.mxu0 0.0
      %420 = vmatpush1.msra.mxu0 0.0
      %421 = vmatprep.subr.mxu0 0.0
      %422 = vmatpush1.msra.mxu0 0.0
      %423 = vmatprep.subr.mxu0 0.0
      %424 = vmatpush1.msra.mxu0 0.0
      %425 = vmatprep.subr.mxu0 0.0
      %426 = vmatpush1.msra.mxu0 0.0
      %427 = vmatprep.subr.mxu0 0.0
      %428 = vmatpush1.msra.mxu0 0.0
      %429 = vmatprep.subr.mxu0 0.0
      %430 = vmatpush1.msra.mxu0 0.0
      %431 = vmatprep.subr.mxu0 0.0
      %432 = vmatpush1.msra.mxu0 0.0
      %433 = vmatprep.subr.mxu0 0.0
      %434 = vmatpush1.msra.mxu0 0.0
      %435 = vmatprep.subr.mxu0 0.0
      %436 = vmatpush1.msra.mxu0 0.0
      %437 = vmatprep.subr.mxu0 0.0
      %438 = vmatpush1.msra.mxu0 0.0
      %439 = vmatprep.subr.mxu0 0.0
      %440 = vmatpush1.msra.mxu0 0.0
      %441 = vmatprep.subr.mxu0 0.0
      %442 = vmatpush1.msra.mxu0 0.0
      %443 = vmatprep.subr.mxu0 0.0
      %444 = vmatpush1.msra.mxu0 0.0
      %445 = vmatprep.subr.mxu0 0.0
      %446 = vmatpush1.msra.mxu0 0.0
      %447 = vmatprep.subr.mxu0 0.0
      %448 = vmatpush1.msra.mxu0 0.0
      %449 = vmatprep.subr.mxu0 0.0
      %450 = vmatpush1.msra.mxu0 0.0
      %451 = vmatprep.subr.mxu0 0.0
      %452 = vmatpush1.msra.mxu0 0.0
      %453 = vmatprep.subr.mxu0 0.0
      %454 = vmatpush1.msra.mxu0 0.0
      %455 = vmatprep.mubr.f32.mxu0 0.0
      %456 = vmatmul.mubr.f32.gmra.mrb[0].mxu0 %v387
      %v457 = vpop.f32.mrb[0].mxu0
      %v458 = vadd.f32 0.0, %v457
      %v459 = vpop.f32.mrb[0].mxu0
      %460 = vdwg.mxu0
      %v461 = vadd.f32 %v379, %v458
      %s462 = scalar_lea.vmem %s198, 12
      %v463 = vld [vmem:[%s462] sm:$0xf]
      %464 = vrot.lane.b32.xlu0 %v227, 118
      %v465 = vpop.permute.xlu0 %464
      %v467 = vsel %vm230, %v463, 0
      %v469 = vsel %vm234, %v465, 0
      %471 = vmatprep.subr.mxu0 0.0
      %472 = vmatpush1.msra.mxu0 %v469
      %473 = vmatprep.subr.mxu0 0.0
      %474 = vmatpush1.msra.mxu0 0.0
      %475 = vmatprep.subr.mxu0 0.0
      %476 = vmatpush1.msra.mxu0 0.0
      %477 = vmatprep.subr.mxu0 0.0
      %478 = vmatpush1.msra.mxu0 0.0
      %479 = vmatprep.subr.mxu0 0.0
      %480 = vmatpush1.msra.mxu0 0.0
      %481 = vmatprep.subr.mxu0 0.0
      %482 = vmatpush1.msra.mxu0 0.0
      %483 = vmatprep.subr.mxu0 0.0
      %484 = vmatpush1.msra.mxu0 0.0
      %485 = vmatprep.subr.mxu0 0.0
      %486 = vmatpush1.msra.mxu0 0.0
      %487 = vmatprep.subr.mxu0 0.0
      %488 = vmatpush1.msra.mxu0 0.0
      %489 = vmatprep.subr.mxu0 0.0
      %490 = vmatpush1.msra.mxu0 0.0
      %491 = vmatprep.subr.mxu0 0.0
      %492 = vmatpush1.msra.mxu0 0.0
      %493 = vmatprep.subr.mxu0 0.0
      %494 = vmatpush1.msra.mxu0 0.0
      %495 = vmatprep.subr.mxu0 0.0
      %496 = vmatpush1.msra.mxu0 0.0
      %497 = vmatprep.subr.mxu0 0.0
      %498 = vmatpush1.msra.mxu0 0.0
      %499 = vmatprep.subr.mxu0 0.0
      %500 = vmatpush1.msra.mxu0 0.0
      %501 = vmatprep.subr.mxu0 0.0
      %502 = vmatpush1.msra.mxu0 0.0
      %503 = vmatprep.subr.mxu0 0.0
      %504 = vmatpush1.msra.mxu0 0.0
      %505 = vmatprep.subr.mxu0 0.0
      %506 = vmatpush1.msra.mxu0 0.0
      %507 = vmatprep.subr.mxu0 0.0
      %508 = vmatpush1.msra.mxu0 0.0
      %509 = vmatprep.subr.mxu0 0.0
      %510 = vmatpush1.msra.mxu0 0.0
      %511 = vmatprep.subr.mxu0 0.0
      %512 = vmatpush1.msra.mxu0 0.0
      %513 = vmatprep.subr.mxu0 0.0
      %514 = vmatpush1.msra.mxu0 0.0
      %515 = vmatprep.subr.mxu0 0.0
      %516 = vmatpush1.msra.mxu0 0.0
      %517 = vmatprep.subr.mxu0 0.0
      %518 = vmatpush1.msra.mxu0 0.0
      %519 = vmatprep.subr.mxu0 0.0
      %520 = vmatpush1.msra.mxu0 0.0
      %521 = vmatprep.subr.mxu0 0.0
      %522 = vmatpush1.msra.mxu0 0.0
      %523 = vmatprep.subr.mxu0 0.0
      %524 = vmatpush1.msra.mxu0 0.0
      %525 = vmatprep.subr.mxu0 0.0
      %526 = vmatpush1.msra.mxu0 0.0
      %527 = vmatprep.subr.mxu0 0.0
      %528 = vmatpush1.msra.mxu0 0.0
      %529 = vmatprep.subr.mxu0 0.0
      %530 = vmatpush1.msra.mxu0 0.0
      %531 = vmatprep.subr.mxu0 0.0
      %532 = vmatpush1.msra.mxu0 0.0
      %533 = vmatprep.subr.mxu0 0.0
      %534 = vmatpush1.msra.mxu0 0.0
      %535 = vmatprep.mubr.f32.mxu0 0.0
      %536 = vmatmul.mubr.f32.gmra.mrb[0].mxu0 %v467
      %v537 = vpop.f32.mrb[0].mxu0
      %v538 = vadd.f32 0.0, %v537
      %v539 = vpop.f32.mrb[0].mxu0
      %540 = vdwg.mxu0
      %v541 = vadd.f32 %v461, %v538
      %s542 = scalar_lea.vmem %s198, 16
      %v543 = vld [vmem:[%s542] sm:$0xf]
      %544 = vrot.lane.b32.xlu0 %v227, 117
      %v545 = vpop.permute.xlu0 %544
      %v547 = vsel %vm230, %v543, 0
      %v549 = vsel %vm234, %v545, 0
      %551 = vmatprep.subr.mxu0 0.0
      %552 = vmatpush1.msra.mxu0 %v549
      %553 = vmatprep.subr.mxu0 0.0
      %554 = vmatpush1.msra.mxu0 0.0
      %555 = vmatprep.subr.mxu0 0.0
      %556 = vmatpush1.msra.mxu0 0.0
      %557 = vmatprep.subr.mxu0 0.0
      %558 = vmatpush1.msra.mxu0 0.0
      %559 = vmatprep.subr.mxu0 0.0
      %560 = vmatpush1.msra.mxu0 0.0
      %561 = vmatprep.subr.mxu0 0.0
      %562 = vmatpush1.msra.mxu0 0.0
      %563 = vmatprep.subr.mxu0 0.0
      %564 = vmatpush1.msra.mxu0 0.0
      %565 = vmatprep.subr.mxu0 0.0
      %566 = vmatpush1.msra.mxu0 0.0
      %567 = vmatprep.subr.mxu0 0.0
      %568 = vmatpush1.msra.mxu0 0.0
      %569 = vmatprep.subr.mxu0 0.0
      %570 = vmatpush1.msra.mxu0 0.0
      %571 = vmatprep.subr.mxu0 0.0
      %572 = vmatpush1.msra.mxu0 0.0
      %573 = vmatprep.subr.mxu0 0.0
      %574 = vmatpush1.msra.mxu0 0.0
      %575 = vmatprep.subr.mxu0 0.0
      %576 = vmatpush1.msra.mxu0 0.0
      %577 = vmatprep.subr.mxu0 0.0
      %578 = vmatpush1.msra.mxu0 0.0
      %579 = vmatprep.subr.mxu0 0.0
      %580 = vmatpush1.msra.mxu0 0.0
      %581 = vmatprep.subr.mxu0 0.0
      %582 = vmatpush1.msra.mxu0 0.0
      %583 = vmatprep.subr.mxu0 0.0
      %584 = vmatpush1.msra.mxu0 0.0
      %585 = vmatprep.subr.mxu0 0.0
      %586 = vmatpush1.msra.mxu0 0.0
      %587 = vmatprep.subr.mxu0 0.0
      %588 = vmatpush1.msra.mxu0 0.0
      %589 = vmatprep.subr.mxu0 0.0
      %590 = vmatpush1.msra.mxu0 0.0
      %591 = vmatprep.subr.mxu0 0.0
      %592 = vmatpush1.msra.mxu0 0.0
      %593 = vmatprep.subr.mxu0 0.0
      %594 = vmatpush1.msra.mxu0 0.0
      %595 = vmatprep.subr.mxu0 0.0
      %596 = vmatpush1.msra.mxu0 0.0
      %597 = vmatprep.subr.mxu0 0.0
      %598 = vmatpush1.msra.mxu0 0.0
      %599 = vmatprep.subr.mxu0 0.0
      %600 = vmatpush1.msra.mxu0 0.0
      %601 = vmatprep.subr.mxu0 0.0
      %602 = vmatpush1.msra.mxu0 0.0
      %603 = vmatprep.subr.mxu0 0.0
      %604 = vmatpush1.msra.mxu0 0.0
      %605 = vmatprep.subr.mxu0 0.0
      %606 = vmatpush1.msra.mxu0 0.0
      %607 = vmatprep.subr.mxu0 0.0
      %608 = vmatpush1.msra.mxu0 0.0
      %609 = vmatprep.subr.mxu0 0.0
      %610 = vmatpush1.msra.mxu0 0.0
      %611 = vmatprep.subr.mxu0 0.0
      %612 = vmatpush1.msra.mxu0 0.0
      %613 = vmatprep.subr.mxu0 0.0
      %614 = vmatpush1.msra.mxu0 0.0
      %615 = vmatprep.mubr.f32.mxu0 0.0
      %616 = vmatmul.mubr.f32.gmra.mrb[0].mxu0 %v547
      %v617 = vpop.f32.mrb[0].mxu0
      %v618 = vadd.f32 0.0, %v617
      %v619 = vpop.f32.mrb[0].mxu0
      %620 = vdwg.mxu0
      %v621 = vadd.f32 %v541, %v618
      %s622 = scalar_lea.vmem %s198, 20
      %v623 = vld [vmem:[%s622] sm:$0xf]
      %624 = vrot.lane.b32.xlu0 %v227, 116
      %v625 = vpop.permute.xlu0 %624
      %v627 = vsel %vm230, %v623, 0
      %v629 = vsel %vm234, %v625, 0
      %631 = vmatprep.subr.mxu0 0.0
      %632 = vmatpush1.msra.mxu0 %v629
      %633 = vmatprep.subr.mxu0 0.0
      %634 = vmatpush1.msra.mxu0 0.0
      %635 = vmatprep.subr.mxu0 0.0
      %636 = vmatpush1.msra.mxu0 0.0
      %637 = vmatprep.subr.mxu0 0.0
      %638 = vmatpush1.msra.mxu0 0.0
      %639 = vmatprep.subr.mxu0 0.0
      %640 = vmatpush1.msra.mxu0 0.0
      %641 = vmatprep.subr.mxu0 0.0
      %642 = vmatpush1.msra.mxu0 0.0
      %643 = vmatprep.subr.mxu0 0.0
      %644 = vmatpush1.msra.mxu0 0.0
      %645 = vmatprep.subr.mxu0 0.0
      %646 = vmatpush1.msra.mxu0 0.0
      %647 = vmatprep.subr.mxu0 0.0
      %648 = vmatpush1.msra.mxu0 0.0
      %649 = vmatprep.subr.mxu0 0.0
      %650 = vmatpush1.msra.mxu0 0.0
      %651 = vmatprep.subr.mxu0 0.0
      %652 = vmatpush1.msra.mxu0 0.0
      %653 = vmatprep.subr.mxu0 0.0
      %654 = vmatpush1.msra.mxu0 0.0
      %655 = vmatprep.subr.mxu0 0.0
      %656 = vmatpush1.msra.mxu0 0.0
      %657 = vmatprep.subr.mxu0 0.0
      %658 = vmatpush1.msra.mxu0 0.0
      %659 = vmatprep.subr.mxu0 0.0
      %660 = vmatpush1.msra.mxu0 0.0
      %661 = vmatprep.subr.mxu0 0.0
      %662 = vmatpush1.msra.mxu0 0.0
      %663 = vmatprep.subr.mxu0 0.0
      %664 = vmatpush1.msra.mxu0 0.0
      %665 = vmatprep.subr.mxu0 0.0
      %666 = vmatpush1.msra.mxu0 0.0
      %667 = vmatprep.subr.mxu0 0.0
      %668 = vmatpush1.msra.mxu0 0.0
      %669 = vmatprep.subr.mxu0 0.0
      %670 = vmatpush1.msra.mxu0 0.0
      %671 = vmatprep.subr.mxu0 0.0
      %672 = vmatpush1.msra.mxu0 0.0
      %673 = vmatprep.subr.mxu0 0.0
      %674 = vmatpush1.msra.mxu0 0.0
      %675 = vmatprep.subr.mxu0 0.0
      %676 = vmatpush1.msra.mxu0 0.0
      %677 = vmatprep.subr.mxu0 0.0
      %678 = vmatpush1.msra.mxu0 0.0
      %679 = vmatprep.subr.mxu0 0.0
      %680 = vmatpush1.msra.mxu0 0.0
      %681 = vmatprep.subr.mxu0 0.0
      %682 = vmatpush1.msra.mxu0 0.0
      %683 = vmatprep.subr.mxu0 0.0
      %684 = vmatpush1.msra.mxu0 0.0
      %685 = vmatprep.subr.mxu0 0.0
      %686 = vmatpush1.msra.mxu0 0.0
      %687 = vmatprep.subr.mxu0 0.0
      %688 = vmatpush1.msra.mxu0 0.0
      %689 = vmatprep.subr.mxu0 0.0
      %690 = vmatpush1.msra.mxu0 0.0
      %691 = vmatprep.subr.mxu0 0.0
      %692 = vmatpush1.msra.mxu0 0.0
      %693 = vmatprep.subr.mxu0 0.0
      %694 = vmatpush1.msra.mxu0 0.0
      %695 = vmatprep.mubr.f32.mxu0 0.0
      %696 = vmatmul.mubr.f32.gmra.mrb[0].mxu0 %v627
      %v697 = vpop.f32.mrb[0].mxu0
      %v698 = vadd.f32 0.0, %v697
      %v699 = vpop.f32.mrb[0].mxu0
      %700 = vdwg.mxu0
      %v701 = vadd.f32 %v621, %v698
      %s702 = scalar_lea.vmem %s198, 24
      %v703 = vld [vmem:[%s702] sm:$0xf]
      %704 = vrot.lane.b32.xlu0 %v227, 108
      %v705 = vpop.permute.xlu0 %704
      %v707 = vsel %vm230, %v703, 0
      %v709 = vsel %vm234, %v705, 0
      %711 = vmatprep.subr.mxu0 0.0
      %712 = vmatpush1.msra.mxu0 %v709
      %713 = vmatprep.subr.mxu0 0.0
      %714 = vmatpush1.msra.mxu0 0.0
      %715 = vmatprep.subr.mxu0 0.0
      %716 = vmatpush1.msra.mxu0 0.0
      %717 = vmatprep.subr.mxu0 0.0
      %718 = vmatpush1.msra.mxu0 0.0
      %719 = vmatprep.subr.mxu0 0.0
      %720 = vmatpush1.msra.mxu0 0.0
      %721 = vmatprep.subr.mxu0 0.0
      %722 = vmatpush1.msra.mxu0 0.0
      %723 = vmatprep.subr.mxu0 0.0
      %724 = vmatpush1.msra.mxu0 0.0
      %725 = vmatprep.subr.mxu0 0.0
      %726 = vmatpush1.msra.mxu0 0.0
      %727 = vmatprep.subr.mxu0 0.0
      %728 = vmatpush1.msra.mxu0 0.0
      %729 = vmatprep.subr.mxu0 0.0
      %730 = vmatpush1.msra.mxu0 0.0
      %731 = vmatprep.subr.mxu0 0.0
      %732 = vmatpush1.msra.mxu0 0.0
      %733 = vmatprep.subr.mxu0 0.0
      %734 = vmatpush1.msra.mxu0 0.0
      %735 = vmatprep.subr.mxu0 0.0
      %736 = vmatpush1.msra.mxu0 0.0
      %737 = vmatprep.subr.mxu0 0.0
      %738 = vmatpush1.msra.mxu0 0.0
      %739 = vmatprep.subr.mxu0 0.0
      %740 = vmatpush1.msra.mxu0 0.0
      %741 = vmatprep.subr.mxu0 0.0
      %742 = vmatpush1.msra.mxu0 0.0
      %743 = vmatprep.subr.mxu0 0.0
      %744 = vmatpush1.msra.mxu0 0.0
      %745 = vmatprep.subr.mxu0 0.0
      %746 = vmatpush1.msra.mxu0 0.0
      %747 = vmatprep.subr.mxu0 0.0
      %748 = vmatpush1.msra.mxu0 0.0
      %749 = vmatprep.subr.mxu0 0.0
      %750 = vmatpush1.msra.mxu0 0.0
      %751 = vmatprep.subr.mxu0 0.0
      %752 = vmatpush1.msra.mxu0 0.0
      %753 = vmatprep.subr.mxu0 0.0
      %754 = vmatpush1.msra.mxu0 0.0
      %755 = vmatprep.subr.mxu0 0.0
      %756 = vmatpush1.msra.mxu0 0.0
      %757 = vmatprep.subr.mxu0 0.0
      %758 = vmatpush1.msra.mxu0 0.0
      %759 = vmatprep.subr.mxu0 0.0
      %760 = vmatpush1.msra.mxu0 0.0
      %761 = vmatprep.subr.mxu0 0.0
      %762 = vmatpush1.msra.mxu0 0.0
      %763 = vmatprep.subr.mxu0 0.0
      %764 = vmatpush1.msra.mxu0 0.0
      %765 = vmatprep.subr.mxu0 0.0
      %766 = vmatpush1.msra.mxu0 0.0
      %767 = vmatprep.subr.mxu0 0.0
      %768 = vmatpush1.msra.mxu0 0.0
      %769 = vmatprep.subr.mxu0 0.0
      %770 = vmatpush1.msra.mxu0 0.0
      %771 = vmatprep.subr.mxu0 0.0
      %772 = vmatpush1.msra.mxu0 0.0
      %773 = vmatprep.subr.mxu0 0.0
      %774 = vmatpush1.msra.mxu0 0.0
      %775 = vmatprep.mubr.f32.mxu0 0.0
      %776 = vmatmul.mubr.f32.gmra.mrb[0].mxu0 %v707
      %v777 = vpop.f32.mrb[0].mxu0
      %v778 = vadd.f32 0.0, %v777
      %v779 = vpop.f32.mrb[0].mxu0
      %780 = vdwg.mxu0
      %v781 = vadd.f32 %v701, %v778
      %s782 = scalar_lea.vmem %s198, 28
      %v783 = vld [vmem:[%s782] sm:$0xf]
      %784 = vrot.lane.b32.xlu0 %v227, 107
      %v785 = vpop.permute.xlu0 %784
      %v787 = vsel %vm230, %v783, 0
      %v789 = vsel %vm234, %v785, 0
      %791 = vmatprep.subr.mxu0 0.0
      %792 = vmatpush1.msra.mxu0 %v789
      %793 = vmatprep.subr.mxu0 0.0
      %794 = vmatpush1.msra.mxu0 0.0
      %795 = vmatprep.subr.mxu0 0.0
      %796 = vmatpush1.msra.mxu0 0.0
      %797 = vmatprep.subr.mxu0 0.0
      %798 = vmatpush1.msra.mxu0 0.0
      %799 = vmatprep.subr.mxu0 0.0
      %800 = vmatpush1.msra.mxu0 0.0
      %801 = vmatprep.subr.mxu0 0.0
      %802 = vmatpush1.msra.mxu0 0.0
      %803 = vmatprep.subr.mxu0 0.0
      %804 = vmatpush1.msra.mxu0 0.0
      %805 = vmatprep.subr.mxu0 0.0
      %806 = vmatpush1.msra.mxu0 0.0
      %807 = vmatprep.subr.mxu0 0.0
      %808 = vmatpush1.msra.mxu0 0.0
      %809 = vmatprep.subr.mxu0 0.0
      %810 = vmatpush1.msra.mxu0 0.0
      %811 = vmatprep.subr.mxu0 0.0
      %812 = vmatpush1.msra.mxu0 0.0
      %813 = vmatprep.subr.mxu0 0.0
      %814 = vmatpush1.msra.mxu0 0.0
      %815 = vmatprep.subr.mxu0 0.0
      %816 = vmatpush1.msra.mxu0 0.0
      %817 = vmatprep.subr.mxu0 0.0
      %818 = vmatpush1.msra.mxu0 0.0
      %819 = vmatprep.subr.mxu0 0.0
      %820 = vmatpush1.msra.mxu0 0.0
      %821 = vmatprep.subr.mxu0 0.0
      %822 = vmatpush1.msra.mxu0 0.0
      %823 = vmatprep.subr.mxu0 0.0
      %824 = vmatpush1.msra.mxu0 0.0
      %825 = vmatprep.subr.mxu0 0.0
      %826 = vmatpush1.msra.mxu0 0.0
      %827 = vmatprep.subr.mxu0 0.0
      %828 = vmatpush1.msra.mxu0 0.0
      %829 = vmatprep.subr.mxu0 0.0
      %830 = vmatpush1.msra.mxu0 0.0
      %831 = vmatprep.subr.mxu0 0.0
      %832 = vmatpush1.msra.mxu0 0.0
      %833 = vmatprep.subr.mxu0 0.0
      %834 = vmatpush1.msra.mxu0 0.0
      %835 = vmatprep.subr.mxu0 0.0
      %836 = vmatpush1.msra.mxu0 0.0
      %837 = vmatprep.subr.mxu0 0.0
      %838 = vmatpush1.msra.mxu0 0.0
      %839 = vmatprep.subr.mxu0 0.0
      %840 = vmatpush1.msra.mxu0 0.0
      %841 = vmatprep.subr.mxu0 0.0
      %842 = vmatpush1.msra.mxu0 0.0
      %843 = vmatprep.subr.mxu0 0.0
      %844 = vmatpush1.msra.mxu0 0.0
      %845 = vmatprep.subr.mxu0 0.0
      %846 = vmatpush1.msra.mxu0 0.0
      %847 = vmatprep.subr.mxu0 0.0
      %848 = vmatpush1.msra.mxu0 0.0
      %849 = vmatprep.subr.mxu0 0.0
      %850 = vmatpush1.msra.mxu0 0.0
      %851 = vmatprep.subr.mxu0 0.0
      %852 = vmatpush1.msra.mxu0 0.0
      %853 = vmatprep.subr.mxu0 0.0
      %854 = vmatpush1.msra.mxu0 0.0
      %855 = vmatprep.mubr.f32.mxu0 0.0
      %856 = vmatmul.mubr.f32.gmra.mrb[0].mxu0 %v787
      %v857 = vpop.f32.mrb[0].mxu0
      %v858 = vadd.f32 0.0, %v857
      %v859 = vpop.f32.mrb[0].mxu0
      %860 = vdwg.mxu0
      %v861 = vadd.f32 %v781, %v858
      %s862 = scalar_lea.vmem %s198, 32
      %v863 = vld [vmem:[%s862] sm:$0xf]
      %864 = vrot.lane.b32.xlu0 %v227, 106
      %v865 = vpop.permute.xlu0 %864
      %v867 = vsel %vm230, %v863, 0
      %v869 = vsel %vm234, %v865, 0
      %871 = vmatprep.subr.mxu0 0.0
      %872 = vmatpush1.msra.mxu0 %v869
      %873 = vmatprep.subr.mxu0 0.0
      %874 = vmatpush1.msra.mxu0 0.0
      %875 = vmatprep.subr.mxu0 0.0
      %876 = vmatpush1.msra.mxu0 0.0
      %877 = vmatprep.subr.mxu0 0.0
      %878 = vmatpush1.msra.mxu0 0.0
      %879 = vmatprep.subr.mxu0 0.0
      %880 = vmatpush1.msra.mxu0 0.0
      %881 = vmatprep.subr.mxu0 0.0
      %882 = vmatpush1.msra.mxu0 0.0
      %883 = vmatprep.subr.mxu0 0.0
      %884 = vmatpush1.msra.mxu0 0.0
      %885 = vmatprep.subr.mxu0 0.0
      %886 = vmatpush1.msra.mxu0 0.0
      %887 = vmatprep.subr.mxu0 0.0
      %888 = vmatpush1.msra.mxu0 0.0
      %889 = vmatprep.subr.mxu0 0.0
      %890 = vmatpush1.msra.mxu0 0.0
      %891 = vmatprep.subr.mxu0 0.0
      %892 = vmatpush1.msra.mxu0 0.0
      %893 = vmatprep.subr.mxu0 0.0
      %894 = vmatpush1.msra.mxu0 0.0
      %895 = vmatprep.subr.mxu0 0.0
      %896 = vmatpush1.msra.mxu0 0.0
      %897 = vmatprep.subr.mxu0 0.0
      %898 = vmatpush1.msra.mxu0 0.0
      %899 = vmatprep.subr.mxu0 0.0
      %900 = vmatpush1.msra.mxu0 0.0
      %901 = vmatprep.subr.mxu0 0.0
      %902 = vmatpush1.msra.mxu0 0.0
      %903 = vmatprep.subr.mxu0 0.0
      %904 = vmatpush1.msra.mxu0 0.0
      %905 = vmatprep.subr.mxu0 0.0
      %906 = vmatpush1.msra.mxu0 0.0
      %907 = vmatprep.subr.mxu0 0.0
      %908 = vmatpush1.msra.mxu0 0.0
      %909 = vmatprep.subr.mxu0 0.0
      %910 = vmatpush1.msra.mxu0 0.0
      %911 = vmatprep.subr.mxu0 0.0
      %912 = vmatpush1.msra.mxu0 0.0
      %913 = vmatprep.subr.mxu0 0.0
      %914 = vmatpush1.msra.mxu0 0.0
      %915 = vmatprep.subr.mxu0 0.0
      %916 = vmatpush1.msra.mxu0 0.0
      %917 = vmatprep.subr.mxu0 0.0
      %918 = vmatpush1.msra.mxu0 0.0
      %919 = vmatprep.subr.mxu0 0.0
      %920 = vmatpush1.msra.mxu0 0.0
      %921 = vmatprep.subr.mxu0 0.0
      %922 = vmatpush1.msra.mxu0 0.0
      %923 = vmatprep.subr.mxu0 0.0
      %924 = vmatpush1.msra.mxu0 0.0
      %925 = vmatprep.subr.mxu0 0.0
      %926 = vmatpush1.msra.mxu0 0.0
      %927 = vmatprep.subr.mxu0 0.0
      %928 = vmatpush1.msra.mxu0 0.0
      %929 = vmatprep.subr.mxu0 0.0
      %930 = vmatpush1.msra.mxu0 0.0
      %931 = vmatprep.subr.mxu0 0.0
      %932 = vmatpush1.msra.mxu0 0.0
      %933 = vmatprep.subr.mxu0 0.0
      %934 = vmatpush1.msra.mxu0 0.0
      %935 = vmatprep.mubr.f32.mxu0 0.0
      %936 = vmatmul.mubr.f32.gmra.mrb[0].mxu0 %v867
      %v937 = vpop.f32.mrb[0].mxu0
      %v938 = vadd.f32 0.0, %v937
      %v939 = vpop.f32.mrb[0].mxu0
      %940 = vdwg.mxu0
      %v941 = vadd.f32 %v861, %v938
      %v942 = vld [vmem:[%s202] sm:$0xf]
      %944 = vset.pattern.permute.xlu0 0
      %945 = vperm.xlu0 %944, %v942
      %v946 = vpop.permute.xlu0 %945
      %v948 = vadd.f32 %v941, %v946
      %v951 = vunpack.c.l.s4 1966171168
      %v952 = vunpack.c.0.s8 %v951
      %v953 = vlaneseq
      %v954 = vshrl.u32 %v953, 7
      %v955 = vsub.s32 %v952, %v954
      %v956 = vrot.slane %v948, %v955
      %v957 = vcombine.high %v956, %v956
      %v959 = vunpack.c.l.s4 1966171168
      %v960 = vunpack.c.0.s8 %v959
      %v961 = vlaneseq
      %v962 = vshrl.u32 %v961, 7
      %v963 = vsub.s32 %v960, %v962
      %v964 = vrot.slane %v956, %v963
      %v966 = vunpack.c.l.s4 1966171168
      %v967 = vunpack.c.0.s8 %v966
      %v968 = vlaneseq
      %v969 = vshrl.u32 %v968, 7
      %v970 = vsub.s32 %v967, %v969
      %v971 = vrot.slane %v957, %v970
      %v972 = vcombine.high %v964, %v964
      %v973 = vcombine.high %v971, %v971
      %vm978 = vcmask 647168
      %979 = vst.msk [vmem:[%s207] sm:$0x1] %vm978, %v964
      %980 = vst.msk [vmem:[%s207 + $0x2] sm:$0x1] %vm978, %v971
      %981 = vst.msk [vmem:[%s207 + $0x4] sm:$0x1] %vm978, %v972
      %982 = vst.msk [vmem:[%s207 + $0x6] sm:$0x1] %vm978, %v973
      %v983 = vld [vmem:[%s193 + $0x1] sm:$0x1]
      %v984 = vld [vmem:[%s193 + $0x3] sm:$0x1]
      %v985 = vld [vmem:[%s193 + $0x5] sm:$0x1]
      %v986 = vld [vmem:[%s193 + $0x7] sm:$0x1]
      %v987 = vld [vmem:[%s198] sm:$0xf]
      %v988 = vld [vmem:[%s213] sm:$0xf]
      %v993 = vrot.slane %v984, 7
      %v994 = vsel %vm220, %v993, %v983
      %v995 = vrot.slane %v985, 6
      %v996 = vsel %vm223, %v995, %v994
      %v997 = vrot.slane %v986, 5
      %v998 = vsel %vm226, %v997, %v996
      %999 = vrot.lane.b32.xlu0 %v998, 127
      %v1000 = vpop.permute.xlu0 %999
      %v1002 = vsel %vm230, %v988, 0
      %v1004 = vsel %vm234, %v1000, 0
      %1006 = vmatprep.subr.mxu0 0.0
      %1007 = vmatpush1.msra.mxu0 %v1004
      %1008 = vmatprep.subr.mxu0 0.0
      %1009 = vmatpush1.msra.mxu0 0.0
      %1010 = vmatprep.subr.mxu0 0.0
      %1011 = vmatpush1.msra.mxu0 0.0
      %1012 = vmatprep.subr.mxu0 0.0
      %1013 = vmatpush1.msra.mxu0 0.0
      %1014 = vmatprep.subr.mxu0 0.0
      %1015 = vmatpush1.msra.mxu0 0.0
      %1016 = vmatprep.subr.mxu0 0.0
      %1017 = vmatpush1.msra.mxu0 0.0
      %1018 = vmatprep.subr.mxu0 0.0
      %1019 = vmatpush1.msra.mxu0 0.0
      %1020 = vmatprep.subr.mxu0 0.0
      %1021 = vmatpush1.msra.mxu0 0.0
      %1022 = vmatprep.subr.mxu0 0.0
      %1023 = vmatpush1.msra.mxu0 0.0
      %1024 = vmatprep.subr.mxu0 0.0
      %1025 = vmatpush1.msra.mxu0 0.0
      %1026 = vmatprep.subr.mxu0 0.0
      %1027 = vmatpush1.msra.mxu0 0.0
      %1028 = vmatprep.subr.mxu0 0.0
      %1029 = vmatpush1.msra.mxu0 0.0
      %1030 = vmatprep.subr.mxu0 0.0
      %1031 = vmatpush1.msra.mxu0 0.0
      %1032 = vmatprep.subr.mxu0 0.0
      %1033 = vmatpush1.msra.mxu0 0.0
      %1034 = vmatprep.subr.mxu0 0.0
      %1035 = vmatpush1.msra.mxu0 0.0
      %1036 = vmatprep.subr.mxu0 0.0
      %1037 = vmatpush1.msra.mxu0 0.0
      %1038 = vmatprep.subr.mxu0 0.0
      %1039 = vmatpush1.msra.mxu0 0.0
      %1040 = vmatprep.subr.mxu0 0.0
      %1041 = vmatpush1.msra.mxu0 0.0
      %1042 = vmatprep.subr.mxu0 0.0
      %1043 = vmatpush1.msra.mxu0 0.0
      %1044 = vmatprep.subr.mxu0 0.0
      %1045 = vmatpush1.msra.mxu0 0.0
      %1046 = vmatprep.subr.mxu0 0.0
      %1047 = vmatpush1.msra.mxu0 0.0
      %1048 = vmatprep.subr.mxu0 0.0
      %1049 = vmatpush1.msra.mxu0 0.0
      %1050 = vmatprep.subr.mxu0 0.0
      %1051 = vmatpush1.msra.mxu0 0.0
      %1052 = vmatprep.subr.mxu0 0.0
      %1053 = vmatpush1.msra.mxu0 0.0
      %1054 = vmatprep.subr.mxu0 0.0
      %1055 = vmatpush1.msra.mxu0 0.0
      %1056 = vmatprep.subr.mxu0 0.0
      %1057 = vmatpush1.msra.mxu0 0.0
      %1058 = vmatprep.subr.mxu0 0.0
      %1059 = vmatpush1.msra.mxu0 0.0
      %1060 = vmatprep.subr.mxu0 0.0
      %1061 = vmatpush1.msra.mxu0 0.0
      %1062 = vmatprep.subr.mxu0 0.0
      %1063 = vmatpush1.msra.mxu0 0.0
      %1064 = vmatprep.subr.mxu0 0.0
      %1065 = vmatpush1.msra.mxu0 0.0
      %1066 = vmatprep.subr.mxu0 0.0
      %1067 = vmatpush1.msra.mxu0 0.0
      %1068 = vmatprep.subr.mxu0 0.0
      %1069 = vmatpush1.msra.mxu0 0.0
      %1070 = vmatprep.mubr.f32.mxu0 0.0
      %1071 = vmatmul.mubr.f32.gmra.mrb[0].mxu0 %v1002
      %v1072 = vpop.f32.mrb[0].mxu0
      %v1073 = vadd.f32 0.0, %v1072
      %v1074 = vpop.f32.mrb[0].mxu0
      %1075 = vdwg.mxu0
      %v1077 = vsel %vm230, %v987, 0
      %v1079 = vsel %vm234, %v998, 0
      %1081 = vmatprep.subr.mxu0 0.0
      %1082 = vmatpush1.msra.mxu0 %v1079
      %1083 = vmatprep.subr.mxu0 0.0
      %1084 = vmatpush1.msra.mxu0 0.0
      %1085 = vmatprep.subr.mxu0 0.0
      %1086 = vmatpush1.msra.mxu0 0.0
      %1087 = vmatprep.subr.mxu0 0.0
      %1088 = vmatpush1.msra.mxu0 0.0
      %1089 = vmatprep.subr.mxu0 0.0
      %1090 = vmatpush1.msra.mxu0 0.0
      %1091 = vmatprep.subr.mxu0 0.0
      %1092 = vmatpush1.msra.mxu0 0.0
      %1093 = vmatprep.subr.mxu0 0.0
      %1094 = vmatpush1.msra.mxu0 0.0
      %1095 = vmatprep.subr.mxu0 0.0
      %1096 = vmatpush1.msra.mxu0 0.0
      %1097 = vmatprep.subr.mxu0 0.0
      %1098 = vmatpush1.msra.mxu0 0.0
      %1099 = vmatprep.subr.mxu0 0.0
      %1100 = vmatpush1.msra.mxu0 0.0
      %1101 = vmatprep.subr.mxu0 0.0
      %1102 = vmatpush1.msra.mxu0 0.0
      %1103 = vmatprep.subr.mxu0 0.0
      %1104 = vmatpush1.msra.mxu0 0.0
      %1105 = vmatprep.subr.mxu0 0.0
      %1106 = vmatpush1.msra.mxu0 0.0
      %1107 = vmatprep.subr.mxu0 0.0
      %1108 = vmatpush1.msra.mxu0 0.0
      %1109 = vmatprep.subr.mxu0 0.0
      %1110 = vmatpush1.msra.mxu0 0.0
      %1111 = vmatprep.subr.mxu0 0.0
      %1112 = vmatpush1.msra.mxu0 0.0
      %1113 = vmatprep.subr.mxu0 0.0
      %1114 = vmatpush1.msra.mxu0 0.0
      %1115 = vmatprep.subr.mxu0 0.0
      %1116 = vmatpush1.msra.mxu0 0.0
      %1117 = vmatprep.subr.mxu0 0.0
      %1118 = vmatpush1.msra.mxu0 0.0
      %1119 = vmatprep.subr.mxu0 0.0
      %1120 = vmatpush1.msra.mxu0 0.0
      %1121 = vmatprep.subr.mxu0 0.0
      %1122 = vmatpush1.msra.mxu0 0.0
      %1123 = vmatprep.subr.mxu0 0.0
      %1124 = vmatpush1.msra.mxu0 0.0
      %1125 = vmatprep.subr.mxu0 0.0
      %1126 = vmatpush1.msra.mxu0 0.0
      %1127 = vmatprep.subr.mxu0 0.0
      %1128 = vmatpush1.msra.mxu0 0.0
      %1129 = vmatprep.subr.mxu0 0.0
      %1130 = vmatpush1.msra.mxu0 0.0
      %1131 = vmatprep.subr.mxu0 0.0
      %1132 = vmatpush1.msra.mxu0 0.0
      %1133 = vmatprep.subr.mxu0 0.0
      %1134 = vmatpush1.msra.mxu0 0.0
      %1135 = vmatprep.subr.mxu0 0.0
      %1136 = vmatpush1.msra.mxu0 0.0
      %1137 = vmatprep.subr.mxu0 0.0
      %1138 = vmatpush1.msra.mxu0 0.0
      %1139 = vmatprep.subr.mxu0 0.0
      %1140 = vmatpush1.msra.mxu0 0.0
      %1141 = vmatprep.subr.mxu0 0.0
      %1142 = vmatpush1.msra.mxu0 0.0
      %1143 = vmatprep.subr.mxu0 0.0
      %1144 = vmatpush1.msra.mxu0 0.0
      %1145 = vmatprep.mubr.f32.mxu0 0.0
      %1146 = vmatmul.mubr.f32.gmra.mrb[0].mxu0 %v1077
      %v1147 = vpop.f32.mrb[0].mxu0
      %v1148 = vadd.f32 %v1073, %v1147
      %v1149 = vpop.f32.mrb[0].mxu0
      %1150 = vdwg.mxu0
      %v1151 = vld [vmem:[%s382] sm:$0xf]
      %1152 = vrot.lane.b32.xlu0 %v998, 126
      %v1153 = vpop.permute.xlu0 %1152
      %v1155 = vsel %vm230, %v1151, 0
      %v1157 = vsel %vm234, %v1153, 0
      %1159 = vmatprep.subr.mxu0 0.0
      %1160 = vmatpush1.msra.mxu0 %v1157
      %1161 = vmatprep.subr.mxu0 0.0
      %1162 = vmatpush1.msra.mxu0 0.0
      %1163 = vmatprep.subr.mxu0 0.0
      %1164 = vmatpush1.msra.mxu0 0.0
      %1165 = vmatprep.subr.mxu0 0.0
      %1166 = vmatpush1.msra.mxu0 0.0
      %1167 = vmatprep.subr.mxu0 0.0
      %1168 = vmatpush1.msra.mxu0 0.0
      %1169 = vmatprep.subr.mxu0 0.0
      %1170 = vmatpush1.msra.mxu0 0.0
      %1171 = vmatprep.subr.mxu0 0.0
      %1172 = vmatpush1.msra.mxu0 0.0
      %1173 = vmatprep.subr.mxu0 0.0
      %1174 = vmatpush1.msra.mxu0 0.0
      %1175 = vmatprep.subr.mxu0 0.0
      %1176 = vmatpush1.msra.mxu0 0.0
      %1177 = vmatprep.subr.mxu0 0.0
      %1178 = vmatpush1.msra.mxu0 0.0
      %1179 = vmatprep.subr.mxu0 0.0
      %1180 = vmatpush1.msra.mxu0 0.0
      %1181 = vmatprep.subr.mxu0 0.0
      %1182 = vmatpush1.msra.mxu0 0.0
      %1183 = vmatprep.subr.mxu0 0.0
      %1184 = vmatpush1.msra.mxu0 0.0
      %1185 = vmatprep.subr.mxu0 0.0
      %1186 = vmatpush1.msra.mxu0 0.0
      %1187 = vmatprep.subr.mxu0 0.0
      %1188 = vmatpush1.msra.mxu0 0.0
      %1189 = vmatprep.subr.mxu0 0.0
      %1190 = vmatpush1.msra.mxu0 0.0
      %1191 = vmatprep.subr.mxu0 0.0
      %1192 = vmatpush1.msra.mxu0 0.0
      %1193 = vmatprep.subr.mxu0 0.0
      %1194 = vmatpush1.msra.mxu0 0.0
      %1195 = vmatprep.subr.mxu0 0.0
      %1196 = vmatpush1.msra.mxu0 0.0
      %1197 = vmatprep.subr.mxu0 0.0
      %1198 = vmatpush1.msra.mxu0 0.0
      %1199 = vmatprep.subr.mxu0 0.0
      %1200 = vmatpush1.msra.mxu0 0.0
      %1201 = vmatprep.subr.mxu0 0.0
      %1202 = vmatpush1.msra.mxu0 0.0
      %1203 = vmatprep.subr.mxu0 0.0
      %1204 = vmatpush1.msra.mxu0 0.0
      %1205 = vmatprep.subr.mxu0 0.0
      %1206 = vmatpush1.msra.mxu0 0.0
      %1207 = vmatprep.subr.mxu0 0.0
      %1208 = vmatpush1.msra.mxu0 0.0
      %1209 = vmatprep.subr.mxu0 0.0
      %1210 = vmatpush1.msra.mxu0 0.0
      %1211 = vmatprep.subr.mxu0 0.0
      %1212 = vmatpush1.msra.mxu0 0.0
      %1213 = vmatprep.subr.mxu0 0.0
      %1214 = vmatpush1.msra.mxu0 0.0
      %1215 = vmatprep.subr.mxu0 0.0
      %1216 = vmatpush1.msra.mxu0 0.0
      %1217 = vmatprep.subr.mxu0 0.0
      %1218 = vmatpush1.msra.mxu0 0.0
      %1219 = vmatprep.subr.mxu0 0.0
      %1220 = vmatpush1.msra.mxu0 0.0
      %1221 = vmatprep.subr.mxu0 0.0
      %1222 = vmatpush1.msra.mxu0 0.0
      %1223 = vmatprep.mubr.f32.mxu0 0.0
      %1224 = vmatmul.mubr.f32.gmra.mrb[0].mxu0 %v1155
      %v1225 = vpop.f32.mrb[0].mxu0
      %v1226 = vadd.f32 0.0, %v1225
      %v1227 = vpop.f32.mrb[0].mxu0
      %1228 = vdwg.mxu0
      %v1229 = vadd.f32 %v1148, %v1226
      %v1230 = vld [vmem:[%s462] sm:$0xf]
      %1231 = vrot.lane.b32.xlu0 %v998, 118
      %v1232 = vpop.permute.xlu0 %1231
      %v1234 = vsel %vm230, %v1230, 0
      %v1236 = vsel %vm234, %v1232, 0
      %1238 = vmatprep.subr.mxu0 0.0
      %1239 = vmatpush1.msra.mxu0 %v1236
      %1240 = vmatprep.subr.mxu0 0.0
      %1241 = vmatpush1.msra.mxu0 0.0
      %1242 = vmatprep.subr.mxu0 0.0
      %1243 = vmatpush1.msra.mxu0 0.0
      %1244 = vmatprep.subr.mxu0 0.0
      %1245 = vmatpush1.msra.mxu0 0.0
      %1246 = vmatprep.subr.mxu0 0.0
      %1247 = vmatpush1.msra.mxu0 0.0
      %1248 = vmatprep.subr.mxu0 0.0
      %1249 = vmatpush1.msra.mxu0 0.0
      %1250 = vmatprep.subr.mxu0 0.0
      %1251 = vmatpush1.msra.mxu0 0.0
      %1252 = vmatprep.subr.mxu0 0.0
      %1253 = vmatpush1.msra.mxu0 0.0
      %1254 = vmatprep.subr.mxu0 0.0
      %1255 = vmatpush1.msra.mxu0 0.0
      %1256 = vmatprep.subr.mxu0 0.0
      %1257 = vmatpush1.msra.mxu0 0.0
      %1258 = vmatprep.subr.mxu0 0.0
      %1259 = vmatpush1.msra.mxu0 0.0
      %1260 = vmatprep.subr.mxu0 0.0
      %1261 = vmatpush1.msra.mxu0 0.0
      %1262 = vmatprep.subr.mxu0 0.0
      %1263 = vmatpush1.msra.mxu0 0.0
      %1264 = vmatprep.subr.mxu0 0.0
      %1265 = vmatpush1.msra.mxu0 0.0
      %1266 = vmatprep.subr.mxu0 0.0
      %1267 = vmatpush1.msra.mxu0 0.0
      %1268 = vmatprep.subr.mxu0 0.0
      %1269 = vmatpush1.msra.mxu0 0.0
      %1270 = vmatprep.subr.mxu0 0.0
      %1271 = vmatpush1.msra.mxu0 0.0
      %1272 = vmatprep.subr.mxu0 0.0
      %1273 = vmatpush1.msra.mxu0 0.0
      %1274 = vmatprep.subr.mxu0 0.0
      %1275 = vmatpush1.msra.mxu0 0.0
      %1276 = vmatprep.subr.mxu0 0.0
      %1277 = vmatpush1.msra.mxu0 0.0
      %1278 = vmatprep.subr.mxu0 0.0
      %1279 = vmatpush1.msra.mxu0 0.0
      %1280 = vmatprep.subr.mxu0 0.0
      %1281 = vmatpush1.msra.mxu0 0.0
      %1282 = vmatprep.subr.mxu0 0.0
      %1283 = vmatpush1.msra.mxu0 0.0
      %1284 = vmatprep.subr.mxu0 0.0
      %1285 = vmatpush1.msra.mxu0 0.0
      %1286 = vmatprep.subr.mxu0 0.0
      %1287 = vmatpush1.msra.mxu0 0.0
      %1288 = vmatprep.subr.mxu0 0.0
      %1289 = vmatpush1.msra.mxu0 0.0
      %1290 = vmatprep.subr.mxu0 0.0
      %1291 = vmatpush1.msra.mxu0 0.0
      %1292 = vmatprep.subr.mxu0 0.0
      %1293 = vmatpush1.msra.mxu0 0.0
      %1294 = vmatprep.subr.mxu0 0.0
      %1295 = vmatpush1.msra.mxu0 0.0
      %1296 = vmatprep.subr.mxu0 0.0
      %1297 = vmatpush1.msra.mxu0 0.0
      %1298 = vmatprep.subr.mxu0 0.0
      %1299 = vmatpush1.msra.mxu0 0.0
      %1300 = vmatprep.subr.mxu0 0.0
      %1301 = vmatpush1.msra.mxu0 0.0
      %1302 = vmatprep.mubr.f32.mxu0 0.0
      %1303 = vmatmul.mubr.f32.gmra.mrb[0].mxu0 %v1234
      %v1304 = vpop.f32.mrb[0].mxu0
      %v1305 = vadd.f32 0.0, %v1304
      %v1306 = vpop.f32.mrb[0].mxu0
      %1307 = vdwg.mxu0
      %v1308 = vadd.f32 %v1229, %v1305
      %v1309 = vld [vmem:[%s542] sm:$0xf]
      %1310 = vrot.lane.b32.xlu0 %v998, 117
      %v1311 = vpop.permute.xlu0 %1310
      %v1313 = vsel %vm230, %v1309, 0
      %v1315 = vsel %vm234, %v1311, 0
      %1317 = vmatprep.subr.mxu0 0.0
      %1318 = vmatpush1.msra.mxu0 %v1315
      %1319 = vmatprep.subr.mxu0 0.0
      %1320 = vmatpush1.msra.mxu0 0.0
      %1321 = vmatprep.subr.mxu0 0.0
      %1322 = vmatpush1.msra.mxu0 0.0
      %1323 = vmatprep.subr.mxu0 0.0
      %1324 = vmatpush1.msra.mxu0 0.0
      %1325 = vmatprep.subr.mxu0 0.0
      %1326 = vmatpush1.msra.mxu0 0.0
      %1327 = vmatprep.subr.mxu0 0.0
      %1328 = vmatpush1.msra.mxu0 0.0
      %1329 = vmatprep.subr.mxu0 0.0
      %1330 = vmatpush1.msra.mxu0 0.0
      %1331 = vmatprep.subr.mxu0 0.0
      %1332 = vmatpush1.msra.mxu0 0.0
      %1333 = vmatprep.subr.mxu0 0.0
      %1334 = vmatpush1.msra.mxu0 0.0
      %1335 = vmatprep.subr.mxu0 0.0
      %1336 = vmatpush1.msra.mxu0 0.0
      %1337 = vmatprep.subr.mxu0 0.0
      %1338 = vmatpush1.msra.mxu0 0.0
      %1339 = vmatprep.subr.mxu0 0.0
      %1340 = vmatpush1.msra.mxu0 0.0
      %1341 = vmatprep.subr.mxu0 0.0
      %1342 = vmatpush1.msra.mxu0 0.0
      %1343 = vmatprep.subr.mxu0 0.0
      %1344 = vmatpush1.msra.mxu0 0.0
      %1345 = vmatprep.subr.mxu0 0.0
      %1346 = vmatpush1.msra.mxu0 0.0
      %1347 = vmatprep.subr.mxu0 0.0
      %1348 = vmatpush1.msra.mxu0 0.0
      %1349 = vmatprep.subr.mxu0 0.0
      %1350 = vmatpush1.msra.mxu0 0.0
      %1351 = vmatprep.subr.mxu0 0.0
      %1352 = vmatpush1.msra.mxu0 0.0
      %1353 = vmatprep.subr.mxu0 0.0
      %1354 = vmatpush1.msra.mxu0 0.0
      %1355 = vmatprep.subr.mxu0 0.0
      %1356 = vmatpush1.msra.mxu0 0.0
      %1357 = vmatprep.subr.mxu0 0.0
      %1358 = vmatpush1.msra.mxu0 0.0
      %1359 = vmatprep.subr.mxu0 0.0
      %1360 = vmatpush1.msra.mxu0 0.0
      %1361 = vmatprep.subr.mxu0 0.0
      %1362 = vmatpush1.msra.mxu0 0.0
      %1363 = vmatprep.subr.mxu0 0.0
      %1364 = vmatpush1.msra.mxu0 0.0
      %1365 = vmatprep.subr.mxu0 0.0
      %1366 = vmatpush1.msra.mxu0 0.0
      %1367 = vmatprep.subr.mxu0 0.0
      %1368 = vmatpush1.msra.mxu0 0.0
      %1369 = vmatprep.subr.mxu0 0.0
      %1370 = vmatpush1.msra.mxu0 0.0
      %1371 = vmatprep.subr.mxu0 0.0
      %1372 = vmatpush1.msra.mxu0 0.0
      %1373 = vmatprep.subr.mxu0 0.0
      %1374 = vmatpush1.msra.mxu0 0.0
      %1375 = vmatprep.subr.mxu0 0.0
      %1376 = vmatpush1.msra.mxu0 0.0
      %1377 = vmatprep.subr.mxu0 0.0
      %1378 = vmatpush1.msra.mxu0 0.0
      %1379 = vmatprep.subr.mxu0 0.0
      %1380 = vmatpush1.msra.mxu0 0.0
      %1381 = vmatprep.mubr.f32.mxu0 0.0
      %1382 = vmatmul.mubr.f32.gmra.mrb[0].mxu0 %v1313
      %v1383 = vpop.f32.mrb[0].mxu0
      %v1384 = vadd.f32 0.0, %v1383
      %v1385 = vpop.f32.mrb[0].mxu0
      %1386 = vdwg.mxu0
      %v1387 = vadd.f32 %v1308, %v1384
      %v1388 = vld [vmem:[%s622] sm:$0xf]
      %1389 = vrot.lane.b32.xlu0 %v998, 116
      %v1390 = vpop.permute.xlu0 %1389
      %v1392 = vsel %vm230, %v1388, 0
      %v1394 = vsel %vm234, %v1390, 0
      %1396 = vmatprep.subr.mxu0 0.0
      %1397 = vmatpush1.msra.mxu0 %v1394
      %1398 = vmatprep.subr.mxu0 0.0
      %1399 = vmatpush1.msra.mxu0 0.0
      %1400 = vmatprep.subr.mxu0 0.0
      %1401 = vmatpush1.msra.mxu0 0.0
      %1402 = vmatprep.subr.mxu0 0.0
      %1403 = vmatpush1.msra.mxu0 0.0
      %1404 = vmatprep.subr.mxu0 0.0
      %1405 = vmatpush1.msra.mxu0 0.0
      %1406 = vmatprep.subr.mxu0 0.0
      %1407 = vmatpush1.msra.mxu0 0.0
      %1408 = vmatprep.subr.mxu0 0.0
      %1409 = vmatpush1.msra.mxu0 0.0
      %1410 = vmatprep.subr.mxu0 0.0
      %1411 = vmatpush1.msra.mxu0 0.0
      %1412 = vmatprep.subr.mxu0 0.0
      %1413 = vmatpush1.msra.mxu0 0.0
      %1414 = vmatprep.subr.mxu0 0.0
      %1415 = vmatpush1.msra.mxu0 0.0
      %1416 = vmatprep.subr.mxu0 0.0
      %1417 = vmatpush1.msra.mxu0 0.0
      %1418 = vmatprep.subr.mxu0 0.0
      %1419 = vmatpush1.msra.mxu0 0.0
      %1420 = vmatprep.subr.mxu0 0.0
      %1421 = vmatpush1.msra.mxu0 0.0
      %1422 = vmatprep.subr.mxu0 0.0
      %1423 = vmatpush1.msra.mxu0 0.0
      %1424 = vmatprep.subr.mxu0 0.0
      %1425 = vmatpush1.msra.mxu0 0.0
      %1426 = vmatprep.subr.mxu0 0.0
      %1427 = vmatpush1.msra.mxu0 0.0
      %1428 = vmatprep.subr.mxu0 0.0
      %1429 = vmatpush1.msra.mxu0 0.0
      %1430 = vmatprep.subr.mxu0 0.0
      %1431 = vmatpush1.msra.mxu0 0.0
      %1432 = vmatprep.subr.mxu0 0.0
      %1433 = vmatpush1.msra.mxu0 0.0
      %1434 = vmatprep.subr.mxu0 0.0
      %1435 = vmatpush1.msra.mxu0 0.0
      %1436 = vmatprep.subr.mxu0 0.0
      %1437 = vmatpush1.msra.mxu0 0.0
      %1438 = vmatprep.subr.mxu0 0.0
      %1439 = vmatpush1.msra.mxu0 0.0
      %1440 = vmatprep.subr.mxu0 0.0
      %1441 = vmatpush1.msra.mxu0 0.0
      %1442 = vmatprep.subr.mxu0 0.0
      %1443 = vmatpush1.msra.mxu0 0.0
      %1444 = vmatprep.subr.mxu0 0.0
      %1445 = vmatpush1.msra.mxu0 0.0
      %1446 = vmatprep.subr.mxu0 0.0
      %1447 = vmatpush1.msra.mxu0 0.0
      %1448 = vmatprep.subr.mxu0 0.0
      %1449 = vmatpush1.msra.mxu0 0.0
      %1450 = vmatprep.subr.mxu0 0.0
      %1451 = vmatpush1.msra.mxu0 0.0
      %1452 = vmatprep.subr.mxu0 0.0
      %1453 = vmatpush1.msra.mxu0 0.0
      %1454 = vmatprep.subr.mxu0 0.0
      %1455 = vmatpush1.msra.mxu0 0.0
      %1456 = vmatprep.subr.mxu0 0.0
      %1457 = vmatpush1.msra.mxu0 0.0
      %1458 = vmatprep.subr.mxu0 0.0
      %1459 = vmatpush1.msra.mxu0 0.0
      %1460 = vmatprep.mubr.f32.mxu0 0.0
      %1461 = vmatmul.mubr.f32.gmra.mrb[0].mxu0 %v1392
      %v1462 = vpop.f32.mrb[0].mxu0
      %v1463 = vadd.f32 0.0, %v1462
      %v1464 = vpop.f32.mrb[0].mxu0
      %1465 = vdwg.mxu0
      %v1466 = vadd.f32 %v1387, %v1463
      %v1467 = vld [vmem:[%s702] sm:$0xf]
      %1468 = vrot.lane.b32.xlu0 %v998, 108
      %v1469 = vpop.permute.xlu0 %1468
      %v1471 = vsel %vm230, %v1467, 0
      %v1473 = vsel %vm234, %v1469, 0
      %1475 = vmatprep.subr.mxu0 0.0
      %1476 = vmatpush1.msra.mxu0 %v1473
      %1477 = vmatprep.subr.mxu0 0.0
      %1478 = vmatpush1.msra.mxu0 0.0
      %1479 = vmatprep.subr.mxu0 0.0
      %1480 = vmatpush1.msra.mxu0 0.0
      %1481 = vmatprep.subr.mxu0 0.0
      %1482 = vmatpush1.msra.mxu0 0.0
      %1483 = vmatprep.subr.mxu0 0.0
      %1484 = vmatpush1.msra.mxu0 0.0
      %1485 = vmatprep.subr.mxu0 0.0
      %1486 = vmatpush1.msra.mxu0 0.0
      %1487 = vmatprep.subr.mxu0 0.0
      %1488 = vmatpush1.msra.mxu0 0.0
      %1489 = vmatprep.subr.mxu0 0.0
      %1490 = vmatpush1.msra.mxu0 0.0
      %1491 = vmatprep.subr.mxu0 0.0
      %1492 = vmatpush1.msra.mxu0 0.0
      %1493 = vmatprep.subr.mxu0 0.0
      %1494 = vmatpush1.msra.mxu0 0.0
      %1495 = vmatprep.subr.mxu0 0.0
      %1496 = vmatpush1.msra.mxu0 0.0
      %1497 = vmatprep.subr.mxu0 0.0
      %1498 = vmatpush1.msra.mxu0 0.0
      %1499 = vmatprep.subr.mxu0 0.0
      %1500 = vmatpush1.msra.mxu0 0.0
      %1501 = vmatprep.subr.mxu0 0.0
      %1502 = vmatpush1.msra.mxu0 0.0
      %1503 = vmatprep.subr.mxu0 0.0
      %1504 = vmatpush1.msra.mxu0 0.0
      %1505 = vmatprep.subr.mxu0 0.0
      %1506 = vmatpush1.msra.mxu0 0.0
      %1507 = vmatprep.subr.mxu0 0.0
      %1508 = vmatpush1.msra.mxu0 0.0
      %1509 = vmatprep.subr.mxu0 0.0
      %1510 = vmatpush1.msra.mxu0 0.0
      %1511 = vmatprep.subr.mxu0 0.0
      %1512 = vmatpush1.msra.mxu0 0.0
      %1513 = vmatprep.subr.mxu0 0.0
      %1514 = vmatpush1.msra.mxu0 0.0
      %1515 = vmatprep.subr.mxu0 0.0
      %1516 = vmatpush1.msra.mxu0 0.0
      %1517 = vmatprep.subr.mxu0 0.0
      %1518 = vmatpush1.msra.mxu0 0.0
      %1519 = vmatprep.subr.mxu0 0.0
      %1520 = vmatpush1.msra.mxu0 0.0
      %1521 = vmatprep.subr.mxu0 0.0
      %1522 = vmatpush1.msra.mxu0 0.0
      %1523 = vmatprep.subr.mxu0 0.0
      %1524 = vmatpush1.msra.mxu0 0.0
      %1525 = vmatprep.subr.mxu0 0.0
      %1526 = vmatpush1.msra.mxu0 0.0
      %1527 = vmatprep.subr.mxu0 0.0
      %1528 = vmatpush1.msra.mxu0 0.0
      %1529 = vmatprep.subr.mxu0 0.0
      %1530 = vmatpush1.msra.mxu0 0.0
      %1531 = vmatprep.subr.mxu0 0.0
      %1532 = vmatpush1.msra.mxu0 0.0
      %1533 = vmatprep.subr.mxu0 0.0
      %1534 = vmatpush1.msra.mxu0 0.0
      %1535 = vmatprep.subr.mxu0 0.0
      %1536 = vmatpush1.msra.mxu0 0.0
      %1537 = vmatprep.subr.mxu0 0.0
      %1538 = vmatpush1.msra.mxu0 0.0
      %1539 = vmatprep.mubr.f32.mxu0 0.0
      %1540 = vmatmul.mubr.f32.gmra.mrb[0].mxu0 %v1471
      %v1541 = vpop.f32.mrb[0].mxu0
      %v1542 = vadd.f32 0.0, %v1541
      %v1543 = vpop.f32.mrb[0].mxu0
      %1544 = vdwg.mxu0
      %v1545 = vadd.f32 %v1466, %v1542
      %v1546 = vld [vmem:[%s782] sm:$0xf]
      %1547 = vrot.lane.b32.xlu0 %v998, 107
      %v1548 = vpop.permute.xlu0 %1547
      %v1550 = vsel %vm230, %v1546, 0
      %v1552 = vsel %vm234, %v1548, 0
      %1554 = vmatprep.subr.mxu0 0.0
      %1555 = vmatpush1.msra.mxu0 %v1552
      %1556 = vmatprep.subr.mxu0 0.0
      %1557 = vmatpush1.msra.mxu0 0.0
      %1558 = vmatprep.subr.mxu0 0.0
      %1559 = vmatpush1.msra.mxu0 0.0
      %1560 = vmatprep.subr.mxu0 0.0
      %1561 = vmatpush1.msra.mxu0 0.0
      %1562 = vmatprep.subr.mxu0 0.0
      %1563 = vmatpush1.msra.mxu0 0.0
      %1564 = vmatprep.subr.mxu0 0.0
      %1565 = vmatpush1.msra.mxu0 0.0
      %1566 = vmatprep.subr.mxu0 0.0
      %1567 = vmatpush1.msra.mxu0 0.0
      %1568 = vmatprep.subr.mxu0 0.0
      %1569 = vmatpush1.msra.mxu0 0.0
      %1570 = vmatprep.subr.mxu0 0.0
      %1571 = vmatpush1.msra.mxu0 0.0
      %1572 = vmatprep.subr.mxu0 0.0
      %1573 = vmatpush1.msra.mxu0 0.0
      %1574 = vmatprep.subr.mxu0 0.0
      %1575 = vmatpush1.msra.mxu0 0.0
      %1576 = vmatprep.subr.mxu0 0.0
      %1577 = vmatpush1.msra.mxu0 0.0
      %1578 = vmatprep.subr.mxu0 0.0
      %1579 = vmatpush1.msra.mxu0 0.0
      %1580 = vmatprep.subr.mxu0 0.0
      %1581 = vmatpush1.msra.mxu0 0.0
      %1582 = vmatprep.subr.mxu0 0.0
      %1583 = vmatpush1.msra.mxu0 0.0
      %1584 = vmatprep.subr.mxu0 0.0
      %1585 = vmatpush1.msra.mxu0 0.0
      %1586 = vmatprep.subr.mxu0 0.0
      %1587 = vmatpush1.msra.mxu0 0.0
      %1588 = vmatprep.subr.mxu0 0.0
      %1589 = vmatpush1.msra.mxu0 0.0
      %1590 = vmatprep.subr.mxu0 0.0
      %1591 = vmatpush1.msra.mxu0 0.0
      %1592 = vmatprep.subr.mxu0 0.0
      %1593 = vmatpush1.msra.mxu0 0.0
      %1594 = vmatprep.subr.mxu0 0.0
      %1595 = vmatpush1.msra.mxu0 0.0
      %1596 = vmatprep.subr.mxu0 0.0
      %1597 = vmatpush1.msra.mxu0 0.0
      %1598 = vmatprep.subr.mxu0 0.0
      %1599 = vmatpush1.msra.mxu0 0.0
      %1600 = vmatprep.subr.mxu0 0.0
      %1601 = vmatpush1.msra.mxu0 0.0
      %1602 = vmatprep.subr.mxu0 0.0
      %1603 = vmatpush1.msra.mxu0 0.0
      %1604 = vmatprep.subr.mxu0 0.0
      %1605 = vmatpush1.msra.mxu0 0.0
      %1606 = vmatprep.subr.mxu0 0.0
      %1607 = vmatpush1.msra.mxu0 0.0
      %1608 = vmatprep.subr.mxu0 0.0
      %1609 = vmatpush1.msra.mxu0 0.0
      %1610 = vmatprep.subr.mxu0 0.0
      %1611 = vmatpush1.msra.mxu0 0.0
      %1612 = vmatprep.subr.mxu0 0.0
      %1613 = vmatpush1.msra.mxu0 0.0
      %1614 = vmatprep.subr.mxu0 0.0
      %1615 = vmatpush1.msra.mxu0 0.0
      %1616 = vmatprep.subr.mxu0 0.0
      %1617 = vmatpush1.msra.mxu0 0.0
      %1618 = vmatprep.mubr.f32.mxu0 0.0
      %1619 = vmatmul.mubr.f32.gmra.mrb[0].mxu0 %v1550
      %v1620 = vpop.f32.mrb[0].mxu0
      %v1621 = vadd.f32 0.0, %v1620
      %v1622 = vpop.f32.mrb[0].mxu0
      %1623 = vdwg.mxu0
      %v1624 = vadd.f32 %v1545, %v1621
      %v1625 = vld [vmem:[%s862] sm:$0xf]
      %1626 = vrot.lane.b32.xlu0 %v998, 106
      %v1627 = vpop.permute.xlu0 %1626
      %v1629 = vsel %vm230, %v1625, 0
      %v1631 = vsel %vm234, %v1627, 0
      %1633 = vmatprep.subr.mxu0 0.0
      %1634 = vmatpush1.msra.mxu0 %v1631
      %1635 = vmatprep.subr.mxu0 0.0
      %1636 = vmatpush1.msra.mxu0 0.0
      %1637 = vmatprep.subr.mxu0 0.0
      %1638 = vmatpush1.msra.mxu0 0.0
      %1639 = vmatprep.subr.mxu0 0.0
      %1640 = vmatpush1.msra.mxu0 0.0
      %1641 = vmatprep.subr.mxu0 0.0
      %1642 = vmatpush1.msra.mxu0 0.0
      %1643 = vmatprep.subr.mxu0 0.0
      %1644 = vmatpush1.msra.mxu0 0.0
      %1645 = vmatprep.subr.mxu0 0.0
      %1646 = vmatpush1.msra.mxu0 0.0
      %1647 = vmatprep.subr.mxu0 0.0
      %1648 = vmatpush1.msra.mxu0 0.0
      %1649 = vmatprep.subr.mxu0 0.0
      %1650 = vmatpush1.msra.mxu0 0.0
      %1651 = vmatprep.subr.mxu0 0.0
      %1652 = vmatpush1.msra.mxu0 0.0
      %1653 = vmatprep.subr.mxu0 0.0
      %1654 = vmatpush1.msra.mxu0 0.0
      %1655 = vmatprep.subr.mxu0 0.0
      %1656 = vmatpush1.msra.mxu0 0.0
      %1657 = vmatprep.subr.mxu0 0.0
      %1658 = vmatpush1.msra.mxu0 0.0
      %1659 = vmatprep.subr.mxu0 0.0
      %1660 = vmatpush1.msra.mxu0 0.0
      %1661 = vmatprep.subr.mxu0 0.0
      %1662 = vmatpush1.msra.mxu0 0.0
      %1663 = vmatprep.subr.mxu0 0.0
      %1664 = vmatpush1.msra.mxu0 0.0
      %1665 = vmatprep.subr.mxu0 0.0
      %1666 = vmatpush1.msra.mxu0 0.0
      %1667 = vmatprep.subr.mxu0 0.0
      %1668 = vmatpush1.msra.mxu0 0.0
      %1669 = vmatprep.subr.mxu0 0.0
      %1670 = vmatpush1.msra.mxu0 0.0
      %1671 = vmatprep.subr.mxu0 0.0
      %1672 = vmatpush1.msra.mxu0 0.0
      %1673 = vmatprep.subr.mxu0 0.0
      %1674 = vmatpush1.msra.mxu0 0.0
      %1675 = vmatprep.subr.mxu0 0.0
      %1676 = vmatpush1.msra.mxu0 0.0
      %1677 = vmatprep.subr.mxu0 0.0
      %1678 = vmatpush1.msra.mxu0 0.0
      %1679 = vmatprep.subr.mxu0 0.0
      %1680 = vmatpush1.msra.mxu0 0.0
      %1681 = vmatprep.subr.mxu0 0.0
      %1682 = vmatpush1.msra.mxu0 0.0
      %1683 = vmatprep.subr.mxu0 0.0
      %1684 = vmatpush1.msra.mxu0 0.0
      %1685 = vmatprep.subr.mxu0 0.0
      %1686 = vmatpush1.msra.mxu0 0.0
      %1687 = vmatprep.subr.mxu0 0.0
      %1688 = vmatpush1.msra.mxu0 0.0
      %1689 = vmatprep.subr.mxu0 0.0
      %1690 = vmatpush1.msra.mxu0 0.0
      %1691 = vmatprep.subr.mxu0 0.0
      %1692 = vmatpush1.msra.mxu0 0.0
      %1693 = vmatprep.subr.mxu0 0.0
      %1694 = vmatpush1.msra.mxu0 0.0
      %1695 = vmatprep.subr.mxu0 0.0
      %1696 = vmatpush1.msra.mxu0 0.0
      %1697 = vmatprep.mubr.f32.mxu0 0.0
      %1698 = vmatmul.mubr.f32.gmra.mrb[0].mxu0 %v1629
      %v1699 = vpop.f32.mrb[0].mxu0
      %v1700 = vadd.f32 0.0, %v1699
      %v1701 = vpop.f32.mrb[0].mxu0
      %1702 = vdwg.mxu0
      %v1703 = vadd.f32 %v1624, %v1700
      %v1704 = vld [vmem:[%s202] sm:$0xf]
      %1706 = vset.pattern.permute.xlu0 0
      %1707 = vperm.xlu0 %1706, %v1704
      %v1708 = vpop.permute.xlu0 %1707
      %v1710 = vadd.f32 %v1703, %v1708
      %v1713 = vunpack.c.l.s4 1966171168
      %v1714 = vunpack.c.0.s8 %v1713
      %v1715 = vlaneseq
      %v1716 = vshrl.u32 %v1715, 7
      %v1717 = vsub.s32 %v1714, %v1716
      %v1718 = vrot.slane %v1710, %v1717
      %v1719 = vcombine.high %v1718, %v1718
      %v1721 = vunpack.c.l.s4 1966171168
      %v1722 = vunpack.c.0.s8 %v1721
      %v1723 = vlaneseq
      %v1724 = vshrl.u32 %v1723, 7
      %v1725 = vsub.s32 %v1722, %v1724
      %v1726 = vrot.slane %v1718, %v1725
      %v1728 = vunpack.c.l.s4 1966171168
      %v1729 = vunpack.c.0.s8 %v1728
      %v1730 = vlaneseq
      %v1731 = vshrl.u32 %v1730, 7
      %v1732 = vsub.s32 %v1729, %v1731
      %v1733 = vrot.slane %v1719, %v1732
      %v1734 = vcombine.high %v1726, %v1726
      %v1735 = vcombine.high %v1733, %v1733
      %1740 = vst.msk [vmem:[%s207 + $0x1] sm:$0x1] %vm978, %v1726
      %1741 = vst.msk [vmem:[%s207 + $0x3] sm:$0x1] %vm978, %v1733
      %1742 = vst.msk [vmem:[%s207 + $0x5] sm:$0x1] %vm978, %v1734
      %1743 = vst.msk [vmem:[%s207 + $0x7] sm:$0x1] %vm978, %v1735
      %p1744 = scmp.lt.s32.totalorder %s14, 1
      %s1745 = scalar_select %p1744, %s14, 1
      %s1746 = smul.addr %s1745, 4
      %s1747 = smul.addr %s1746, 2
      %s1748 = scalar_lea.vmem %s3, %s1747
      // Predicated region
      $region33: #{_lambda_.7} parent=31 // pred_check
        %p1749 = pneg %p110
      $region34: #{_lambda_.7} parent=31 // pred_check_branch
        %1751 = sbr.rel (%p1749) target = $region36
      $region35: #{_lambda_.7} parent=31 // pred_region
        _
      $region36: #{_lambda_.7} parent=31 // pred_fallthru
        _
    $region32: #{_lambda_.7} parent=5 // pred_fallthru
      _
    %p1752 = scmp.le.s32.totalorder 2, %s9
    // Predicated region
    $region37: #{_lambda_.7} parent=5 // pred_check
      %p1753 = pneg %p1752
    $region38: #{_lambda_.7} parent=5 // pred_check_branch
      %1755 = sbr.rel (%p1753) target = $region40
    $region39: #{_lambda_.7} parent=5 // pred_region
      %s1756 = ssub.s32 %s9, 2
      // Predicated region
      $region41: #{_lambda_.7} parent=39 // pred_check
        %p1757 = pneg %p116
      $region42: #{_lambda_.7} parent=39 // pred_check_branch
        %1759 = sbr.rel (%p1757) target = $region44
      $region43: #{_lambda_.7} parent=39 // pred_region
        %p1760 = scmp.lt.s32.totalorder %s15, 1
        %s1761 = scalar_select %p1760, %s15, 1
        %s1762 = smul.addr %s1761, 4
        %s1763 = smul.addr %s1762, 2
        %s1764 = scalar_lea.vmem %s3, %s1763
      $region44: #{_lambda_.7} parent=39 // pred_fallthru
        _
    $region40: #{_lambda_.7} parent=5 // pred_fallthru
      _
  $region6: #{_lambda_.7} parent=0 // loop_footer
    %s13 = sadd.s32 1, %s9
  $region7: #{_lambda_.7} parent=0 // loop_footer_branch
    %8 = sbr.rel target = $region3
  $region8: #{_lambda_.7} parent=0 // loop_exit
    _

</llo_original>
